<compile_context>
chip_gen: v7x
topology: tpu7x:2x2x1
jax: 0.10.0
libtpu: 0.0.40
codegen_flags: <defaults>
</compile_context>

<pallas_src>
import numpy as np
import jax
import jax.numpy as jnp
from jax import lax
from jax.experimental import pallas as pl
from jax.experimental.pallas import tpu as pltpu


def _sigmoid(x):
    # exp -> EUP, approximate reciprocal -> EUP; one Newton-Raphson step restores
    # full f32 accuracy without the VALU divide sequence of an exact reciprocal.
    u = 1.0 + jnp.exp(-x)
    r = pl.reciprocal(u, approx=True)
    return r * (2.0 - u * r)


def fused_convnet_kernel(w1p_ref, x_ref, selc_ref, w2big_ref, bmat_ref,
                         gsum_ref, dmask_ref, ssum_ref,
                         act1_ref, act2_ref, logits_ref,
                         xbig_ref, pooled_ref, pbig_ref):
    bb = x_ref.shape[0]                     # images per grid step (static)

    # xbig has a 32-row pitch per kj block; rows 28..31 of each block are padding
    # that multiplies zero weights -> keep them zero (0 * garbage would be NaN).
    xbig_ref[...] = jnp.zeros_like(xbig_ref)

    # ---- phase 1: conv1 (5x5, 1->10) on the MXU + sigmoid + 2x2/2 max-pool ----
    # w1perm rows are ordered (even output rows | odd output rows), each half in
    # (12*c + p) order, so the row half of the pool is a plain slice max.
    @pl.loop(0, bb)
    def _(b):
        xb = x_ref[b]                                             # (28, 28)
        for kj in range(5):                                       # structured im2col
            xbig_ref[32 * kj:32 * kj + 28, :] = xb[:, kj:kj + 24]
        a1p = _sigmoid(jnp.dot(w1p_ref[...], xbig_ref[...],
                               preferred_element_type=jnp.float32))   # (240, 24)
        act1_ref[b] = a1p                                          # permuted row order
        rmax = jnp.maximum(a1p[0:120, :], a1p[120:240, :])         # (120, 24) row pool
        cmax = jnp.maximum(rmax[:, 0:23], rmax[:, 1:24])           # (120, 23)
        pooled_ref[b] = jnp.dot(cmax, selc_ref[...],               # even-col select
                                preferred_element_type=jnp.float32)  # (120, 12)

    # ---- phase-2 staging: lane-batch the pooled maps (image b -> lanes [8b,8b+8)) --
    # pure data movement with static offsets -> safe to unroll in Python.
    for b in range(bb):
        p = pooled_ref[b]                                          # (120, 12)
        for kj in range(5):
            pbig_ref[120 * kj:120 * (kj + 1), 8 * b:8 * (b + 1)] = p[:, kj:kj + 8]

    # ---- phase 2: conv2 + sigmoid + fc1, ONE matmul each across all bb images ----
    pre2 = jnp.dot(w2big_ref[...], pbig_ref[...],
                   preferred_element_type=jnp.float32)             # (160, 8*bb)
    a2 = _sigmoid(pre2)
    act2_ref[0] = a2                                               # lane-dense slab

    d = jnp.dot(bmat_ref[...], a2, preferred_element_type=jnp.float32)     # (80, 8*bb)
    lm = jnp.dot(gsum_ref[...], d * dmask_ref[...],
                 preferred_element_type=jnp.float32)                       # (10, 8*bb)
    logits_ref[0] = jnp.dot(lm, ssum_ref[...],
                            preferred_element_type=jnp.float32)            # (10, bb)


def _constants(bb):
    # even-column select for the 2x2 pool
    selc = np.zeros((23, 12), np.float32)
    selc[2 * np.arange(12), np.arange(12)] = 1.0
    # fc1 reduction helpers
    gsum = np.zeros((10, 80), np.float32)
    gsum[np.arange(80) // 8, np.arange(80)] = 1.0            # sum the 8 x-slots per logit
    dmask = np.zeros((80, 8), np.float32)
    dmask[np.arange(80), np.arange(80) % 8] = 1.0            # (x', x) diagonal mask
    dmask_all = np.tile(dmask, (1, bb))                      # lane-tiled over bb images
    ssum = np.zeros((8 * bb, bb), np.float32)
    ssum[np.arange(8 * bb), np.arange(8 * bb) // 8] = 1.0    # per-image lane-block sum
    # banded-weight "tap" tensors for conv1 / conv2
    tap1 = np.zeros((24, 28, 5), np.float32)                 # tap1[y, y+i, i] = 1
    for y in range(24):
        for i in range(5):
            tap1[y, y + i, i] = 1.0
    tap2 = np.zeros((8, 12, 5), np.float32)                  # tap2[y, y+i, i] = 1
    for y in range(8):
        for i in range(5):
            tap2[y, y + i, i] = 1.0
    return selc, gsum, dmask_all, ssum, tap1, tap2


def convnet_forward(x, w1, w2, wfc):
    B = x.shape[0]
    # 8*bb is the lane width of the phase-2 matmuls: bb=32 -> N=256 (full MXU width
    # on v6e/v7x), bb=16 already saturates the 128-wide v5e MXU.
    bb = max(d for d in (32, 16, 8, 4, 2, 1) if B % d == 0)
    G = B // bb

    selc_np, gsum_np, dmask_np, ssum_np, tap1_np, tap2_np = _constants(bb)
    selc = jnp.asarray(selc_np)
    gsum = jnp.asarray(gsum_np)
    dmask = jnp.asarray(dmask_np)
    ssum = jnp.asarray(ssum_np)

    # ---- weight preprocessing (tiny, O(weights), no activation traffic) ----
    # conv1 banded weights, 32-column pitch per kj block:
    #   w1std[c, y, 32*kj + r] = w1[c, 0, r - y, kj]   (0 <= r-y <= 4, else 0)
    # then rows permuted to (even y | odd y), each half in (12*c + p) order.
    w1s = w1[:, 0]                                                   # (10, 5, 5)
    band = jnp.einsum('cik,yri->cykr', w1s, jnp.asarray(tap1_np))    # (10, 24, 5, 28)
    band = jnp.pad(band, ((0, 0), (0, 0), (0, 0), (0, 4)))           # (10, 24, 5, 32)
    w1std = band.reshape(10, 24, 160)
    w1perm = jnp.stack([w1std[:, 0::2, :], w1std[:, 1::2, :]],
                       axis=0).reshape(240, 160)                     # (240, 160)
    # conv2 structured weights: w2big[8o+y, 120kj+12c+q] = w2[o,c,q-y,kj]
    w2big = jnp.einsum('ocik,yqi->oykcq', w2, jnp.asarray(tap2_np)).reshape(160, 600)
    # fc1 re-ordered weights: bmat[8j+x, 8o+y] = wfc[j, 64o+8y+x]
    bmat = jnp.transpose(wfc.reshape(10, 20, 8, 8), (0, 3, 1, 2)).reshape(80, 160)

    x3 = x.reshape(B, 28, 28)                                        # free reshape

    act1_s, act2_s, logits_s = pl.pallas_call(
        fused_convnet_kernel,
        out_shape=(
            jax.ShapeDtypeStruct((B, 240, 24), jnp.float32),         # act1 (permuted rows)
            jax.ShapeDtypeStruct((G, 160, 8 * bb), jnp.float32),     # act2 (lane-batched)
            jax.ShapeDtypeStruct((G, 10, bb), jnp.float32),          # logits (lane-batched)
        ),
        grid=(G,),
        in_specs=[
            pl.BlockSpec((240, 160), lambda g: (0, 0)),              # w1perm
            pl.BlockSpec((bb, 28, 28), lambda g: (g, 0, 0)),         # x
            pl.BlockSpec((23, 12), lambda g: (0, 0)),                # selc
            pl.BlockSpec((160, 600), lambda g: (0, 0)),              # w2big
            pl.BlockSpec((80, 160), lambda g: (0, 0)),               # bmat
            pl.BlockSpec((10, 80), lambda g: (0, 0)),                # gsum
            pl.BlockSpec((80, 8 * bb), lambda g: (0, 0)),            # dmask (lane-tiled)
            pl.BlockSpec((8 * bb, bb), lambda g: (0, 0)),            # ssum
        ],
        out_specs=(
            pl.BlockSpec((bb, 240, 24), lambda g: (g, 0, 0)),
            pl.BlockSpec((1, 160, 8 * bb), lambda g: (g, 0, 0)),
            pl.BlockSpec((1, 10, bb), lambda g: (g, 0, 0)),
        ),
        scratch_shapes=[
            pltpu.VMEM((160, 24), jnp.float32),                      # xbig (conv1 im2col)
            pltpu.VMEM((bb, 120, 12), jnp.float32),                  # pooled maps
            pltpu.VMEM((600, 8 * bb), jnp.float32),                  # pbig (conv2 im2col)
        ],
        compiler_params=pltpu.CompilerParams(
            dimension_semantics=("parallel",),
            vmem_limit_bytes=32 * 1024 * 1024,                       # > v5e 16MiB default
        ),
    )(w1perm, x3, selc, w2big, bmat, gsum, dmask, ssum)

    # ---- cheap demux back to the PyTorch layouts (reshape/transpose only) ----
    act1 = (act1_s.reshape(B, 2, 10, 12, 24)        # [b, s, c, p, q], y = 2p + s
                  .transpose(0, 2, 3, 1, 4)
                  .reshape(B, 10, 24, 24))
    act2 = (act2_s.reshape(G, 20, 8, bb, 8)         # [g, o, y, b, x]
                  .transpose(0, 3, 1, 2, 4)
                  .reshape(B, 20, 8, 8))
    logits = logits_s.transpose(0, 2, 1).reshape(B, 10)
    return logits, act1, act2


def convnet_reference(x, w1, w2, wfc):
    dn = ("NCHW", "OIHW", "NCHW")
    hp = lax.Precision.HIGHEST
    a1 = jax.nn.sigmoid(lax.conv_general_dilated(
        x, w1, (1, 1), "VALID", dimension_numbers=dn, precision=hp))
    p = lax.reduce_window(a1, -jnp.inf, lax.max, (1, 1, 2, 2), (1, 1, 2, 2), "VALID")
    a2 = jax.nn.sigmoid(lax.conv_general_dilated(
        p, w2, (1, 1), "VALID", dimension_numbers=dn, precision=hp))
    logits = jnp.dot(a2.reshape(x.shape[0], -1), wfc.T, precision=hp)
    return logits, a1, a2


if __name__ == "__main__":
    key = jax.random.PRNGKey(0)
    kx, k1, k2, k3 = jax.random.split(key, 4)

    B = 2
    # fc1 expects 20*8*8 features => input spatial size is fixed at 28x28, 1 channel.
    x = jax.random.normal(kx, (B, 1, 28, 28), jnp.float32)
    w1 = jax.random.normal(k1, (10, 1, 5, 5), jnp.float32) * 0.1       # conv1.weight
    w2 = jax.random.normal(k2, (20, 10, 5, 5), jnp.float32) * 0.1      # conv2.weight
    wfc = jax.random.normal(k3, (10, 20 * 8 * 8), jnp.float32) * 0.02  # fc1.weight

    fwd = jax.jit(convnet_forward)
    logits, act1, act2 = jax.block_until_ready(fwd(x, w1, w2, wfc))

    r_logits, r_act1, r_act2 = convnet_reference(x, w1, w2, wfc)
    assert logits.shape == (B, 10)
    assert act1.shape == (B, 10, 24, 24)
    assert act2.shape == (B, 20, 8, 8)
    assert jnp.allclose(act1, r_act1, rtol=1e-3, atol=1e-3)
    assert jnp.allclose(act2, r_act2, rtol=1e-3, atol=1e-3)
    assert jnp.allclose(logits, r_logits, rtol=1e-3, atol=1e-3)

    print("KERNEL_OK")
</pallas_src>

<mosaic_0001>
module attributes {stable_mosaic.version = 11 : i64} {
  func.func @fused_convnet_kernel(%arg0: i32, %arg1: memref<240x160xf32, #tpu.memory_space<vmem>>, %arg2: memref<2x28x28xf32, #tpu.memory_space<vmem>>, %arg3: memref<23x12xf32, #tpu.memory_space<vmem>>, %arg4: memref<160x600xf32, #tpu.memory_space<vmem>>, %arg5: memref<80x160xf32, #tpu.memory_space<vmem>>, %arg6: memref<10x80xf32, #tpu.memory_space<vmem>>, %arg7: memref<80x16xf32, #tpu.memory_space<vmem>>, %arg8: memref<16x2xf32, #tpu.memory_space<vmem>>, %arg9: memref<2x240x24xf32, #tpu.memory_space<vmem>>, %arg10: memref<1x160x16xf32, #tpu.memory_space<vmem>>, %arg11: memref<1x10x2xf32, #tpu.memory_space<vmem>>, %arg12: memref<160x24xf32, #tpu.memory_space<vmem>>, %arg13: memref<2x120x12xf32, #tpu.memory_space<vmem>>, %arg14: memref<600x16xf32, #tpu.memory_space<vmem>>) attributes {dimension_semantics = [#tpu.dimension_semantics<parallel>], iteration_bounds = array<i64: 1>, scalar_prefetch = 0 : i64, scratch_operands = 3 : i64, tpu.core_type = #tpu.core_type<tc>, window_params = [{pipeline_mode = #tpu.pipeline_mode<synchronous>, transform_indices = @transform_0, window_bounds = array<i64: 240, 160>}, {transform_indices = @transform_1, window_bounds = array<i64: 2, 28, 28>}, {pipeline_mode = #tpu.pipeline_mode<synchronous>, transform_indices = @transform_2, window_bounds = array<i64: 23, 12>}, {pipeline_mode = #tpu.pipeline_mode<synchronous>, transform_indices = @transform_3, window_bounds = array<i64: 160, 600>}, {pipeline_mode = #tpu.pipeline_mode<synchronous>, transform_indices = @transform_4, window_bounds = array<i64: 80, 160>}, {pipeline_mode = #tpu.pipeline_mode<synchronous>, transform_indices = @transform_5, window_bounds = array<i64: 10, 80>}, {pipeline_mode = #tpu.pipeline_mode<synchronous>, transform_indices = @transform_6, window_bounds = array<i64: 80, 16>}, {pipeline_mode = #tpu.pipeline_mode<synchronous>, transform_indices = @transform_7, window_bounds = array<i64: 16, 2>}, {transform_indices = @transform_8, window_bounds = array<i64: 2, 240, 24>}, {transform_indices = @transform_9, window_bounds = array<i64: 1, 160, 16>}, {transform_indices = @transform_10, window_bounds = array<i64: 1, 10, 2>}]} {
    %cst = arith.constant 0.000000e+00 : f32
    %0 = vector.broadcast %cst : f32 to vector<160x24xf32>
    %c0 = arith.constant 0 : index
    %c0_0 = arith.constant 0 : index
    %1 = vector.load %arg12[%c0, %c0_0] : memref<160x24xf32, #tpu.memory_space<vmem>>, vector<160x24xf32>
    tpu.vector_store %arg12[%c0, %c0_0], %0 {strides = array<i32>} : memref<160x24xf32, #tpu.memory_space<vmem>>, vector<160x24xf32>,
    %c0_i32 = arith.constant 0 : i32
    %c2_i32 = arith.constant 2 : i32
    %2 = arith.addi %c0_i32, %c2_i32 : i32
    %c1_i32 = arith.constant 1 : i32
    scf.for %arg15 = %c0_i32 to %2 step %c1_i32  : i32 {
      %c1_i32_47 = arith.constant 1 : i32
      %54 = arith.muli %arg15, %c1_i32_47 : i32
      %c0_i32_48 = arith.constant 0 : i32
      %55 = arith.addi %c0_i32_48, %54 : i32
      %56 = arith.index_cast %55 : i32 to index
      %c0_49 = arith.constant 0 : index
      %c0_50 = arith.constant 0 : index
      %57 = vector.load %arg2[%56, %c0_49, %c0_50] : memref<2x28x28xf32, #tpu.memory_space<vmem>>, vector<1x28x28xf32>
      %58 = vector.shape_cast %57 : vector<1x28x28xf32> to vector<28x28xf32>
      %59 = vector.extract_strided_slice %58 {offsets = [0, 0], sizes = [28, 24], strides = [1, 1]} : vector<28x28xf32> to vector<28x24xf32>
      %c0_51 = arith.constant 0 : index
      %c0_52 = arith.constant 0 : index
      %60 = vector.load %arg12[%c0_51, %c0_52] : memref<160x24xf32, #tpu.memory_space<vmem>>, vector<28x24xf32>
      tpu.vector_store %arg12[%c0_51, %c0_52], %59 {strides = array<i32>} : memref<160x24xf32, #tpu.memory_space<vmem>>, vector<28x24xf32>,
      %61 = vector.extract_strided_slice %58 {offsets = [0, 1], sizes = [28, 24], strides = [1, 1]} : vector<28x28xf32> to vector<28x24xf32>
      %c32 = arith.constant 32 : index
      %c0_53 = arith.constant 0 : index
      %62 = vector.load %arg12[%c32, %c0_53] : memref<160x24xf32, #tpu.memory_space<vmem>>, vector<28x24xf32>
      tpu.vector_store %arg12[%c32, %c0_53], %61 {strides = array<i32>} : memref<160x24xf32, #tpu.memory_space<vmem>>, vector<28x24xf32>,
      %63 = vector.extract_strided_slice %58 {offsets = [0, 2], sizes = [28, 24], strides = [1, 1]} : vector<28x28xf32> to vector<28x24xf32>
      %c64 = arith.constant 64 : index
      %c0_54 = arith.constant 0 : index
      %64 = vector.load %arg12[%c64, %c0_54] : memref<160x24xf32, #tpu.memory_space<vmem>>, vector<28x24xf32>
      tpu.vector_store %arg12[%c64, %c0_54], %63 {strides = array<i32>} : memref<160x24xf32, #tpu.memory_space<vmem>>, vector<28x24xf32>,
      %65 = vector.extract_strided_slice %58 {offsets = [0, 3], sizes = [28, 24], strides = [1, 1]} : vector<28x28xf32> to vector<28x24xf32>
      %c96 = arith.constant 96 : index
      %c0_55 = arith.constant 0 : index
      %66 = vector.load %arg12[%c96, %c0_55] : memref<160x24xf32, #tpu.memory_space<vmem>>, vector<28x24xf32>
      tpu.vector_store %arg12[%c96, %c0_55], %65 {strides = array<i32>} : memref<160x24xf32, #tpu.memory_space<vmem>>, vector<28x24xf32>,
      %67 = vector.extract_strided_slice %58 {offsets = [0, 4], sizes = [28, 24], strides = [1, 1]} : vector<28x28xf32> to vector<28x24xf32>
      %c128 = arith.constant 128 : index
      %c0_56 = arith.constant 0 : index
      %68 = vector.load %arg12[%c128, %c0_56] : memref<160x24xf32, #tpu.memory_space<vmem>>, vector<28x24xf32>
      tpu.vector_store %arg12[%c128, %c0_56], %67 {strides = array<i32>} : memref<160x24xf32, #tpu.memory_space<vmem>>, vector<28x24xf32>,
      %c0_57 = arith.constant 0 : index
      %c0_58 = arith.constant 0 : index
      %69 = vector.load %arg1[%c0_57, %c0_58] : memref<240x160xf32, #tpu.memory_space<vmem>>, vector<240x160xf32>
      %c0_59 = arith.constant 0 : index
      %c0_60 = arith.constant 0 : index
      %70 = vector.load %arg12[%c0_59, %c0_60] : memref<160x24xf32, #tpu.memory_space<vmem>>, vector<160x24xf32>
      %cst_61 = arith.constant dense<0.000000e+00> : vector<240x24xf32>
      %71 = tpu.matmul %69, %70, %cst_61 {dimension_numbers = #tpu.dot_dimension_numbers<[1], [0], [0], [1], [0, 0, 1, 1], [], []>} : vector<240x160xf32>, vector<160x24xf32>, vector<240x24xf32> -> vector<240x24xf32>
      %cst_62 = arith.constant 0.000000e+00 : f32
      %72 = vector.broadcast %cst_62 : f32 to vector<240x24xf32>
      %73 = arith.subf %72, %71 : vector<240x24xf32>
      %74 = math.exp %73 : vector<240x24xf32>
      %cst_63 = arith.constant 1.000000e+00 : f32
      %75 = vector.broadcast %cst_63 : f32 to vector<240x24xf32>
      %76 = arith.addf %75, %74 : vector<240x24xf32>
      %77 = tpu.reciprocal %76 {approx = true} : vector<240x24xf32> -> vector<240x24xf32>
      %78 = arith.mulf %76, %77 : vector<240x24xf32>
      %cst_64 = arith.constant 2.000000e+00 : f32
      %79 = vector.broadcast %cst_64 : f32 to vector<240x24xf32>
      %80 = arith.subf %79, %78 : vector<240x24xf32>
      %81 = arith.mulf %77, %80 : vector<240x24xf32>
      %82 = arith.index_cast %55 : i32 to index
      %c0_65 = arith.constant 0 : index
      %c0_66 = arith.constant 0 : index
      %83 = vector.load %arg9[%82, %c0_65, %c0_66] : memref<2x240x24xf32, #tpu.memory_space<vmem>>, vector<1x240x24xf32>
      %84 = vector.shape_cast %83 : vector<1x240x24xf32> to vector<240x24xf32>
      %85 = vector.shape_cast %81 : vector<240x24xf32> to vector<1x240x24xf32>
      tpu.vector_store %arg9[%82, %c0_65, %c0_66], %85 {strides = array<i32>} : memref<2x240x24xf32, #tpu.memory_space<vmem>>, vector<1x240x24xf32>,
      %86 = vector.extract_strided_slice %81 {offsets = [0, 0], sizes = [120, 24], strides = [1, 1]} : vector<240x24xf32> to vector<120x24xf32>
      %87 = vector.extract_strided_slice %81 {offsets = [120, 0], sizes = [120, 24], strides = [1, 1]} : vector<240x24xf32> to vector<120x24xf32>
      %88 = arith.maximumf %86, %87 : vector<120x24xf32>
      %89 = vector.extract_strided_slice %88 {offsets = [0, 0], sizes = [120, 23], strides = [1, 1]} : vector<120x24xf32> to vector<120x23xf32>
      %90 = vector.extract_strided_slice %88 {offsets = [0, 1], sizes = [120, 23], strides = [1, 1]} : vector<120x24xf32> to vector<120x23xf32>
      %91 = arith.maximumf %89, %90 : vector<120x23xf32>
      %c0_67 = arith.constant 0 : index
      %c0_68 = arith.constant 0 : index
      %92 = vector.load %arg3[%c0_67, %c0_68] : memref<23x12xf32, #tpu.memory_space<vmem>>, vector<23x12xf32>
      %cst_69 = arith.constant dense<0.000000e+00> : vector<120x12xf32>
      %93 = tpu.matmul %91, %92, %cst_69 {dimension_numbers = #tpu.dot_dimension_numbers<[1], [0], [0], [1], [0, 0, 1, 1], [], []>} : vector<120x23xf32>, vector<23x12xf32>, vector<120x12xf32> -> vector<120x12xf32>
      %94 = arith.index_cast %55 : i32 to index
      %c0_70 = arith.constant 0 : index
      %c0_71 = arith.constant 0 : index
      %95 = vector.load %arg13[%94, %c0_70, %c0_71] : memref<2x120x12xf32, #tpu.memory_space<vmem>>, vector<1x120x12xf32>
      %96 = vector.shape_cast %95 : vector<1x120x12xf32> to vector<120x12xf32>
      %97 = vector.shape_cast %93 : vector<120x12xf32> to vector<1x120x12xf32>
      tpu.vector_store %arg13[%94, %c0_70, %c0_71], %97 {strides = array<i32>} : memref<2x120x12xf32, #tpu.memory_space<vmem>>, vector<1x120x12xf32>,
    }
    %c2_i32_1 = arith.constant 2 : i32
    %c0_2 = arith.constant 0 : index
    %c0_3 = arith.constant 0 : index
    %c0_4 = arith.constant 0 : index
    %3 = vector.load %arg13[%c0_2, %c0_3, %c0_4] : memref<2x120x12xf32, #tpu.memory_space<vmem>>, vector<1x120x12xf32>
    %4 = vector.shape_cast %3 : vector<1x120x12xf32> to vector<120x12xf32>
    %5 = vector.extract_strided_slice %4 {offsets = [0, 0], sizes = [120, 8], strides = [1, 1]} : vector<120x12xf32> to vector<120x8xf32>
    %c0_5 = arith.constant 0 : index
    %c0_6 = arith.constant 0 : index
    %6 = vector.load %arg14[%c0_5, %c0_6] : memref<600x16xf32, #tpu.memory_space<vmem>>, vector<120x8xf32>
    tpu.vector_store %arg14[%c0_5, %c0_6], %5 {strides = array<i32>} : memref<600x16xf32, #tpu.memory_space<vmem>>, vector<120x8xf32>,
    %7 = vector.extract_strided_slice %4 {offsets = [0, 1], sizes = [120, 8], strides = [1, 1]} : vector<120x12xf32> to vector<120x8xf32>
    %c120 = arith.constant 120 : index
    %c0_7 = arith.constant 0 : index
    %8 = vector.load %arg14[%c120, %c0_7] : memref<600x16xf32, #tpu.memory_space<vmem>>, vector<120x8xf32>
    tpu.vector_store %arg14[%c120, %c0_7], %7 {strides = array<i32>} : memref<600x16xf32, #tpu.memory_space<vmem>>, vector<120x8xf32>,
    %9 = vector.extract_strided_slice %4 {offsets = [0, 2], sizes = [120, 8], strides = [1, 1]} : vector<120x12xf32> to vector<120x8xf32>
    %c240 = arith.constant 240 : index
    %c0_8 = arith.constant 0 : index
    %10 = vector.load %arg14[%c240, %c0_8] : memref<600x16xf32, #tpu.memory_space<vmem>>, vector<120x8xf32>
    tpu.vector_store %arg14[%c240, %c0_8], %9 {strides = array<i32>} : memref<600x16xf32, #tpu.memory_space<vmem>>, vector<120x8xf32>,
    %11 = vector.extract_strided_slice %4 {offsets = [0, 3], sizes = [120, 8], strides = [1, 1]} : vector<120x12xf32> to vector<120x8xf32>
    %c360 = arith.constant 360 : index
    %c0_9 = arith.constant 0 : index
    %12 = vector.load %arg14[%c360, %c0_9] : memref<600x16xf32, #tpu.memory_space<vmem>>, vector<120x8xf32>
    tpu.vector_store %arg14[%c360, %c0_9], %11 {strides = array<i32>} : memref<600x16xf32, #tpu.memory_space<vmem>>, vector<120x8xf32>,
    %13 = vector.extract_strided_slice %4 {offsets = [0, 4], sizes = [120, 8], strides = [1, 1]} : vector<120x12xf32> to vector<120x8xf32>
    %c480 = arith.constant 480 : index
    %c0_10 = arith.constant 0 : index
    %14 = vector.load %arg14[%c480, %c0_10] : memref<600x16xf32, #tpu.memory_space<vmem>>, vector<120x8xf32>
    tpu.vector_store %arg14[%c480, %c0_10], %13 {strides = array<i32>} : memref<600x16xf32, #tpu.memory_space<vmem>>, vector<120x8xf32>,
    %c1 = arith.constant 1 : index
    %c0_11 = arith.constant 0 : index
    %c0_12 = arith.constant 0 : index
    %15 = vector.load %arg13[%c1, %c0_11, %c0_12] : memref<2x120x12xf32, #tpu.memory_space<vmem>>, vector<1x120x12xf32>
    %16 = vector.shape_cast %15 : vector<1x120x12xf32> to vector<120x12xf32>
    %17 = vector.extract_strided_slice %16 {offsets = [0, 0], sizes = [120, 8], strides = [1, 1]} : vector<120x12xf32> to vector<120x8xf32>
    %c0_13 = arith.constant 0 : index
    %c8 = arith.constant 8 : index
    %18 = vector.load %arg14[%c0_13, %c8] : memref<600x16xf32, #tpu.memory_space<vmem>>, vector<120x8xf32>
    tpu.vector_store %arg14[%c0_13, %c8], %17 {strides = array<i32>} : memref<600x16xf32, #tpu.memory_space<vmem>>, vector<120x8xf32>,
    %19 = vector.extract_strided_slice %16 {offsets = [0, 1], sizes = [120, 8], strides = [1, 1]} : vector<120x12xf32> to vector<120x8xf32>
    %c120_14 = arith.constant 120 : index
    %c8_15 = arith.constant 8 : index
    %20 = vector.load %arg14[%c120_14, %c8_15] : memref<600x16xf32, #tpu.memory_space<vmem>>, vector<120x8xf32>
    tpu.vector_store %arg14[%c120_14, %c8_15], %19 {strides = array<i32>} : memref<600x16xf32, #tpu.memory_space<vmem>>, vector<120x8xf32>,
    %21 = vector.extract_strided_slice %16 {offsets = [0, 2], sizes = [120, 8], strides = [1, 1]} : vector<120x12xf32> to vector<120x8xf32>
    %c240_16 = arith.constant 240 : index
    %c8_17 = arith.constant 8 : index
    %22 = vector.load %arg14[%c240_16, %c8_17] : memref<600x16xf32, #tpu.memory_space<vmem>>, vector<120x8xf32>
    tpu.vector_store %arg14[%c240_16, %c8_17], %21 {strides = array<i32>} : memref<600x16xf32, #tpu.memory_space<vmem>>, vector<120x8xf32>,
    %23 = vector.extract_strided_slice %16 {offsets = [0, 3], sizes = [120, 8], strides = [1, 1]} : vector<120x12xf32> to vector<120x8xf32>
    %c360_18 = arith.constant 360 : index
    %c8_19 = arith.constant 8 : index
    %24 = vector.load %arg14[%c360_18, %c8_19] : memref<600x16xf32, #tpu.memory_space<vmem>>, vector<120x8xf32>
    tpu.vector_store %arg14[%c360_18, %c8_19], %23 {strides = array<i32>} : memref<600x16xf32, #tpu.memory_space<vmem>>, vector<120x8xf32>,
    %25 = vector.extract_strided_slice %16 {offsets = [0, 4], sizes = [120, 8], strides = [1, 1]} : vector<120x12xf32> to vector<120x8xf32>
    %c480_20 = arith.constant 480 : index
    %c8_21 = arith.constant 8 : index
    %26 = vector.load %arg14[%c480_20, %c8_21] : memref<600x16xf32, #tpu.memory_space<vmem>>, vector<120x8xf32>
    tpu.vector_store %arg14[%c480_20, %c8_21], %25 {strides = array<i32>} : memref<600x16xf32, #tpu.memory_space<vmem>>, vector<120x8xf32>,
    %c0_22 = arith.constant 0 : index
    %c0_23 = arith.constant 0 : index
    %27 = vector.load %arg4[%c0_22, %c0_23] : memref<160x600xf32, #tpu.memory_space<vmem>>, vector<160x600xf32>
    %c0_24 = arith.constant 0 : index
    %c0_25 = arith.constant 0 : index
    %28 = vector.load %arg14[%c0_24, %c0_25] : memref<600x16xf32, #tpu.memory_space<vmem>>, vector<600x16xf32>
    %cst_26 = arith.constant dense<0.000000e+00> : vector<160x16xf32>
    %29 = tpu.matmul %27, %28, %cst_26 {dimension_numbers = #tpu.dot_dimension_numbers<[1], [0], [0], [1], [0, 0, 1, 1], [], []>} : vector<160x600xf32>, vector<600x16xf32>, vector<160x16xf32> -> vector<160x16xf32>
    %cst_27 = arith.constant 0.000000e+00 : f32
    %30 = vector.broadcast %cst_27 : f32 to vector<160x16xf32>
    %31 = arith.subf %30, %29 : vector<160x16xf32>
    %32 = math.exp %31 : vector<160x16xf32>
    %cst_28 = arith.constant 1.000000e+00 : f32
    %33 = vector.broadcast %cst_28 : f32 to vector<160x16xf32>
    %34 = arith.addf %33, %32 : vector<160x16xf32>
    %35 = tpu.reciprocal %34 {approx = true} : vector<160x16xf32> -> vector<160x16xf32>
    %36 = arith.mulf %34, %35 : vector<160x16xf32>
    %cst_29 = arith.constant 2.000000e+00 : f32
    %37 = vector.broadcast %cst_29 : f32 to vector<160x16xf32>
    %38 = arith.subf %37, %36 : vector<160x16xf32>
    %39 = arith.mulf %35, %38 : vector<160x16xf32>
    %c0_30 = arith.constant 0 : index
    %c0_31 = arith.constant 0 : index
    %c0_32 = arith.constant 0 : index
    %40 = vector.load %arg10[%c0_30, %c0_31, %c0_32] : memref<1x160x16xf32, #tpu.memory_space<vmem>>, vector<1x160x16xf32>
    %41 = vector.shape_cast %40 : vector<1x160x16xf32> to vector<160x16xf32>
    %42 = vector.shape_cast %39 : vector<160x16xf32> to vector<1x160x16xf32>
    tpu.vector_store %arg10[%c0_30, %c0_31, %c0_32], %42 {strides = array<i32>} : memref<1x160x16xf32, #tpu.memory_space<vmem>>, vector<1x160x16xf32>,
    %c0_33 = arith.constant 0 : index
    %c0_34 = arith.constant 0 : index
    %43 = vector.load %arg5[%c0_33, %c0_34] : memref<80x160xf32, #tpu.memory_space<vmem>>, vector<80x160xf32>
    %cst_35 = arith.constant dense<0.000000e+00> : vector<80x16xf32>
    %44 = tpu.matmul %43, %39, %cst_35 {dimension_numbers = #tpu.dot_dimension_numbers<[1], [0], [0], [1], [0, 0, 1, 1], [], []>} : vector<80x160xf32>, vector<160x16xf32>, vector<80x16xf32> -> vector<80x16xf32>
    %c0_36 = arith.constant 0 : index
    %c0_37 = arith.constant 0 : index
    %45 = vector.load %arg6[%c0_36, %c0_37] : memref<10x80xf32, #tpu.memory_space<vmem>>, vector<10x80xf32>
    %c0_38 = arith.constant 0 : index
    %c0_39 = arith.constant 0 : index
    %46 = vector.load %arg7[%c0_38, %c0_39] : memref<80x16xf32, #tpu.memory_space<vmem>>, vector<80x16xf32>
    %47 = arith.mulf %44, %46 : vector<80x16xf32>
    %cst_40 = arith.constant dense<0.000000e+00> : vector<10x16xf32>
    %48 = tpu.matmul %45, %47, %cst_40 {dimension_numbers = #tpu.dot_dimension_numbers<[1], [0], [0], [1], [0, 0, 1, 1], [], []>} : vector<10x80xf32>, vector<80x16xf32>, vector<10x16xf32> -> vector<10x16xf32>
    %c0_41 = arith.constant 0 : index
    %c0_42 = arith.constant 0 : index
    %49 = vector.load %arg8[%c0_41, %c0_42] : memref<16x2xf32, #tpu.memory_space<vmem>>, vector<16x2xf32>
    %cst_43 = arith.constant dense<0.000000e+00> : vector<10x2xf32>
    %50 = tpu.matmul %48, %49, %cst_43 {dimension_numbers = #tpu.dot_dimension_numbers<[1], [0], [0], [1], [0, 0, 1, 1], [], []>} : vector<10x16xf32>, vector<16x2xf32>, vector<10x2xf32> -> vector<10x2xf32>
    %c0_44 = arith.constant 0 : index
    %c0_45 = arith.constant 0 : index
    %c0_46 = arith.constant 0 : index
    %51 = vector.load %arg11[%c0_44, %c0_45, %c0_46] : memref<1x10x2xf32, #tpu.memory_space<vmem>>, vector<1x10x2xf32>
    %52 = vector.shape_cast %51 : vector<1x10x2xf32> to vector<10x2xf32>
    %53 = vector.shape_cast %50 : vector<10x2xf32> to vector<1x10x2xf32>
    tpu.vector_store %arg11[%c0_44, %c0_45, %c0_46], %53 {strides = array<i32>} : memref<1x10x2xf32, #tpu.memory_space<vmem>>, vector<1x10x2xf32>,
    return
  }
  func.func @transform_0(%arg0: i32) -> (i32, i32) {
    %c0_i32 = arith.constant 0 : i32
    %c0_i32_0 = arith.constant 0 : i32
    %c0_i32_1 = arith.constant 0 : i32
    return %c0_i32, %c0_i32_0 : i32, i32
  }
  func.func @transform_1(%arg0: i32) -> (i32, i32, i32) {
    %c0_i32 = arith.constant 0 : i32
    %c0_i32_0 = arith.constant 0 : i32
    %c0_i32_1 = arith.constant 0 : i32
    return %arg0, %c0_i32, %c0_i32_0 : i32, i32, i32
  }
  func.func @transform_2(%arg0: i32) -> (i32, i32) {
    %c0_i32 = arith.constant 0 : i32
    %c0_i32_0 = arith.constant 0 : i32
    %c0_i32_1 = arith.constant 0 : i32
    return %c0_i32, %c0_i32_0 : i32, i32
  }
  func.func @transform_3(%arg0: i32) -> (i32, i32) {
    %c0_i32 = arith.constant 0 : i32
    %c0_i32_0 = arith.constant 0 : i32
    %c0_i32_1 = arith.constant 0 : i32
    return %c0_i32, %c0_i32_0 : i32, i32
  }
  func.func @transform_4(%arg0: i32) -> (i32, i32) {
    %c0_i32 = arith.constant 0 : i32
    %c0_i32_0 = arith.constant 0 : i32
    %c0_i32_1 = arith.constant 0 : i32
    return %c0_i32, %c0_i32_0 : i32, i32
  }
  func.func @transform_5(%arg0: i32) -> (i32, i32) {
    %c0_i32 = arith.constant 0 : i32
    %c0_i32_0 = arith.constant 0 : i32
    %c0_i32_1 = arith.constant 0 : i32
    return %c0_i32, %c0_i32_0 : i32, i32
  }
  func.func @transform_6(%arg0: i32) -> (i32, i32) {
    %c0_i32 = arith.constant 0 : i32
    %c0_i32_0 = arith.constant 0 : i32
    %c0_i32_1 = arith.constant 0 : i32
    return %c0_i32, %c0_i32_0 : i32, i32
  }
  func.func @transform_7(%arg0: i32) -> (i32, i32) {
    %c0_i32 = arith.constant 0 : i32
    %c0_i32_0 = arith.constant 0 : i32
    %c0_i32_1 = arith.constant 0 : i32
    return %c0_i32, %c0_i32_0 : i32, i32
  }
  func.func @transform_8(%arg0: i32) -> (i32, i32, i32) {
    %c0_i32 = arith.constant 0 : i32
    %c0_i32_0 = arith.constant 0 : i32
    %c0_i32_1 = arith.constant 0 : i32
    return %arg0, %c0_i32, %c0_i32_0 : i32, i32, i32
  }
  func.func @transform_9(%arg0: i32) -> (i32, i32, i32) {
    %c0_i32 = arith.constant 0 : i32
    %c0_i32_0 = arith.constant 0 : i32
    %c0_i32_1 = arith.constant 0 : i32
    return %arg0, %c0_i32, %c0_i32_0 : i32, i32, i32
  }
  func.func @transform_10(%arg0: i32) -> (i32, i32, i32) {
    %c0_i32 = arith.constant 0 : i32
    %c0_i32_0 = arith.constant 0 : i32
    %c0_i32_1 = arith.constant 0 : i32
    return %arg0, %c0_i32, %c0_i32_0 : i32, i32, i32
  }
}

</mosaic_0001>

<llo_original>
// kernel: convnet_forward.1
$region0: #{convnet_forward.1}
  #allocation0 [shape = 'u32[]', space=smem, size = 0x4, offset = 0x4, fixed_abs, tag = 'smem constant byte address 0x4 - core index']
  #allocation1 [shape = 'u32[144,128]{1,0:T(1,128)}', space=vmem, size = 0x12000, scoped, tag = 'internal scratch']
  #allocation2 [shape = 'f32[160,24]{1,0:T(8,128)}', space=vmem, size = 0x14000, scoped, tag = 'scratch operand']
  #allocation3 [shape = 'f32[2,120,12]{2,1,0:T(8,128)}', space=vmem, size = 0x1e000, scoped, tag = 'scratch operand']
  #allocation4 [shape = 'f32[600,16]{1,0:T(8,128)}', space=vmem, size = 0x4b000, scoped, tag = 'scratch operand']
  %s0 = inlined_call_operand.vmem [shape: f32[240,160], index: 0, kind: input, shape index: {}]
  %s1 = inlined_call_operand.vmem [shape: f32[2,28,28], index: 1, kind: input, shape index: {}]
  %s2 = inlined_call_operand.vmem [shape: f32[23,12], index: 2, kind: input, shape index: {}]
  %s3 = inlined_call_operand.vmem [shape: f32[160,600], index: 3, kind: input, shape index: {}]
  %s4 = inlined_call_operand.vmem [shape: f32[80,160], index: 4, kind: input, shape index: {}]
  %s5 = inlined_call_operand.vmem [shape: f32[10,80], index: 5, kind: input, shape index: {}]
  %s6 = inlined_call_operand.vmem [shape: f32[80,16], index: 6, kind: input, shape index: {}]
  %s7 = inlined_call_operand.vmem [shape: f32[16,2], index: 7, kind: input, shape index: {}]
  %s8 = inlined_call_operand.vmem [shape: f32[2,240,24], index: 8, kind: output, shape index: {0}]
  %s9 = inlined_call_operand.vmem [shape: f32[1,160,16], index: 9, kind: output, shape index: {1}]
  %s10 = inlined_call_operand.vmem [shape: f32[1,10,2], index: 10, kind: output, shape index: {2}]
  %11 = xla_tuple %s8, %s9, %s10
  %s12 = sld [smem:[#allocation0]]
  $region65: #{convnet_forward.1} parent=0
    _
  %s14 = ssub.s32 1, %s12
  %s15 = scalar_select 0, %s14, %s12
  // Predicated region
  $region2: #{convnet_forward.1} parent=0 // pred_check
    _
  $region3: #{convnet_forward.1} parent=0 // pred_check_branch
    %17 = sbr.rel (0) target = $region5
  $region4: #{convnet_forward.1} parent=0 // pred_region
    _
  $region5: #{convnet_forward.1} parent=0 // pred_fallthru
    _
  // Predicated region
  $region6: #{convnet_forward.1} parent=0 // pred_check
    _
  $region7: #{convnet_forward.1} parent=0 // pred_check_branch
    %19 = sbr.rel (0) target = $region9
  $region8: #{convnet_forward.1} parent=0 // pred_region
    _
  $region9: #{convnet_forward.1} parent=0 // pred_fallthru
    _
  // Predicated region
  $region10: #{convnet_forward.1} parent=0 // pred_check
    _
  $region11: #{convnet_forward.1} parent=0 // pred_check_branch
    %21 = sbr.rel (0) target = $region13
  $region12: #{convnet_forward.1} parent=0 // pred_region
    _
  $region13: #{convnet_forward.1} parent=0 // pred_fallthru
    _
  // Predicated region
  $region14: #{convnet_forward.1} parent=0 // pred_check
    _
  $region15: #{convnet_forward.1} parent=0 // pred_check_branch
    %23 = sbr.rel (0) target = $region17
  $region16: #{convnet_forward.1} parent=0 // pred_region
    _
  $region17: #{convnet_forward.1} parent=0 // pred_fallthru
    _
  // Predicated region
  $region18: #{convnet_forward.1} parent=0 // pred_check
    _
  $region19: #{convnet_forward.1} parent=0 // pred_check_branch
    %25 = sbr.rel (0) target = $region21
  $region20: #{convnet_forward.1} parent=0 // pred_region
    _
  $region21: #{convnet_forward.1} parent=0 // pred_fallthru
    _
  // Predicated region
  $region22: #{convnet_forward.1} parent=0 // pred_check
    _
  $region23: #{convnet_forward.1} parent=0 // pred_check_branch
    %27 = sbr.rel (0) target = $region25
  $region24: #{convnet_forward.1} parent=0 // pred_region
    _
  $region25: #{convnet_forward.1} parent=0 // pred_fallthru
    _
  // Predicated region
  $region26: #{convnet_forward.1} parent=0 // pred_check
    _
  $region27: #{convnet_forward.1} parent=0 // pred_check_branch
    %29 = sbr.rel (0) target = $region29
  $region28: #{convnet_forward.1} parent=0 // pred_region
    _
  $region29: #{convnet_forward.1} parent=0 // pred_fallthru
    _
  // Predicated region
  $region30: #{convnet_forward.1} parent=0 // pred_check
    _
  $region31: #{convnet_forward.1} parent=0 // pred_check_branch
    %31 = sbr.rel (0) target = $region33
  $region32: #{convnet_forward.1} parent=0 // pred_region
    _
  $region33: #{convnet_forward.1} parent=0 // pred_fallthru
    _
  %vm32 = vcmask 195584
  %33 = vst.msk [vmem:[#allocation2] sm:$0xff] %vm32, 0.0
  %34 = vst.msk [vmem:[#allocation2 + $0x8] sm:$0xff] %vm32, 0.0
  %35 = vst.msk [vmem:[#allocation2 + $0x10] sm:$0xff] %vm32, 0.0
  %36 = vst.msk [vmem:[#allocation2 + $0x18] sm:$0xff] %vm32, 0.0
  %37 = vst.msk [vmem:[#allocation2 + $0x20] sm:$0xff] %vm32, 0.0
  %38 = vst.msk [vmem:[#allocation2 + $0x28] sm:$0xff] %vm32, 0.0
  %39 = vst.msk [vmem:[#allocation2 + $0x30] sm:$0xff] %vm32, 0.0
  %40 = vst.msk [vmem:[#allocation2 + $0x38] sm:$0xff] %vm32, 0.0
  %41 = vst.msk [vmem:[#allocation2 + $0x40] sm:$0xff] %vm32, 0.0
  %42 = vst.msk [vmem:[#allocation2 + $0x48] sm:$0xff] %vm32, 0.0
  %43 = vst.msk [vmem:[#allocation2 + $0x50] sm:$0xff] %vm32, 0.0
  %44 = vst.msk [vmem:[#allocation2 + $0x58] sm:$0xff] %vm32, 0.0
  %45 = vst.msk [vmem:[#allocation2 + $0x60] sm:$0xff] %vm32, 0.0
  %46 = vst.msk [vmem:[#allocation2 + $0x68] sm:$0xff] %vm32, 0.0
  %47 = vst.msk [vmem:[#allocation2 + $0x70] sm:$0xff] %vm32, 0.0
  %48 = vst.msk [vmem:[#allocation2 + $0x78] sm:$0xff] %vm32, 0.0
  %49 = vst.msk [vmem:[#allocation2 + $0x80] sm:$0xff] %vm32, 0.0
  %50 = vst.msk [vmem:[#allocation2 + $0x88] sm:$0xff] %vm32, 0.0
  %51 = vst.msk [vmem:[#allocation2 + $0x90] sm:$0xff] %vm32, 0.0
  %52 = vst.msk [vmem:[#allocation2 + $0x98] sm:$0xff] %vm32, 0.0
  loop: start=0, step=1, limit=2
  $region34: #{convnet_forward.1} parent=0 // loop_pre_header
    _
  $region35: #{convnet_forward.1} parent=0 // loop_header
    %s54 = sphi 0, %s58
    %p55 = scmp.ge.s32.totalorder %s54, 2
  $region36: #{convnet_forward.1} parent=0 // loop_header_branch
    %57 = sbr.rel (%p55) target = $region40
  $region37: #{convnet_forward.1} parent=0 // loop_body
    %s59 = smul.u32 %s54, 32
    %s60 = scalar_lea.vmem %s1, %s59
    %v61 = vld [vmem:[%s60] sm:$0xff]
    %v62 = vld [vmem:[%s60 + $0x8] sm:$0xff]
    %v63 = vld [vmem:[%s60 + $0x10] sm:$0xff]
    %v64 = vld [vmem:[%s60 + $0x18] sm:$0xf]
    %65 = vst.msk [vmem:[#allocation2] sm:$0xff] %vm32, %v61
    %66 = vst.msk [vmem:[#allocation2 + $0x8] sm:$0xff] %vm32, %v62
    %67 = vst.msk [vmem:[#allocation2 + $0x10] sm:$0xff] %vm32, %v63
    %vm68 = vcmask 191488
    %69 = vst.msk [vmem:[#allocation2 + $0x18] sm:$0xf] %vm68, %v64
    %74 = vrot.lane.b32.xlu0 %v61, 127
    %v75 = vpop.permute.xlu0 %74
    %76 = vrot.lane.b32.xlu0 %v62, 127
    %v77 = vpop.permute.xlu0 %76
    %78 = vrot.lane.b32.xlu0 %v63, 127
    %v79 = vpop.permute.xlu0 %78
    %80 = vrot.lane.b32.xlu0 %v64, 127
    %v81 = vpop.permute.xlu0 %80
    %86 = vst.msk [vmem:[#allocation2 + $0x20] sm:$0xff] %vm32, %v75
    %87 = vst.msk [vmem:[#allocation2 + $0x28] sm:$0xff] %vm32, %v77
    %88 = vst.msk [vmem:[#allocation2 + $0x30] sm:$0xff] %vm32, %v79
    %89 = vst.msk [vmem:[#allocation2 + $0x38] sm:$0xf] %vm68, %v81
    %90 = vrot.lane.b32.xlu0 %v61, 126
    %v91 = vpop.permute.xlu0 %90
    %92 = vrot.lane.b32.xlu0 %v62, 126
    %v93 = vpop.permute.xlu0 %92
    %94 = vrot.lane.b32.xlu0 %v63, 126
    %v95 = vpop.permute.xlu0 %94
    %96 = vrot.lane.b32.xlu0 %v64, 126
    %v97 = vpop.permute.xlu0 %96
    %102 = vst.msk [vmem:[#allocation2 + $0x40] sm:$0xff] %vm32, %v91
    %103 = vst.msk [vmem:[#allocation2 + $0x48] sm:$0xff] %vm32, %v93
    %104 = vst.msk [vmem:[#allocation2 + $0x50] sm:$0xff] %vm32, %v95
    %105 = vst.msk [vmem:[#allocation2 + $0x58] sm:$0xf] %vm68, %v97
    %106 = vrot.lane.b32.xlu0 %v61, 125
    %v107 = vpop.permute.xlu0 %106
    %108 = vrot.lane.b32.xlu0 %v62, 125
    %v109 = vpop.permute.xlu0 %108
    %110 = vrot.lane.b32.xlu0 %v63, 125
    %v111 = vpop.permute.xlu0 %110
    %112 = vrot.lane.b32.xlu0 %v64, 125
    %v113 = vpop.permute.xlu0 %112
    %118 = vst.msk [vmem:[#allocation2 + $0x60] sm:$0xff] %vm32, %v107
    %119 = vst.msk [vmem:[#allocation2 + $0x68] sm:$0xff] %vm32, %v109
    %120 = vst.msk [vmem:[#allocation2 + $0x70] sm:$0xff] %vm32, %v111
    %121 = vst.msk [vmem:[#allocation2 + $0x78] sm:$0xf] %vm68, %v113
    %122 = vrot.lane.b32.xlu0 %v61, 124
    %v123 = vpop.permute.xlu0 %122
    %124 = vrot.lane.b32.xlu0 %v62, 124
    %v125 = vpop.permute.xlu0 %124
    %126 = vrot.lane.b32.xlu0 %v63, 124
    %v127 = vpop.permute.xlu0 %126
    %128 = vrot.lane.b32.xlu0 %v64, 124
    %v129 = vpop.permute.xlu0 %128
    %134 = vst.msk [vmem:[#allocation2 + $0x80] sm:$0xff] %vm32, %v123
    %135 = vst.msk [vmem:[#allocation2 + $0x88] sm:$0xff] %vm32, %v125
    %136 = vst.msk [vmem:[#allocation2 + $0x90] sm:$0xff] %vm32, %v127
    %137 = vst.msk [vmem:[#allocation2 + $0x98] sm:$0xf] %vm68, %v129
    %v138 = vld [vmem:[%s0] sm:$0xff]
    %v139 = vld [vmem:[%s0 + $0x8] sm:$0xff]
    %v140 = vld [vmem:[%s0 + $0x10] sm:$0xff]
    %v141 = vld [vmem:[%s0 + $0x18] sm:$0xff]
    %v142 = vld [vmem:[%s0 + $0x20] sm:$0xff]
    %v143 = vld [vmem:[%s0 + $0x28] sm:$0xff]
    %v144 = vld [vmem:[%s0 + $0x30] sm:$0xff]
    %v145 = vld [vmem:[%s0 + $0x38] sm:$0xff]
    %v146 = vld [vmem:[%s0 + $0x40] sm:$0xff]
    %v147 = vld [vmem:[%s0 + $0x48] sm:$0xff]
    %v148 = vld [vmem:[%s0 + $0x50] sm:$0xff]
    %v149 = vld [vmem:[%s0 + $0x58] sm:$0xff]
    %v150 = vld [vmem:[%s0 + $0x60] sm:$0xff]
    %v151 = vld [vmem:[%s0 + $0x68] sm:$0xff]
    %v152 = vld [vmem:[%s0 + $0x70] sm:$0xff]
    %v153 = vld [vmem:[%s0 + $0x78] sm:$0xff]
    %v154 = vld [vmem:[%s0 + $0x80] sm:$0xff]
    %v155 = vld [vmem:[%s0 + $0x88] sm:$0xff]
    %v156 = vld [vmem:[%s0 + $0x90] sm:$0xff]
    %v157 = vld [vmem:[%s0 + $0x98] sm:$0xff]
    %v158 = vld [vmem:[%s0 + $0xa0] sm:$0xff]
    %v159 = vld [vmem:[%s0 + $0xa8] sm:$0xff]
    %v160 = vld [vmem:[%s0 + $0xb0] sm:$0xff]
    %v161 = vld [vmem:[%s0 + $0xb8] sm:$0xff]
    %v162 = vld [vmem:[%s0 + $0xc0] sm:$0xff]
    %v163 = vld [vmem:[%s0 + $0xc8] sm:$0xff]
    %v164 = vld [vmem:[%s0 + $0xd0] sm:$0xff]
    %v165 = vld [vmem:[%s0 + $0xd8] sm:$0xff]
    %v166 = vld [vmem:[%s0 + $0xe0] sm:$0xff]
    %v167 = vld [vmem:[%s0 + $0xe8] sm:$0xff]
    %v168 = vld [vmem:[%s0 + $0xf0] sm:$0xff]
    %v169 = vld [vmem:[%s0 + $0xf8] sm:$0xff]
    %v170 = vld [vmem:[%s0 + $0x100] sm:$0xff]
    %v171 = vld [vmem:[%s0 + $0x108] sm:$0xff]
    %v172 = vld [vmem:[%s0 + $0x110] sm:$0xff]
    %v173 = vld [vmem:[%s0 + $0x118] sm:$0xff]
    %v174 = vld [vmem:[%s0 + $0x120] sm:$0xff]
    %v175 = vld [vmem:[%s0 + $0x128] sm:$0xff]
    %v176 = vld [vmem:[%s0 + $0x130] sm:$0xff]
    %v177 = vld [vmem:[%s0 + $0x138] sm:$0xff]
    %v178 = vld [vmem:[%s0 + $0x140] sm:$0xff]
    %v179 = vld [vmem:[%s0 + $0x148] sm:$0xff]
    %v180 = vld [vmem:[%s0 + $0x150] sm:$0xff]
    %v181 = vld [vmem:[%s0 + $0x158] sm:$0xff]
    %v182 = vld [vmem:[%s0 + $0x160] sm:$0xff]
    %v183 = vld [vmem:[%s0 + $0x168] sm:$0xff]
    %v184 = vld [vmem:[%s0 + $0x170] sm:$0xff]
    %v185 = vld [vmem:[%s0 + $0x178] sm:$0xff]
    %v186 = vld [vmem:[%s0 + $0x180] sm:$0xff]
    %v187 = vld [vmem:[%s0 + $0x188] sm:$0xff]
    %v188 = vld [vmem:[%s0 + $0x190] sm:$0xff]
    %v189 = vld [vmem:[%s0 + $0x198] sm:$0xff]
    %v190 = vld [vmem:[%s0 + $0x1a0] sm:$0xff]
    %v191 = vld [vmem:[%s0 + $0x1a8] sm:$0xff]
    %v192 = vld [vmem:[%s0 + $0x1b0] sm:$0xff]
    %v193 = vld [vmem:[%s0 + $0x1b8] sm:$0xff]
    %v194 = vld [vmem:[%s0 + $0x1c0] sm:$0xff]
    %v195 = vld [vmem:[%s0 + $0x1c8] sm:$0xff]
    %v196 = vld [vmem:[%s0 + $0x1d0] sm:$0xff]
    %v197 = vld [vmem:[%s0 + $0x1d8] sm:$0xff]
    %v198 = vld [vmem:[#allocation2] sm:$0xff]
    %v199 = vld [vmem:[#allocation2 + $0x8] sm:$0xff]
    %v200 = vld [vmem:[#allocation2 + $0x10] sm:$0xff]
    %v201 = vld [vmem:[#allocation2 + $0x18] sm:$0xff]
    %v202 = vld [vmem:[#allocation2 + $0x20] sm:$0xff]
    %v203 = vld [vmem:[#allocation2 + $0x28] sm:$0xff]
    %v204 = vld [vmem:[#allocation2 + $0x30] sm:$0xff]
    %v205 = vld [vmem:[#allocation2 + $0x38] sm:$0xff]
    %v206 = vld [vmem:[#allocation2 + $0x40] sm:$0xff]
    %v207 = vld [vmem:[#allocation2 + $0x48] sm:$0xff]
    %v208 = vld [vmem:[#allocation2 + $0x50] sm:$0xff]
    %v209 = vld [vmem:[#allocation2 + $0x58] sm:$0xff]
    %v210 = vld [vmem:[#allocation2 + $0x60] sm:$0xff]
    %v211 = vld [vmem:[#allocation2 + $0x68] sm:$0xff]
    %v212 = vld [vmem:[#allocation2 + $0x70] sm:$0xff]
    %v213 = vld [vmem:[#allocation2 + $0x78] sm:$0xff]
    %v214 = vld [vmem:[#allocation2 + $0x80] sm:$0xff]
    %v215 = vld [vmem:[#allocation2 + $0x88] sm:$0xff]
    %v216 = vld [vmem:[#allocation2 + $0x90] sm:$0xff]
    %v217 = vld [vmem:[#allocation2 + $0x98] sm:$0xff]
    %vm218 = vcmask 261120
    %v220 = vsel %vm218, %v139, 0
    %v223 = vsel %vm218, %v141, 0
    %v226 = vsel %vm218, %v143, 0
    %v229 = vsel %vm218, %v145, 0
    %v232 = vsel %vm218, %v147, 0
    %v235 = vsel %vm218, %v149, 0
    %v238 = vsel %vm218, %v151, 0
    %v241 = vsel %vm218, %v153, 0
    %v244 = vsel %vm218, %v155, 0
    %v247 = vsel %vm218, %v157, 0
    %v250 = vsel %vm218, %v159, 0
    %v253 = vsel %vm218, %v161, 0
    %v256 = vsel %vm218, %v163, 0
    %v259 = vsel %vm218, %v165, 0
    %v262 = vsel %vm218, %v167, 0
    %v265 = vsel %vm218, %v169, 0
    %v268 = vsel %vm218, %v171, 0
    %v271 = vsel %vm218, %v173, 0
    %v274 = vsel %vm218, %v175, 0
    %v277 = vsel %vm218, %v177, 0
    %v280 = vsel %vm218, %v179, 0
    %v283 = vsel %vm218, %v181, 0
    %v286 = vsel %vm218, %v183, 0
    %v289 = vsel %vm218, %v185, 0
    %v292 = vsel %vm218, %v187, 0
    %v295 = vsel %vm218, %v189, 0
    %v298 = vsel %vm218, %v191, 0
    %v301 = vsel %vm218, %v193, 0
    %v304 = vsel %vm218, %v195, 0
    %v307 = vsel %vm218, %v197, 0
    %309 = vmatprep.subr.mxu0 0.0
    %310 = vmatpush1.msra.mxu0 %v198
    %311 = vmatprep.subr.mxu0 0.0
    %312 = vmatpush1.msra.mxu0 %v199
    %313 = vmatprep.subr.mxu0 0.0
    %314 = vmatpush1.msra.mxu0 %v200
    %315 = vmatprep.subr.mxu0 0.0
    %316 = vmatpush1.msra.mxu0 %v201
    %317 = vmatprep.subr.mxu0 0.0
    %318 = vmatpush1.msra.mxu0 %v202
    %319 = vmatprep.subr.mxu0 0.0
    %320 = vmatpush1.msra.mxu0 %v203
    %321 = vmatprep.subr.mxu0 0.0
    %322 = vmatpush1.msra.mxu0 %v204
    %323 = vmatprep.subr.mxu0 0.0
    %324 = vmatpush1.msra.mxu0 %v205
    %325 = vmatprep.subr.mxu0 0.0
    %326 = vmatpush1.msra.mxu0 %v206
    %327 = vmatprep.subr.mxu0 0.0
    %328 = vmatpush1.msra.mxu0 %v207
    %329 = vmatprep.subr.mxu0 0.0
    %330 = vmatpush1.msra.mxu0 %v208
    %331 = vmatprep.subr.mxu0 0.0
    %332 = vmatpush1.msra.mxu0 %v209
    %333 = vmatprep.subr.mxu0 0.0
    %334 = vmatpush1.msra.mxu0 %v210
    %335 = vmatprep.subr.mxu0 0.0
    %336 = vmatpush1.msra.mxu0 %v211
    %337 = vmatprep.subr.mxu0 0.0
    %338 = vmatpush1.msra.mxu0 %v212
    %339 = vmatprep.subr.mxu0 0.0
    %340 = vmatpush1.msra.mxu0 %v213
    %341 = vmatprep.subr.mxu0 0.0
    %342 = vmatpush1.msra.mxu0 %v214
    %343 = vmatprep.subr.mxu0 0.0
    %344 = vmatpush1.msra.mxu0 %v215
    %345 = vmatprep.subr.mxu0 0.0
    %346 = vmatpush1.msra.mxu0 %v216
    %347 = vmatprep.subr.mxu0 0.0
    %348 = vmatpush1.msra.mxu0 %v217
    %349 = vmatprep.subr.mxu0 0.0
    %350 = vmatpush1.msra.mxu0 0.0
    %351 = vmatprep.subr.mxu0 0.0
    %352 = vmatpush1.msra.mxu0 0.0
    %353 = vmatprep.subr.mxu0 0.0
    %354 = vmatpush1.msra.mxu0 0.0
    %355 = vmatprep.subr.mxu0 0.0
    %356 = vmatpush1.msra.mxu0 0.0
    %357 = vmatprep.subr.mxu0 0.0
    %358 = vmatpush1.msra.mxu0 0.0
    %359 = vmatprep.subr.mxu0 0.0
    %360 = vmatpush1.msra.mxu0 0.0
    %361 = vmatprep.subr.mxu0 0.0
    %362 = vmatpush1.msra.mxu0 0.0
    %363 = vmatprep.subr.mxu0 0.0
    %364 = vmatpush1.msra.mxu0 0.0
    %365 = vmatprep.subr.mxu0 0.0
    %366 = vmatpush1.msra.mxu0 0.0
    %367 = vmatprep.subr.mxu0 0.0
    %368 = vmatpush1.msra.mxu0 0.0
    %369 = vmatprep.subr.mxu0 0.0
    %370 = vmatpush1.msra.mxu0 0.0
    %371 = vmatprep.subr.mxu0 0.0
    %372 = vmatpush1.msra.mxu0 0.0
    %373 = vmatprep.mubr.f32.mxu0 %v220
    %374 = vmatmul.mubr.f32.gmra.mrb[0].mxu0 %v138
    %v375 = vpop.f32.mrb[0].mxu0
    %v376 = vadd.f32 0.0, %v375
    %v377 = vpop.f32.mrb[0].mxu0
    %378 = vmatprep.mubr.f32.mxu0 %v223
    %379 = vmatmul.mubr.f32.gmra.mrb[0].mxu0 %v140
    %v380 = vpop.f32.mrb[0].mxu0
    %v381 = vadd.f32 0.0, %v380
    %v382 = vpop.f32.mrb[0].mxu0
    %383 = vmatprep.mubr.f32.mxu0 %v226
    %384 = vmatmul.mubr.f32.gmra.mrb[0].mxu0 %v142
    %v385 = vpop.f32.mrb[0].mxu0
    %v386 = vadd.f32 0.0, %v385
    %v387 = vpop.f32.mrb[0].mxu0
    %388 = vmatprep.mubr.f32.mxu0 %v229
    %389 = vmatmul.mubr.f32.gmra.mrb[0].mxu0 %v144
    %v390 = vpop.f32.mrb[0].mxu0
    %v391 = vadd.f32 0.0, %v390
    %v392 = vpop.f32.mrb[0].mxu0
    %393 = vmatprep.mubr.f32.mxu0 %v232
    %394 = vmatmul.mubr.f32.gmra.mrb[0].mxu0 %v146
    %v395 = vpop.f32.mrb[0].mxu0
    %v396 = vadd.f32 0.0, %v395
    %v397 = vpop.f32.mrb[0].mxu0
    %398 = vmatprep.mubr.f32.mxu0 %v235
    %399 = vmatmul.mubr.f32.gmra.mrb[0].mxu0 %v148
    %v400 = vpop.f32.mrb[0].mxu0
    %v401 = vadd.f32 0.0, %v400
    %v402 = vpop.f32.mrb[0].mxu0
    %403 = vmatprep.mubr.f32.mxu0 %v238
    %404 = vmatmul.mubr.f32.gmra.mrb[0].mxu0 %v150
    %v405 = vpop.f32.mrb[0].mxu0
    %v406 = vadd.f32 0.0, %v405
    %v407 = vpop.f32.mrb[0].mxu0
    %408 = vmatprep.mubr.f32.mxu0 %v241
    %409 = vmatmul.mubr.f32.gmra.mrb[0].mxu0 %v152
    %v410 = vpop.f32.mrb[0].mxu0
    %v411 = vadd.f32 0.0, %v410
    %v412 = vpop.f32.mrb[0].mxu0
    %413 = vmatprep.mubr.f32.mxu0 %v244
    %414 = vmatmul.mubr.f32.gmra.mrb[0].mxu0 %v154
    %v415 = vpop.f32.mrb[0].mxu0
    %v416 = vadd.f32 0.0, %v415
    %v417 = vpop.f32.mrb[0].mxu0
    %418 = vmatprep.mubr.f32.mxu0 %v247
    %419 = vmatmul.mubr.f32.gmra.mrb[0].mxu0 %v156
    %v420 = vpop.f32.mrb[0].mxu0
    %v421 = vadd.f32 0.0, %v420
    %v422 = vpop.f32.mrb[0].mxu0
    %423 = vmatprep.mubr.f32.mxu0 %v250
    %424 = vmatmul.mubr.f32.gmra.mrb[0].mxu0 %v158
    %v425 = vpop.f32.mrb[0].mxu0
    %v426 = vadd.f32 0.0, %v425
    %v427 = vpop.f32.mrb[0].mxu0
    %428 = vmatprep.mubr.f32.mxu0 %v253
    %429 = vmatmul.mubr.f32.gmra.mrb[0].mxu0 %v160
    %v430 = vpop.f32.mrb[0].mxu0
    %v431 = vadd.f32 0.0, %v430
    %v432 = vpop.f32.mrb[0].mxu0
    %433 = vmatprep.mubr.f32.mxu0 %v256
    %434 = vmatmul.mubr.f32.gmra.mrb[0].mxu0 %v162
    %v435 = vpop.f32.mrb[0].mxu0
    %v436 = vadd.f32 0.0, %v435
    %v437 = vpop.f32.mrb[0].mxu0
    %438 = vmatprep.mubr.f32.mxu0 %v259
    %439 = vmatmul.mubr.f32.gmra.mrb[0].mxu0 %v164
    %v440 = vpop.f32.mrb[0].mxu0
    %v441 = vadd.f32 0.0, %v440
    %v442 = vpop.f32.mrb[0].mxu0
    %443 = vmatprep.mubr.f32.mxu0 %v262
    %444 = vmatmul.mubr.f32.gmra.mrb[0].mxu0 %v166
    %v445 = vpop.f32.mrb[0].mxu0
    %v446 = vadd.f32 0.0, %v445
    %v447 = vpop.f32.mrb[0].mxu0
    %448 = vmatprep.mubr.f32.mxu0 %v265
    %449 = vmatmul.mubr.f32.gmra.mrb[0].mxu0 %v168
    %v450 = vpop.f32.mrb[0].mxu0
    %v451 = vadd.f32 0.0, %v450
    %v452 = vpop.f32.mrb[0].mxu0
    %453 = vmatprep.mubr.f32.mxu0 %v268
    %454 = vmatmul.mubr.f32.gmra.mrb[0].mxu0 %v170
    %v455 = vpop.f32.mrb[0].mxu0
    %v456 = vadd.f32 0.0, %v455
    %v457 = vpop.f32.mrb[0].mxu0
    %458 = vmatprep.mubr.f32.mxu0 %v271
    %459 = vmatmul.mubr.f32.gmra.mrb[0].mxu0 %v172
    %v460 = vpop.f32.mrb[0].mxu0
    %v461 = vadd.f32 0.0, %v460
    %v462 = vpop.f32.mrb[0].mxu0
    %463 = vmatprep.mubr.f32.mxu0 %v274
    %464 = vmatmul.mubr.f32.gmra.mrb[0].mxu0 %v174
    %v465 = vpop.f32.mrb[0].mxu0
    %v466 = vadd.f32 0.0, %v465
    %v467 = vpop.f32.mrb[0].mxu0
    %468 = vmatprep.mubr.f32.mxu0 %v277
    %469 = vmatmul.mubr.f32.gmra.mrb[0].mxu0 %v176
    %v470 = vpop.f32.mrb[0].mxu0
    %v471 = vadd.f32 0.0, %v470
    %v472 = vpop.f32.mrb[0].mxu0
    %473 = vmatprep.mubr.f32.mxu0 %v280
    %474 = vmatmul.mubr.f32.gmra.mrb[0].mxu0 %v178
    %v475 = vpop.f32.mrb[0].mxu0
    %v476 = vadd.f32 0.0, %v475
    %v477 = vpop.f32.mrb[0].mxu0
    %478 = vmatprep.mubr.f32.mxu0 %v283
    %479 = vmatmul.mubr.f32.gmra.mrb[0].mxu0 %v180
    %v480 = vpop.f32.mrb[0].mxu0
    %v481 = vadd.f32 0.0, %v480
    %v482 = vpop.f32.mrb[0].mxu0
    %483 = vmatprep.mubr.f32.mxu0 %v286
    %484 = vmatmul.mubr.f32.gmra.mrb[0].mxu0 %v182
    %v485 = vpop.f32.mrb[0].mxu0
    %v486 = vadd.f32 0.0, %v485
    %v487 = vpop.f32.mrb[0].mxu0
    %488 = vmatprep.mubr.f32.mxu0 %v289
    %489 = vmatmul.mubr.f32.gmra.mrb[0].mxu0 %v184
    %v490 = vpop.f32.mrb[0].mxu0
    %v491 = vadd.f32 0.0, %v490
    %v492 = vpop.f32.mrb[0].mxu0
    %493 = vmatprep.mubr.f32.mxu0 %v292
    %494 = vmatmul.mubr.f32.gmra.mrb[0].mxu0 %v186
    %v495 = vpop.f32.mrb[0].mxu0
    %v496 = vadd.f32 0.0, %v495
    %v497 = vpop.f32.mrb[0].mxu0
    %498 = vmatprep.mubr.f32.mxu0 %v295
    %499 = vmatmul.mubr.f32.gmra.mrb[0].mxu0 %v188
    %v500 = vpop.f32.mrb[0].mxu0
    %v501 = vadd.f32 0.0, %v500
    %v502 = vpop.f32.mrb[0].mxu0
    %503 = vmatprep.mubr.f32.mxu0 %v298
    %504 = vmatmul.mubr.f32.gmra.mrb[0].mxu0 %v190
    %v505 = vpop.f32.mrb[0].mxu0
    %v506 = vadd.f32 0.0, %v505
    %v507 = vpop.f32.mrb[0].mxu0
    %508 = vmatprep.mubr.f32.mxu0 %v301
    %509 = vmatmul.mubr.f32.gmra.mrb[0].mxu0 %v192
    %v510 = vpop.f32.mrb[0].mxu0
    %v511 = vadd.f32 0.0, %v510
    %v512 = vpop.f32.mrb[0].mxu0
    %513 = vmatprep.mubr.f32.mxu0 %v304
    %514 = vmatmul.mubr.f32.gmra.mrb[0].mxu0 %v194
    %v515 = vpop.f32.mrb[0].mxu0
    %v516 = vadd.f32 0.0, %v515
    %v517 = vpop.f32.mrb[0].mxu0
    %518 = vmatprep.mubr.f32.mxu0 %v307
    %519 = vmatmul.mubr.f32.gmra.mrb[0].mxu0 %v196
    %v520 = vpop.f32.mrb[0].mxu0
    %v521 = vadd.f32 0.0, %v520
    %v522 = vpop.f32.mrb[0].mxu0
    %523 = vdwg.mxu0
    %v524 = vsub.f32 0.0, %v376
    %v525 = vsub.f32 0.0, %v381
    %v526 = vsub.f32 0.0, %v386
    %v527 = vsub.f32 0.0, %v391
    %v528 = vsub.f32 0.0, %v396
    %v529 = vsub.f32 0.0, %v401
    %v530 = vsub.f32 0.0, %v406
    %v531 = vsub.f32 0.0, %v411
    %v532 = vsub.f32 0.0, %v416
    %v533 = vsub.f32 0.0, %v421
    %v534 = vsub.f32 0.0, %v426
    %v535 = vsub.f32 0.0, %v431
    %v536 = vsub.f32 0.0, %v436
    %v537 = vsub.f32 0.0, %v441
    %v538 = vsub.f32 0.0, %v446
    %v539 = vsub.f32 0.0, %v451
    %v540 = vsub.f32 0.0, %v456
    %v541 = vsub.f32 0.0, %v461
    %v542 = vsub.f32 0.0, %v466
    %v543 = vsub.f32 0.0, %v471
    %v544 = vsub.f32 0.0, %v476
    %v545 = vsub.f32 0.0, %v481
    %v546 = vsub.f32 0.0, %v486
    %v547 = vsub.f32 0.0, %v491
    %v548 = vsub.f32 0.0, %v496
    %v549 = vsub.f32 0.0, %v501
    %v550 = vsub.f32 0.0, %v506
    %v551 = vsub.f32 0.0, %v511
    %v552 = vsub.f32 0.0, %v516
    %v553 = vsub.f32 0.0, %v521
    %v554 = vmul.f32 %v524, 1.442695
    %v555 = vpow.pop %v554
    %v556 = vmul.f32 %v525, 1.442695
    %v557 = vpow.pop %v556
    %v558 = vmul.f32 %v526, 1.442695
    %v559 = vpow.pop %v558
    %v560 = vmul.f32 %v527, 1.442695
    %v561 = vpow.pop %v560
    %v562 = vmul.f32 %v528, 1.442695
    %v563 = vpow.pop %v562
    %v564 = vmul.f32 %v529, 1.442695
    %v565 = vpow.pop %v564
    %v566 = vmul.f32 %v530, 1.442695
    %v567 = vpow.pop %v566
    %v568 = vmul.f32 %v531, 1.442695
    %v569 = vpow.pop %v568
    %v570 = vmul.f32 %v532, 1.442695
    %v571 = vpow.pop %v570
    %v572 = vmul.f32 %v533, 1.442695
    %v573 = vpow.pop %v572
    %v574 = vmul.f32 %v534, 1.442695
    %v575 = vpow.pop %v574
    %v576 = vmul.f32 %v535, 1.442695
    %v577 = vpow.pop %v576
    %v578 = vmul.f32 %v536, 1.442695
    %v579 = vpow.pop %v578
    %v580 = vmul.f32 %v537, 1.442695
    %v581 = vpow.pop %v580
    %v582 = vmul.f32 %v538, 1.442695
    %v583 = vpow.pop %v582
    %v584 = vmul.f32 %v539, 1.442695
    %v585 = vpow.pop %v584
    %v586 = vmul.f32 %v540, 1.442695
    %v587 = vpow.pop %v586
    %v588 = vmul.f32 %v541, 1.442695
    %v589 = vpow.pop %v588
    %v590 = vmul.f32 %v542, 1.442695
    %v591 = vpow.pop %v590
    %v592 = vmul.f32 %v543, 1.442695
    %v593 = vpow.pop %v592
    %v594 = vmul.f32 %v544, 1.442695
    %v595 = vpow.pop %v594
    %v596 = vmul.f32 %v545, 1.442695
    %v597 = vpow.pop %v596
    %v598 = vmul.f32 %v546, 1.442695
    %v599 = vpow.pop %v598
    %v600 = vmul.f32 %v547, 1.442695
    %v601 = vpow.pop %v600
    %v602 = vmul.f32 %v548, 1.442695
    %v603 = vpow.pop %v602
    %v604 = vmul.f32 %v549, 1.442695
    %v605 = vpow.pop %v604
    %v606 = vmul.f32 %v550, 1.442695
    %v607 = vpow.pop %v606
    %v608 = vmul.f32 %v551, 1.442695
    %v609 = vpow.pop %v608
    %v610 = vmul.f32 %v552, 1.442695
    %v611 = vpow.pop %v610
    %v612 = vmul.f32 %v553, 1.442695
    %v613 = vpow.pop %v612
    %v614 = vadd.f32 %v555, 1.0
    %v615 = vadd.f32 %v557, 1.0
    %v616 = vadd.f32 %v559, 1.0
    %v617 = vadd.f32 %v561, 1.0
    %v618 = vadd.f32 %v563, 1.0
    %v619 = vadd.f32 %v565, 1.0
    %v620 = vadd.f32 %v567, 1.0
    %v621 = vadd.f32 %v569, 1.0
    %v622 = vadd.f32 %v571, 1.0
    %v623 = vadd.f32 %v573, 1.0
    %v624 = vadd.f32 %v575, 1.0
    %v625 = vadd.f32 %v577, 1.0
    %v626 = vadd.f32 %v579, 1.0
    %v627 = vadd.f32 %v581, 1.0
    %v628 = vadd.f32 %v583, 1.0
    %v629 = vadd.f32 %v585, 1.0
    %v630 = vadd.f32 %v587, 1.0
    %v631 = vadd.f32 %v589, 1.0
    %v632 = vadd.f32 %v591, 1.0
    %v633 = vadd.f32 %v593, 1.0
    %v634 = vadd.f32 %v595, 1.0
    %v635 = vadd.f32 %v597, 1.0
    %v636 = vadd.f32 %v599, 1.0
    %v637 = vadd.f32 %v601, 1.0
    %v638 = vadd.f32 %v603, 1.0
    %v639 = vadd.f32 %v605, 1.0
    %v640 = vadd.f32 %v607, 1.0
    %v641 = vadd.f32 %v609, 1.0
    %v642 = vadd.f32 %v611, 1.0
    %v643 = vadd.f32 %v613, 1.0
    %v644 = vrcp.pop %v614
    %v645 = vrcp.pop %v615
    %v646 = vrcp.pop %v616
    %v647 = vrcp.pop %v617
    %v648 = vrcp.pop %v618
    %v649 = vrcp.pop %v619
    %v650 = vrcp.pop %v620
    %v651 = vrcp.pop %v621
    %v652 = vrcp.pop %v622
    %v653 = vrcp.pop %v623
    %v654 = vrcp.pop %v624
    %v655 = vrcp.pop %v625
    %v656 = vrcp.pop %v626
    %v657 = vrcp.pop %v627
    %v658 = vrcp.pop %v628
    %v659 = vrcp.pop %v629
    %v660 = vrcp.pop %v630
    %v661 = vrcp.pop %v631
    %v662 = vrcp.pop %v632
    %v663 = vrcp.pop %v633
    %v664 = vrcp.pop %v634
    %v665 = vrcp.pop %v635
    %v666 = vrcp.pop %v636
    %v667 = vrcp.pop %v637
    %v668 = vrcp.pop %v638
    %v669 = vrcp.pop %v639
    %v670 = vrcp.pop %v640
    %v671 = vrcp.pop %v641
    %v672 = vrcp.pop %v642
    %v673 = vrcp.pop %v643
    %v674 = vmul.f32 %v614, %v644
    %v675 = vmul.f32 %v615, %v645
    %v676 = vmul.f32 %v616, %v646
    %v677 = vmul.f32 %v617, %v647
    %v678 = vmul.f32 %v618, %v648
    %v679 = vmul.f32 %v619, %v649
    %v680 = vmul.f32 %v620, %v650
    %v681 = vmul.f32 %v621, %v651
    %v682 = vmul.f32 %v622, %v652
    %v683 = vmul.f32 %v623, %v653
    %v684 = vmul.f32 %v624, %v654
    %v685 = vmul.f32 %v625, %v655
    %v686 = vmul.f32 %v626, %v656
    %v687 = vmul.f32 %v627, %v657
    %v688 = vmul.f32 %v628, %v658
    %v689 = vmul.f32 %v629, %v659
    %v690 = vmul.f32 %v630, %v660
    %v691 = vmul.f32 %v631, %v661
    %v692 = vmul.f32 %v632, %v662
    %v693 = vmul.f32 %v633, %v663
    %v694 = vmul.f32 %v634, %v664
    %v695 = vmul.f32 %v635, %v665
    %v696 = vmul.f32 %v636, %v666
    %v697 = vmul.f32 %v637, %v667
    %v698 = vmul.f32 %v638, %v668
    %v699 = vmul.f32 %v639, %v669
    %v700 = vmul.f32 %v640, %v670
    %v701 = vmul.f32 %v641, %v671
    %v702 = vmul.f32 %v642, %v672
    %v703 = vmul.f32 %v643, %v673
    %v704 = vsub.f32 2.0, %v674
    %v705 = vsub.f32 2.0, %v675
    %v706 = vsub.f32 2.0, %v676
    %v707 = vsub.f32 2.0, %v677
    %v708 = vsub.f32 2.0, %v678
    %v709 = vsub.f32 2.0, %v679
    %v710 = vsub.f32 2.0, %v680
    %v711 = vsub.f32 2.0, %v681
    %v712 = vsub.f32 2.0, %v682
    %v713 = vsub.f32 2.0, %v683
    %v714 = vsub.f32 2.0, %v684
    %v715 = vsub.f32 2.0, %v685
    %v716 = vsub.f32 2.0, %v686
    %v717 = vsub.f32 2.0, %v687
    %v718 = vsub.f32 2.0, %v688
    %v719 = vsub.f32 2.0, %v689
    %v720 = vsub.f32 2.0, %v690
    %v721 = vsub.f32 2.0, %v691
    %v722 = vsub.f32 2.0, %v692
    %v723 = vsub.f32 2.0, %v693
    %v724 = vsub.f32 2.0, %v694
    %v725 = vsub.f32 2.0, %v695
    %v726 = vsub.f32 2.0, %v696
    %v727 = vsub.f32 2.0, %v697
    %v728 = vsub.f32 2.0, %v698
    %v729 = vsub.f32 2.0, %v699
    %v730 = vsub.f32 2.0, %v700
    %v731 = vsub.f32 2.0, %v701
    %v732 = vsub.f32 2.0, %v702
    %v733 = vsub.f32 2.0, %v703
    %v734 = vmul.f32 %v644, %v704
    %v735 = vmul.f32 %v645, %v705
    %v736 = vmul.f32 %v646, %v706
    %v737 = vmul.f32 %v647, %v707
    %v738 = vmul.f32 %v648, %v708
    %v739 = vmul.f32 %v649, %v709
    %v740 = vmul.f32 %v650, %v710
    %v741 = vmul.f32 %v651, %v711
    %v742 = vmul.f32 %v652, %v712
    %v743 = vmul.f32 %v653, %v713
    %v744 = vmul.f32 %v654, %v714
    %v745 = vmul.f32 %v655, %v715
    %v746 = vmul.f32 %v656, %v716
    %v747 = vmul.f32 %v657, %v717
    %v748 = vmul.f32 %v658, %v718
    %v749 = vmul.f32 %v659, %v719
    %v750 = vmul.f32 %v660, %v720
    %v751 = vmul.f32 %v661, %v721
    %v752 = vmul.f32 %v662, %v722
    %v753 = vmul.f32 %v663, %v723
    %v754 = vmul.f32 %v664, %v724
    %v755 = vmul.f32 %v665, %v725
    %v756 = vmul.f32 %v666, %v726
    %v757 = vmul.f32 %v667, %v727
    %v758 = vmul.f32 %v668, %v728
    %v759 = vmul.f32 %v669, %v729
    %v760 = vmul.f32 %v670, %v730
    %v761 = vmul.f32 %v671, %v731
    %v762 = vmul.f32 %v672, %v732
    %v763 = vmul.f32 %v673, %v733
    %s764 = smul.u32 %s54, 240
    %s765 = scalar_lea.vmem %s8, %s764
    %766 = vst.msk [vmem:[%s765] sm:$0xff] %vm32, %v734
    %767 = vst.msk [vmem:[%s765 + $0x8] sm:$0xff] %vm32, %v735
    %768 = vst.msk [vmem:[%s765 + $0x10] sm:$0xff] %vm32, %v736
    %769 = vst.msk [vmem:[%s765 + $0x18] sm:$0xff] %vm32, %v737
    %770 = vst.msk [vmem:[%s765 + $0x20] sm:$0xff] %vm32, %v738
    %771 = vst.msk [vmem:[%s765 + $0x28] sm:$0xff] %vm32, %v739
    %772 = vst.msk [vmem:[%s765 + $0x30] sm:$0xff] %vm32, %v740
    %773 = vst.msk [vmem:[%s765 + $0x38] sm:$0xff] %vm32, %v741
    %774 = vst.msk [vmem:[%s765 + $0x40] sm:$0xff] %vm32, %v742
    %775 = vst.msk [vmem:[%s765 + $0x48] sm:$0xff] %vm32, %v743
    %776 = vst.msk [vmem:[%s765 + $0x50] sm:$0xff] %vm32, %v744
    %777 = vst.msk [vmem:[%s765 + $0x58] sm:$0xff] %vm32, %v745
    %778 = vst.msk [vmem:[%s765 + $0x60] sm:$0xff] %vm32, %v746
    %779 = vst.msk [vmem:[%s765 + $0x68] sm:$0xff] %vm32, %v747
    %780 = vst.msk [vmem:[%s765 + $0x70] sm:$0xff] %vm32, %v748
    %781 = vst.msk [vmem:[%s765 + $0x78] sm:$0xff] %vm32, %v749
    %782 = vst.msk [vmem:[%s765 + $0x80] sm:$0xff] %vm32, %v750
    %783 = vst.msk [vmem:[%s765 + $0x88] sm:$0xff] %vm32, %v751
    %784 = vst.msk [vmem:[%s765 + $0x90] sm:$0xff] %vm32, %v752
    %785 = vst.msk [vmem:[%s765 + $0x98] sm:$0xff] %vm32, %v753
    %786 = vst.msk [vmem:[%s765 + $0xa0] sm:$0xff] %vm32, %v754
    %787 = vst.msk [vmem:[%s765 + $0xa8] sm:$0xff] %vm32, %v755
    %788 = vst.msk [vmem:[%s765 + $0xb0] sm:$0xff] %vm32, %v756
    %789 = vst.msk [vmem:[%s765 + $0xb8] sm:$0xff] %vm32, %v757
    %790 = vst.msk [vmem:[%s765 + $0xc0] sm:$0xff] %vm32, %v758
    %791 = vst.msk [vmem:[%s765 + $0xc8] sm:$0xff] %vm32, %v759
    %792 = vst.msk [vmem:[%s765 + $0xd0] sm:$0xff] %vm32, %v760
    %793 = vst.msk [vmem:[%s765 + $0xd8] sm:$0xff] %vm32, %v761
    %794 = vst.msk [vmem:[%s765 + $0xe0] sm:$0xff] %vm32, %v762
    %795 = vst.msk [vmem:[%s765 + $0xe8] sm:$0xff] %vm32, %v763
    %v796 = vmax.f32 %v734, %v749
    %v797 = vmax.f32 %v735, %v750
    %v798 = vmax.f32 %v736, %v751
    %v799 = vmax.f32 %v737, %v752
    %v800 = vmax.f32 %v738, %v753
    %v801 = vmax.f32 %v739, %v754
    %v802 = vmax.f32 %v740, %v755
    %v803 = vmax.f32 %v741, %v756
    %v804 = vmax.f32 %v742, %v757
    %v805 = vmax.f32 %v743, %v758
    %v806 = vmax.f32 %v744, %v759
    %v807 = vmax.f32 %v745, %v760
    %v808 = vmax.f32 %v746, %v761
    %v809 = vmax.f32 %v747, %v762
    %v810 = vmax.f32 %v748, %v763
    %826 = vrot.lane.b32.xlu0 %v796, 127
    %v827 = vpop.permute.xlu0 %826
    %828 = vrot.lane.b32.xlu0 %v797, 127
    %v829 = vpop.permute.xlu0 %828
    %830 = vrot.lane.b32.xlu0 %v798, 127
    %v831 = vpop.permute.xlu0 %830
    %832 = vrot.lane.b32.xlu0 %v799, 127
    %v833 = vpop.permute.xlu0 %832
    %834 = vrot.lane.b32.xlu0 %v800, 127
    %v835 = vpop.permute.xlu0 %834
    %836 = vrot.lane.b32.xlu0 %v801, 127
    %v837 = vpop.permute.xlu0 %836
    %838 = vrot.lane.b32.xlu0 %v802, 127
    %v839 = vpop.permute.xlu0 %838
    %840 = vrot.lane.b32.xlu0 %v803, 127
    %v841 = vpop.permute.xlu0 %840
    %842 = vrot.lane.b32.xlu0 %v804, 127
    %v843 = vpop.permute.xlu0 %842
    %844 = vrot.lane.b32.xlu0 %v805, 127
    %v845 = vpop.permute.xlu0 %844
    %846 = vrot.lane.b32.xlu0 %v806, 127
    %v847 = vpop.permute.xlu0 %846
    %848 = vrot.lane.b32.xlu0 %v807, 127
    %v849 = vpop.permute.xlu0 %848
    %850 = vrot.lane.b32.xlu0 %v808, 127
    %v851 = vpop.permute.xlu0 %850
    %852 = vrot.lane.b32.xlu0 %v809, 127
    %v853 = vpop.permute.xlu0 %852
    %854 = vrot.lane.b32.xlu0 %v810, 127
    %v855 = vpop.permute.xlu0 %854
    %v871 = vmax.f32 %v796, %v827
    %v872 = vmax.f32 %v797, %v829
    %v873 = vmax.f32 %v798, %v831
    %v874 = vmax.f32 %v799, %v833
    %v875 = vmax.f32 %v800, %v835
    %v876 = vmax.f32 %v801, %v837
    %v877 = vmax.f32 %v802, %v839
    %v878 = vmax.f32 %v803, %v841
    %v879 = vmax.f32 %v804, %v843
    %v880 = vmax.f32 %v805, %v845
    %v881 = vmax.f32 %v806, %v847
    %v882 = vmax.f32 %v807, %v849
    %v883 = vmax.f32 %v808, %v851
    %v884 = vmax.f32 %v809, %v853
    %v885 = vmax.f32 %v810, %v855
    %v886 = vld [vmem:[%s2] sm:$0xff]
    %v887 = vld [vmem:[%s2 + $0x8] sm:$0xff]
    %v888 = vld [vmem:[%s2 + $0x10] sm:$0x7f]
    %vm889 = vcmask 187392
    %v891 = vsel %vm889, %v871, 0
    %v894 = vsel %vm889, %v872, 0
    %v897 = vsel %vm889, %v873, 0
    %v900 = vsel %vm889, %v874, 0
    %v903 = vsel %vm889, %v875, 0
    %v906 = vsel %vm889, %v876, 0
    %v909 = vsel %vm889, %v877, 0
    %v912 = vsel %vm889, %v878, 0
    %v915 = vsel %vm889, %v879, 0
    %v918 = vsel %vm889, %v880, 0
    %v921 = vsel %vm889, %v881, 0
    %v924 = vsel %vm889, %v882, 0
    %v927 = vsel %vm889, %v883, 0
    %v930 = vsel %vm889, %v884, 0
    %v933 = vsel %vm889, %v885, 0
    %vm935 = vcmask 1046528
    %v937 = vsel %vm935, %v888, 0
    %939 = vmatprep.subr.mxu0 0.0
    %940 = vmatpush1.msra.mxu0 %v886
    %941 = vmatprep.subr.mxu0 0.0
    %942 = vmatpush1.msra.mxu0 %v887
    %943 = vmatprep.subr.mxu0 0.0
    %944 = vmatpush1.msra.mxu0 %v937
    %945 = vmatprep.subr.mxu0 0.0
    %946 = vmatpush1.msra.mxu0 0.0
    %947 = vmatprep.subr.mxu0 0.0
    %948 = vmatpush1.msra.mxu0 0.0
    %949 = vmatprep.subr.mxu0 0.0
    %950 = vmatpush1.msra.mxu0 0.0
    %951 = vmatprep.subr.mxu0 0.0
    %952 = vmatpush1.msra.mxu0 0.0
    %953 = vmatprep.subr.mxu0 0.0
    %954 = vmatpush1.msra.mxu0 0.0
    %955 = vmatprep.subr.mxu0 0.0
    %956 = vmatpush1.msra.mxu0 0.0
    %957 = vmatprep.subr.mxu0 0.0
    %958 = vmatpush1.msra.mxu0 0.0
    %959 = vmatprep.subr.mxu0 0.0
    %960 = vmatpush1.msra.mxu0 0.0
    %961 = vmatprep.subr.mxu0 0.0
    %962 = vmatpush1.msra.mxu0 0.0
    %963 = vmatprep.subr.mxu0 0.0
    %964 = vmatpush1.msra.mxu0 0.0
    %965 = vmatprep.subr.mxu0 0.0
    %966 = vmatpush1.msra.mxu0 0.0
    %967 = vmatprep.subr.mxu0 0.0
    %968 = vmatpush1.msra.mxu0 0.0
    %969 = vmatprep.subr.mxu0 0.0
    %970 = vmatpush1.msra.mxu0 0.0
    %971 = vmatprep.subr.mxu0 0.0
    %972 = vmatpush1.msra.mxu0 0.0
    %973 = vmatprep.subr.mxu0 0.0
    %974 = vmatpush1.msra.mxu0 0.0
    %975 = vmatprep.subr.mxu0 0.0
    %976 = vmatpush1.msra.mxu0 0.0
    %977 = vmatprep.subr.mxu0 0.0
    %978 = vmatpush1.msra.mxu0 0.0
    %979 = vmatprep.subr.mxu0 0.0
    %980 = vmatpush1.msra.mxu0 0.0
    %981 = vmatprep.subr.mxu0 0.0
    %982 = vmatpush1.msra.mxu0 0.0
    %983 = vmatprep.subr.mxu0 0.0
    %984 = vmatpush1.msra.mxu0 0.0
    %985 = vmatprep.subr.mxu0 0.0
    %986 = vmatpush1.msra.mxu0 0.0
    %987 = vmatprep.subr.mxu0 0.0
    %988 = vmatpush1.msra.mxu0 0.0
    %989 = vmatprep.subr.mxu0 0.0
    %990 = vmatpush1.msra.mxu0 0.0
    %991 = vmatprep.subr.mxu0 0.0
    %992 = vmatpush1.msra.mxu0 0.0
    %993 = vmatprep.subr.mxu0 0.0
    %994 = vmatpush1.msra.mxu0 0.0
    %995 = vmatprep.subr.mxu0 0.0
    %996 = vmatpush1.msra.mxu0 0.0
    %997 = vmatprep.subr.mxu0 0.0
    %998 = vmatpush1.msra.mxu0 0.0
    %999 = vmatprep.subr.mxu0 0.0
    %1000 = vmatpush1.msra.mxu0 0.0
    %1001 = vmatprep.subr.mxu0 0.0
    %1002 = vmatpush1.msra.mxu0 0.0
    %1003 = vmatprep.mubr.f32.mxu0 0.0
    %1004 = vmatmul.mubr.f32.gmra.mrb[0].mxu0 %v891
    %v1005 = vpop.f32.mrb[0].mxu0
    %v1006 = vadd.f32 0.0, %v1005
    %v1007 = vpop.f32.mrb[0].mxu0
    %1008 = vmatprep.mubr.f32.mxu0 0.0
    %1009 = vmatmul.mubr.f32.gmra.mrb[0].mxu0 %v894
    %v1010 = vpop.f32.mrb[0].mxu0
    %v1011 = vadd.f32 0.0, %v1010
    %v1012 = vpop.f32.mrb[0].mxu0
    %1013 = vmatprep.mubr.f32.mxu0 0.0
    %1014 = vmatmul.mubr.f32.gmra.mrb[0].mxu0 %v897
    %v1015 = vpop.f32.mrb[0].mxu0
    %v1016 = vadd.f32 0.0, %v1015
    %v1017 = vpop.f32.mrb[0].mxu0
    %1018 = vmatprep.mubr.f32.mxu0 0.0
    %1019 = vmatmul.mubr.f32.gmra.mrb[0].mxu0 %v900
    %v1020 = vpop.f32.mrb[0].mxu0
    %v1021 = vadd.f32 0.0, %v1020
    %v1022 = vpop.f32.mrb[0].mxu0
    %1023 = vmatprep.mubr.f32.mxu0 0.0
    %1024 = vmatmul.mubr.f32.gmra.mrb[0].mxu0 %v903
    %v1025 = vpop.f32.mrb[0].mxu0
    %v1026 = vadd.f32 0.0, %v1025
    %v1027 = vpop.f32.mrb[0].mxu0
    %1028 = vmatprep.mubr.f32.mxu0 0.0
    %1029 = vmatmul.mubr.f32.gmra.mrb[0].mxu0 %v906
    %v1030 = vpop.f32.mrb[0].mxu0
    %v1031 = vadd.f32 0.0, %v1030
    %v1032 = vpop.f32.mrb[0].mxu0
    %1033 = vmatprep.mubr.f32.mxu0 0.0
    %1034 = vmatmul.mubr.f32.gmra.mrb[0].mxu0 %v909
    %v1035 = vpop.f32.mrb[0].mxu0
    %v1036 = vadd.f32 0.0, %v1035
    %v1037 = vpop.f32.mrb[0].mxu0
    %1038 = vmatprep.mubr.f32.mxu0 0.0
    %1039 = vmatmul.mubr.f32.gmra.mrb[0].mxu0 %v912
    %v1040 = vpop.f32.mrb[0].mxu0
    %v1041 = vadd.f32 0.0, %v1040
    %v1042 = vpop.f32.mrb[0].mxu0
    %1043 = vmatprep.mubr.f32.mxu0 0.0
    %1044 = vmatmul.mubr.f32.gmra.mrb[0].mxu0 %v915
    %v1045 = vpop.f32.mrb[0].mxu0
    %v1046 = vadd.f32 0.0, %v1045
    %v1047 = vpop.f32.mrb[0].mxu0
    %1048 = vmatprep.mubr.f32.mxu0 0.0
    %1049 = vmatmul.mubr.f32.gmra.mrb[0].mxu0 %v918
    %v1050 = vpop.f32.mrb[0].mxu0
    %v1051 = vadd.f32 0.0, %v1050
    %v1052 = vpop.f32.mrb[0].mxu0
    %1053 = vmatprep.mubr.f32.mxu0 0.0
    %1054 = vmatmul.mubr.f32.gmra.mrb[0].mxu0 %v921
    %v1055 = vpop.f32.mrb[0].mxu0
    %v1056 = vadd.f32 0.0, %v1055
    %v1057 = vpop.f32.mrb[0].mxu0
    %1058 = vmatprep.mubr.f32.mxu0 0.0
    %1059 = vmatmul.mubr.f32.gmra.mrb[0].mxu0 %v924
    %v1060 = vpop.f32.mrb[0].mxu0
    %v1061 = vadd.f32 0.0, %v1060
    %v1062 = vpop.f32.mrb[0].mxu0
    %1063 = vmatprep.mubr.f32.mxu0 0.0
    %1064 = vmatmul.mubr.f32.gmra.mrb[0].mxu0 %v927
    %v1065 = vpop.f32.mrb[0].mxu0
    %v1066 = vadd.f32 0.0, %v1065
    %v1067 = vpop.f32.mrb[0].mxu0
    %1068 = vmatprep.mubr.f32.mxu0 0.0
    %1069 = vmatmul.mubr.f32.gmra.mrb[0].mxu0 %v930
    %v1070 = vpop.f32.mrb[0].mxu0
    %v1071 = vadd.f32 0.0, %v1070
    %v1072 = vpop.f32.mrb[0].mxu0
    %1073 = vmatprep.mubr.f32.mxu0 0.0
    %1074 = vmatmul.mubr.f32.gmra.mrb[0].mxu0 %v933
    %v1075 = vpop.f32.mrb[0].mxu0
    %v1076 = vadd.f32 0.0, %v1075
    %v1077 = vpop.f32.mrb[0].mxu0
    %1078 = vdwg.mxu0
    %s1079 = smul.u32 %s54, 120
    %s1080 = scalar_lea.vmem [#allocation3], %s1079
    %vm1081 = vcmask 97280
    %1082 = vst.msk [vmem:[%s1080] sm:$0xff] %vm1081, %v1006
    %1083 = vst.msk [vmem:[%s1080 + $0x8] sm:$0xff] %vm1081, %v1011
    %1084 = vst.msk [vmem:[%s1080 + $0x10] sm:$0xff] %vm1081, %v1016
    %1085 = vst.msk [vmem:[%s1080 + $0x18] sm:$0xff] %vm1081, %v1021
    %1086 = vst.msk [vmem:[%s1080 + $0x20] sm:$0xff] %vm1081, %v1026
    %1087 = vst.msk [vmem:[%s1080 + $0x28] sm:$0xff] %vm1081, %v1031
    %1088 = vst.msk [vmem:[%s1080 + $0x30] sm:$0xff] %vm1081, %v1036
    %1089 = vst.msk [vmem:[%s1080 + $0x38] sm:$0xff] %vm1081, %v1041
    %1090 = vst.msk [vmem:[%s1080 + $0x40] sm:$0xff] %vm1081, %v1046
    %1091 = vst.msk [vmem:[%s1080 + $0x48] sm:$0xff] %vm1081, %v1051
    %1092 = vst.msk [vmem:[%s1080 + $0x50] sm:$0xff] %vm1081, %v1056
    %1093 = vst.msk [vmem:[%s1080 + $0x58] sm:$0xff] %vm1081, %v1061
    %1094 = vst.msk [vmem:[%s1080 + $0x60] sm:$0xff] %vm1081, %v1066
    %1095 = vst.msk [vmem:[%s1080 + $0x68] sm:$0xff] %vm1081, %v1071
    %1096 = vst.msk [vmem:[%s1080 + $0x70] sm:$0xff] %vm1081, %v1076
  $region38: #{convnet_forward.1} parent=0 // loop_footer
    %s58 = sadd.s32 1, %s54
  $region39: #{convnet_forward.1} parent=0 // loop_footer_branch
    %53 = sbr.rel target = $region35
  $region40: #{convnet_forward.1} parent=0 // loop_exit
    _
  %v1097 = vld [vmem:[#allocation3] sm:$0xff]
  %v1098 = vld [vmem:[#allocation3 + $0x8] sm:$0xff]
  %v1099 = vld [vmem:[#allocation3 + $0x10] sm:$0xff]
  %v1100 = vld [vmem:[#allocation3 + $0x18] sm:$0xff]
  %v1101 = vld [vmem:[#allocation3 + $0x20] sm:$0xff]
  %v1102 = vld [vmem:[#allocation3 + $0x28] sm:$0xff]
  %v1103 = vld [vmem:[#allocation3 + $0x30] sm:$0xff]
  %v1104 = vld [vmem:[#allocation3 + $0x38] sm:$0xff]
  %v1105 = vld [vmem:[#allocation3 + $0x40] sm:$0xff]
  %v1106 = vld [vmem:[#allocation3 + $0x48] sm:$0xff]
  %v1107 = vld [vmem:[#allocation3 + $0x50] sm:$0xff]
  %v1108 = vld [vmem:[#allocation3 + $0x58] sm:$0xff]
  %v1109 = vld [vmem:[#allocation3 + $0x60] sm:$0xff]
  %v1110 = vld [vmem:[#allocation3 + $0x68] sm:$0xff]
  %v1111 = vld [vmem:[#allocation3 + $0x70] sm:$0xff]
  %vm1112 = vcmask 64512
  %1113 = vst.msk [vmem:[#allocation4] sm:$0xff] %vm1112, %v1097
  %1114 = vst.msk [vmem:[#allocation4 + $0x8] sm:$0xff] %vm1112, %v1098
  %1115 = vst.msk [vmem:[#allocation4 + $0x10] sm:$0xff] %vm1112, %v1099
  %1116 = vst.msk [vmem:[#allocation4 + $0x18] sm:$0xff] %vm1112, %v1100
  %1117 = vst.msk [vmem:[#allocation4 + $0x20] sm:$0xff] %vm1112, %v1101
  %1118 = vst.msk [vmem:[#allocation4 + $0x28] sm:$0xff] %vm1112, %v1102
  %1119 = vst.msk [vmem:[#allocation4 + $0x30] sm:$0xff] %vm1112, %v1103
  %1120 = vst.msk [vmem:[#allocation4 + $0x38] sm:$0xff] %vm1112, %v1104
  %1121 = vst.msk [vmem:[#allocation4 + $0x40] sm:$0xff] %vm1112, %v1105
  %1122 = vst.msk [vmem:[#allocation4 + $0x48] sm:$0xff] %vm1112, %v1106
  %1123 = vst.msk [vmem:[#allocation4 + $0x50] sm:$0xff] %vm1112, %v1107
  %1124 = vst.msk [vmem:[#allocation4 + $0x58] sm:$0xff] %vm1112, %v1108
  %1125 = vst.msk [vmem:[#allocation4 + $0x60] sm:$0xff] %vm1112, %v1109
  %1126 = vst.msk [vmem:[#allocation4 + $0x68] sm:$0xff] %vm1112, %v1110
  %1127 = vst.msk [vmem:[#allocation4 + $0x70] sm:$0xff] %vm1112, %v1111
  %1143 = vrot.lane.b32.xlu0 %v1097, 127
  %v1144 = vpop.permute.xlu0 %1143
  %1145 = vrot.lane.b32.xlu0 %v1098, 127
  %v1146 = vpop.permute.xlu0 %1145
  %1147 = vrot.lane.b32.xlu0 %v1099, 127
  %v1148 = vpop.permute.xlu0 %1147
  %1149 = vrot.lane.b32.xlu0 %v1100, 127
  %v1150 = vpop.permute.xlu0 %1149
  %1151 = vrot.lane.b32.xlu0 %v1101, 127
  %v1152 = vpop.permute.xlu0 %1151
  %1153 = vrot.lane.b32.xlu0 %v1102, 127
  %v1154 = vpop.permute.xlu0 %1153
  %1155 = vrot.lane.b32.xlu0 %v1103, 127
  %v1156 = vpop.permute.xlu0 %1155
  %1157 = vrot.lane.b32.xlu0 %v1104, 127
  %v1158 = vpop.permute.xlu0 %1157
  %1159 = vrot.lane.b32.xlu0 %v1105, 127
  %v1160 = vpop.permute.xlu0 %1159
  %1161 = vrot.lane.b32.xlu0 %v1106, 127
  %v1162 = vpop.permute.xlu0 %1161
  %1163 = vrot.lane.b32.xlu0 %v1107, 127
  %v1164 = vpop.permute.xlu0 %1163
  %1165 = vrot.lane.b32.xlu0 %v1108, 127
  %v1166 = vpop.permute.xlu0 %1165
  %1167 = vrot.lane.b32.xlu0 %v1109, 127
  %v1168 = vpop.permute.xlu0 %1167
  %1169 = vrot.lane.b32.xlu0 %v1110, 127
  %v1170 = vpop.permute.xlu0 %1169
  %1171 = vrot.lane.b32.xlu0 %v1111, 127
  %v1172 = vpop.permute.xlu0 %1171
  %1188 = vst.msk [vmem:[#allocation4 + $0x78] sm:$0xff] %vm1112, %v1144
  %1189 = vst.msk [vmem:[#allocation4 + $0x80] sm:$0xff] %vm1112, %v1146
  %1190 = vst.msk [vmem:[#allocation4 + $0x88] sm:$0xff] %vm1112, %v1148
  %1191 = vst.msk [vmem:[#allocation4 + $0x90] sm:$0xff] %vm1112, %v1150
  %1192 = vst.msk [vmem:[#allocation4 + $0x98] sm:$0xff] %vm1112, %v1152
  %1193 = vst.msk [vmem:[#allocation4 + $0xa0] sm:$0xff] %vm1112, %v1154
  %1194 = vst.msk [vmem:[#allocation4 + $0xa8] sm:$0xff] %vm1112, %v1156
  %1195 = vst.msk [vmem:[#allocation4 + $0xb0] sm:$0xff] %vm1112, %v1158
  %1196 = vst.msk [vmem:[#allocation4 + $0xb8] sm:$0xff] %vm1112, %v1160
  %1197 = vst.msk [vmem:[#allocation4 + $0xc0] sm:$0xff] %vm1112, %v1162
  %1198 = vst.msk [vmem:[#allocation4 + $0xc8] sm:$0xff] %vm1112, %v1164
  %1199 = vst.msk [vmem:[#allocation4 + $0xd0] sm:$0xff] %vm1112, %v1166
  %1200 = vst.msk [vmem:[#allocation4 + $0xd8] sm:$0xff] %vm1112, %v1168
  %1201 = vst.msk [vmem:[#allocation4 + $0xe0] sm:$0xff] %vm1112, %v1170
  %1202 = vst.msk [vmem:[#allocation4 + $0xe8] sm:$0xff] %vm1112, %v1172
  %1203 = vrot.lane.b32.xlu0 %v1097, 126
  %v1204 = vpop.permute.xlu0 %1203
  %1205 = vrot.lane.b32.xlu0 %v1098, 126
  %v1206 = vpop.permute.xlu0 %1205
  %1207 = vrot.lane.b32.xlu0 %v1099, 126
  %v1208 = vpop.permute.xlu0 %1207
  %1209 = vrot.lane.b32.xlu0 %v1100, 126
  %v1210 = vpop.permute.xlu0 %1209
  %1211 = vrot.lane.b32.xlu0 %v1101, 126
  %v1212 = vpop.permute.xlu0 %1211
  %1213 = vrot.lane.b32.xlu0 %v1102, 126
  %v1214 = vpop.permute.xlu0 %1213
  %1215 = vrot.lane.b32.xlu0 %v1103, 126
  %v1216 = vpop.permute.xlu0 %1215
  %1217 = vrot.lane.b32.xlu0 %v1104, 126
  %v1218 = vpop.permute.xlu0 %1217
  %1219 = vrot.lane.b32.xlu0 %v1105, 126
  %v1220 = vpop.permute.xlu0 %1219
  %1221 = vrot.lane.b32.xlu0 %v1106, 126
  %v1222 = vpop.permute.xlu0 %1221
  %1223 = vrot.lane.b32.xlu0 %v1107, 126
  %v1224 = vpop.permute.xlu0 %1223
  %1225 = vrot.lane.b32.xlu0 %v1108, 126
  %v1226 = vpop.permute.xlu0 %1225
  %1227 = vrot.lane.b32.xlu0 %v1109, 126
  %v1228 = vpop.permute.xlu0 %1227
  %1229 = vrot.lane.b32.xlu0 %v1110, 126
  %v1230 = vpop.permute.xlu0 %1229
  %1231 = vrot.lane.b32.xlu0 %v1111, 126
  %v1232 = vpop.permute.xlu0 %1231
  %1248 = vst.msk [vmem:[#allocation4 + $0xf0] sm:$0xff] %vm1112, %v1204
  %1249 = vst.msk [vmem:[#allocation4 + $0xf8] sm:$0xff] %vm1112, %v1206
  %1250 = vst.msk [vmem:[#allocation4 + $0x100] sm:$0xff] %vm1112, %v1208
  %1251 = vst.msk [vmem:[#allocation4 + $0x108] sm:$0xff] %vm1112, %v1210
  %1252 = vst.msk [vmem:[#allocation4 + $0x110] sm:$0xff] %vm1112, %v1212
  %1253 = vst.msk [vmem:[#allocation4 + $0x118] sm:$0xff] %vm1112, %v1214
  %1254 = vst.msk [vmem:[#allocation4 + $0x120] sm:$0xff] %vm1112, %v1216
  %1255 = vst.msk [vmem:[#allocation4 + $0x128] sm:$0xff] %vm1112, %v1218
  %1256 = vst.msk [vmem:[#allocation4 + $0x130] sm:$0xff] %vm1112, %v1220
  %1257 = vst.msk [vmem:[#allocation4 + $0x138] sm:$0xff] %vm1112, %v1222
  %1258 = vst.msk [vmem:[#allocation4 + $0x140] sm:$0xff] %vm1112, %v1224
  %1259 = vst.msk [vmem:[#allocation4 + $0x148] sm:$0xff] %vm1112, %v1226
  %1260 = vst.msk [vmem:[#allocation4 + $0x150] sm:$0xff] %vm1112, %v1228
  %1261 = vst.msk [vmem:[#allocation4 + $0x158] sm:$0xff] %vm1112, %v1230
  %1262 = vst.msk [vmem:[#allocation4 + $0x160] sm:$0xff] %vm1112, %v1232
  %1263 = vrot.lane.b32.xlu0 %v1097, 125
  %v1264 = vpop.permute.xlu0 %1263
  %1265 = vrot.lane.b32.xlu0 %v1098, 125
  %v1266 = vpop.permute.xlu0 %1265
  %1267 = vrot.lane.b32.xlu0 %v1099, 125
  %v1268 = vpop.permute.xlu0 %1267
  %1269 = vrot.lane.b32.xlu0 %v1100, 125
  %v1270 = vpop.permute.xlu0 %1269
  %1271 = vrot.lane.b32.xlu0 %v1101, 125
  %v1272 = vpop.permute.xlu0 %1271
  %1273 = vrot.lane.b32.xlu0 %v1102, 125
  %v1274 = vpop.permute.xlu0 %1273
  %1275 = vrot.lane.b32.xlu0 %v1103, 125
  %v1276 = vpop.permute.xlu0 %1275
  %1277 = vrot.lane.b32.xlu0 %v1104, 125
  %v1278 = vpop.permute.xlu0 %1277
  %1279 = vrot.lane.b32.xlu0 %v1105, 125
  %v1280 = vpop.permute.xlu0 %1279
  %1281 = vrot.lane.b32.xlu0 %v1106, 125
  %v1282 = vpop.permute.xlu0 %1281
  %1283 = vrot.lane.b32.xlu0 %v1107, 125
  %v1284 = vpop.permute.xlu0 %1283
  %1285 = vrot.lane.b32.xlu0 %v1108, 125
  %v1286 = vpop.permute.xlu0 %1285
  %1287 = vrot.lane.b32.xlu0 %v1109, 125
  %v1288 = vpop.permute.xlu0 %1287
  %1289 = vrot.lane.b32.xlu0 %v1110, 125
  %v1290 = vpop.permute.xlu0 %1289
  %1291 = vrot.lane.b32.xlu0 %v1111, 125
  %v1292 = vpop.permute.xlu0 %1291
  %1308 = vst.msk [vmem:[#allocation4 + $0x168] sm:$0xff] %vm1112, %v1264
  %1309 = vst.msk [vmem:[#allocation4 + $0x170] sm:$0xff] %vm1112, %v1266
  %1310 = vst.msk [vmem:[#allocation4 + $0x178] sm:$0xff] %vm1112, %v1268
  %1311 = vst.msk [vmem:[#allocation4 + $0x180] sm:$0xff] %vm1112, %v1270
  %1312 = vst.msk [vmem:[#allocation4 + $0x188] sm:$0xff] %vm1112, %v1272
  %1313 = vst.msk [vmem:[#allocation4 + $0x190] sm:$0xff] %vm1112, %v1274
  %1314 = vst.msk [vmem:[#allocation4 + $0x198] sm:$0xff] %vm1112, %v1276
  %1315 = vst.msk [vmem:[#allocation4 + $0x1a0] sm:$0xff] %vm1112, %v1278
  %1316 = vst.msk [vmem:[#allocation4 + $0x1a8] sm:$0xff] %vm1112, %v1280
  %1317 = vst.msk [vmem:[#allocation4 + $0x1b0] sm:$0xff] %vm1112, %v1282
  %1318 = vst.msk [vmem:[#allocation4 + $0x1b8] sm:$0xff] %vm1112, %v1284
  %1319 = vst.msk [vmem:[#allocation4 + $0x1c0] sm:$0xff] %vm1112, %v1286
  %1320 = vst.msk [vmem:[#allocation4 + $0x1c8] sm:$0xff] %vm1112, %v1288
  %1321 = vst.msk [vmem:[#allocation4 + $0x1d0] sm:$0xff] %vm1112, %v1290
  %1322 = vst.msk [vmem:[#allocation4 + $0x1d8] sm:$0xff] %vm1112, %v1292
  %1323 = vrot.lane.b32.xlu0 %v1097, 124
  %v1324 = vpop.permute.xlu0 %1323
  %1325 = vrot.lane.b32.xlu0 %v1098, 124
  %v1326 = vpop.permute.xlu0 %1325
  %1327 = vrot.lane.b32.xlu0 %v1099, 124
  %v1328 = vpop.permute.xlu0 %1327
  %1329 = vrot.lane.b32.xlu0 %v1100, 124
  %v1330 = vpop.permute.xlu0 %1329
  %1331 = vrot.lane.b32.xlu0 %v1101, 124
  %v1332 = vpop.permute.xlu0 %1331
  %1333 = vrot.lane.b32.xlu0 %v1102, 124
  %v1334 = vpop.permute.xlu0 %1333
  %1335 = vrot.lane.b32.xlu0 %v1103, 124
  %v1336 = vpop.permute.xlu0 %1335
  %1337 = vrot.lane.b32.xlu0 %v1104, 124
  %v1338 = vpop.permute.xlu0 %1337
  %1339 = vrot.lane.b32.xlu0 %v1105, 124
  %v1340 = vpop.permute.xlu0 %1339
  %1341 = vrot.lane.b32.xlu0 %v1106, 124
  %v1342 = vpop.permute.xlu0 %1341
  %1343 = vrot.lane.b32.xlu0 %v1107, 124
  %v1344 = vpop.permute.xlu0 %1343
  %1345 = vrot.lane.b32.xlu0 %v1108, 124
  %v1346 = vpop.permute.xlu0 %1345
  %1347 = vrot.lane.b32.xlu0 %v1109, 124
  %v1348 = vpop.permute.xlu0 %1347
  %1349 = vrot.lane.b32.xlu0 %v1110, 124
  %v1350 = vpop.permute.xlu0 %1349
  %1351 = vrot.lane.b32.xlu0 %v1111, 124
  %v1352 = vpop.permute.xlu0 %1351
  %1368 = vst.msk [vmem:[#allocation4 + $0x1e0] sm:$0xff] %vm1112, %v1324
  %1369 = vst.msk [vmem:[#allocation4 + $0x1e8] sm:$0xff] %vm1112, %v1326
  %1370 = vst.msk [vmem:[#allocation4 + $0x1f0] sm:$0xff] %vm1112, %v1328
  %1371 = vst.msk [vmem:[#allocation4 + $0x1f8] sm:$0xff] %vm1112, %v1330
  %1372 = vst.msk [vmem:[#allocation4 + $0x200] sm:$0xff] %vm1112, %v1332
  %1373 = vst.msk [vmem:[#allocation4 + $0x208] sm:$0xff] %vm1112, %v1334
  %1374 = vst.msk [vmem:[#allocation4 + $0x210] sm:$0xff] %vm1112, %v1336
  %1375 = vst.msk [vmem:[#allocation4 + $0x218] sm:$0xff] %vm1112, %v1338
  %1376 = vst.msk [vmem:[#allocation4 + $0x220] sm:$0xff] %vm1112, %v1340
  %1377 = vst.msk [vmem:[#allocation4 + $0x228] sm:$0xff] %vm1112, %v1342
  %1378 = vst.msk [vmem:[#allocation4 + $0x230] sm:$0xff] %vm1112, %v1344
  %1379 = vst.msk [vmem:[#allocation4 + $0x238] sm:$0xff] %vm1112, %v1346
  %1380 = vst.msk [vmem:[#allocation4 + $0x240] sm:$0xff] %vm1112, %v1348
  %1381 = vst.msk [vmem:[#allocation4 + $0x248] sm:$0xff] %vm1112, %v1350
  %1382 = vst.msk [vmem:[#allocation4 + $0x250] sm:$0xff] %vm1112, %v1352
  %s1383 = scalar_lea.vmem [#allocation3], 120
  %v1384 = vld [vmem:[%s1383] sm:$0xff]
  %v1385 = vld [vmem:[%s1383 + $0x8] sm:$0xff]
  %v1386 = vld [vmem:[%s1383 + $0x10] sm:$0xff]
  %v1387 = vld [vmem:[%s1383 + $0x18] sm:$0xff]
  %v1388 = vld [vmem:[%s1383 + $0x20] sm:$0xff]
  %v1389 = vld [vmem:[%s1383 + $0x28] sm:$0xff]
  %v1390 = vld [vmem:[%s1383 + $0x30] sm:$0xff]
  %v1391 = vld [vmem:[%s1383 + $0x38] sm:$0xff]
  %v1392 = vld [vmem:[%s1383 + $0x40] sm:$0xff]
  %v1393 = vld [vmem:[%s1383 + $0x48] sm:$0xff]
  %v1394 = vld [vmem:[%s1383 + $0x50] sm:$0xff]
  %v1395 = vld [vmem:[%s1383 + $0x58] sm:$0xff]
  %v1396 = vld [vmem:[%s1383 + $0x60] sm:$0xff]
  %v1397 = vld [vmem:[%s1383 + $0x68] sm:$0xff]
  %v1398 = vld [vmem:[%s1383 + $0x70] sm:$0xff]
  %1414 = vrot.lane.b32.xlu0 %v1384, 8
  %v1415 = vpop.permute.xlu0 %1414
  %1416 = vrot.lane.b32.xlu0 %v1385, 8
  %v1417 = vpop.permute.xlu0 %1416
  %1418 = vrot.lane.b32.xlu0 %v1386, 8
  %v1419 = vpop.permute.xlu0 %1418
  %1420 = vrot.lane.b32.xlu0 %v1387, 8
  %v1421 = vpop.permute.xlu0 %1420
  %1422 = vrot.lane.b32.xlu0 %v1388, 8
  %v1423 = vpop.permute.xlu0 %1422
  %1424 = vrot.lane.b32.xlu0 %v1389, 8
  %v1425 = vpop.permute.xlu0 %1424
  %1426 = vrot.lane.b32.xlu0 %v1390, 8
  %v1427 = vpop.permute.xlu0 %1426
  %1428 = vrot.lane.b32.xlu0 %v1391, 8
  %v1429 = vpop.permute.xlu0 %1428
  %1430 = vrot.lane.b32.xlu0 %v1392, 8
  %v1431 = vpop.permute.xlu0 %1430
  %1432 = vrot.lane.b32.xlu0 %v1393, 8
  %v1433 = vpop.permute.xlu0 %1432
  %1434 = vrot.lane.b32.xlu0 %v1394, 8
  %v1435 = vpop.permute.xlu0 %1434
  %1436 = vrot.lane.b32.xlu0 %v1395, 8
  %v1437 = vpop.permute.xlu0 %1436
  %1438 = vrot.lane.b32.xlu0 %v1396, 8
  %v1439 = vpop.permute.xlu0 %1438
  %1440 = vrot.lane.b32.xlu0 %v1397, 8
  %v1441 = vpop.permute.xlu0 %1440
  %1442 = vrot.lane.b32.xlu0 %v1398, 8
  %v1443 = vpop.permute.xlu0 %1442
  %vm1459 = vcmask 130112
  %1460 = vst.msk [vmem:[#allocation4] sm:$0xff] %vm1459, %v1415
  %1461 = vst.msk [vmem:[#allocation4 + $0x8] sm:$0xff] %vm1459, %v1417
  %1462 = vst.msk [vmem:[#allocation4 + $0x10] sm:$0xff] %vm1459, %v1419
  %1463 = vst.msk [vmem:[#allocation4 + $0x18] sm:$0xff] %vm1459, %v1421
  %1464 = vst.msk [vmem:[#allocation4 + $0x20] sm:$0xff] %vm1459, %v1423
  %1465 = vst.msk [vmem:[#allocation4 + $0x28] sm:$0xff] %vm1459, %v1425
  %1466 = vst.msk [vmem:[#allocation4 + $0x30] sm:$0xff] %vm1459, %v1427
  %1467 = vst.msk [vmem:[#allocation4 + $0x38] sm:$0xff] %vm1459, %v1429
  %1468 = vst.msk [vmem:[#allocation4 + $0x40] sm:$0xff] %vm1459, %v1431
  %1469 = vst.msk [vmem:[#allocation4 + $0x48] sm:$0xff] %vm1459, %v1433
  %1470 = vst.msk [vmem:[#allocation4 + $0x50] sm:$0xff] %vm1459, %v1435
  %1471 = vst.msk [vmem:[#allocation4 + $0x58] sm:$0xff] %vm1459, %v1437
  %1472 = vst.msk [vmem:[#allocation4 + $0x60] sm:$0xff] %vm1459, %v1439
  %1473 = vst.msk [vmem:[#allocation4 + $0x68] sm:$0xff] %vm1459, %v1441
  %1474 = vst.msk [vmem:[#allocation4 + $0x70] sm:$0xff] %vm1459, %v1443
  %1475 = vrot.lane.b32.xlu0 %v1384, 7
  %v1476 = vpop.permute.xlu0 %1475
  %1477 = vrot.lane.b32.xlu0 %v1385, 7
  %v1478 = vpop.permute.xlu0 %1477
  %1479 = vrot.lane.b32.xlu0 %v1386, 7
  %v1480 = vpop.permute.xlu0 %1479
  %1481 = vrot.lane.b32.xlu0 %v1387, 7
  %v1482 = vpop.permute.xlu0 %1481
  %1483 = vrot.lane.b32.xlu0 %v1388, 7
  %v1484 = vpop.permute.xlu0 %1483
  %1485 = vrot.lane.b32.xlu0 %v1389, 7
  %v1486 = vpop.permute.xlu0 %1485
  %1487 = vrot.lane.b32.xlu0 %v1390, 7
  %v1488 = vpop.permute.xlu0 %1487
  %1489 = vrot.lane.b32.xlu0 %v1391, 7
  %v1490 = vpop.permute.xlu0 %1489
  %1491 = vrot.lane.b32.xlu0 %v1392, 7
  %v1492 = vpop.permute.xlu0 %1491
  %1493 = vrot.lane.b32.xlu0 %v1393, 7
  %v1494 = vpop.permute.xlu0 %1493
  %1495 = vrot.lane.b32.xlu0 %v1394, 7
  %v1496 = vpop.permute.xlu0 %1495
  %1497 = vrot.lane.b32.xlu0 %v1395, 7
  %v1498 = vpop.permute.xlu0 %1497
  %1499 = vrot.lane.b32.xlu0 %v1396, 7
  %v1500 = vpop.permute.xlu0 %1499
  %1501 = vrot.lane.b32.xlu0 %v1397, 7
  %v1502 = vpop.permute.xlu0 %1501
  %1503 = vrot.lane.b32.xlu0 %v1398, 7
  %v1504 = vpop.permute.xlu0 %1503
  %1520 = vst.msk [vmem:[#allocation4 + $0x78] sm:$0xff] %vm1459, %v1476
  %1521 = vst.msk [vmem:[#allocation4 + $0x80] sm:$0xff] %vm1459, %v1478
  %1522 = vst.msk [vmem:[#allocation4 + $0x88] sm:$0xff] %vm1459, %v1480
  %1523 = vst.msk [vmem:[#allocation4 + $0x90] sm:$0xff] %vm1459, %v1482
  %1524 = vst.msk [vmem:[#allocation4 + $0x98] sm:$0xff] %vm1459, %v1484
  %1525 = vst.msk [vmem:[#allocation4 + $0xa0] sm:$0xff] %vm1459, %v1486
  %1526 = vst.msk [vmem:[#allocation4 + $0xa8] sm:$0xff] %vm1459, %v1488
  %1527 = vst.msk [vmem:[#allocation4 + $0xb0] sm:$0xff] %vm1459, %v1490
  %1528 = vst.msk [vmem:[#allocation4 + $0xb8] sm:$0xff] %vm1459, %v1492
  %1529 = vst.msk [vmem:[#allocation4 + $0xc0] sm:$0xff] %vm1459, %v1494
  %1530 = vst.msk [vmem:[#allocation4 + $0xc8] sm:$0xff] %vm1459, %v1496
  %1531 = vst.msk [vmem:[#allocation4 + $0xd0] sm:$0xff] %vm1459, %v1498
  %1532 = vst.msk [vmem:[#allocation4 + $0xd8] sm:$0xff] %vm1459, %v1500
  %1533 = vst.msk [vmem:[#allocation4 + $0xe0] sm:$0xff] %vm1459, %v1502
  %1534 = vst.msk [vmem:[#allocation4 + $0xe8] sm:$0xff] %vm1459, %v1504
  %1535 = vrot.lane.b32.xlu0 %v1384, 6
  %v1536 = vpop.permute.xlu0 %1535
  %1537 = vrot.lane.b32.xlu0 %v1385, 6
  %v1538 = vpop.permute.xlu0 %1537
  %1539 = vrot.lane.b32.xlu0 %v1386, 6
  %v1540 = vpop.permute.xlu0 %1539
  %1541 = vrot.lane.b32.xlu0 %v1387, 6
  %v1542 = vpop.permute.xlu0 %1541
  %1543 = vrot.lane.b32.xlu0 %v1388, 6
  %v1544 = vpop.permute.xlu0 %1543
  %1545 = vrot.lane.b32.xlu0 %v1389, 6
  %v1546 = vpop.permute.xlu0 %1545
  %1547 = vrot.lane.b32.xlu0 %v1390, 6
  %v1548 = vpop.permute.xlu0 %1547
  %1549 = vrot.lane.b32.xlu0 %v1391, 6
  %v1550 = vpop.permute.xlu0 %1549
  %1551 = vrot.lane.b32.xlu0 %v1392, 6
  %v1552 = vpop.permute.xlu0 %1551
  %1553 = vrot.lane.b32.xlu0 %v1393, 6
  %v1554 = vpop.permute.xlu0 %1553
  %1555 = vrot.lane.b32.xlu0 %v1394, 6
  %v1556 = vpop.permute.xlu0 %1555
  %1557 = vrot.lane.b32.xlu0 %v1395, 6
  %v1558 = vpop.permute.xlu0 %1557
  %1559 = vrot.lane.b32.xlu0 %v1396, 6
  %v1560 = vpop.permute.xlu0 %1559
  %1561 = vrot.lane.b32.xlu0 %v1397, 6
  %v1562 = vpop.permute.xlu0 %1561
  %1563 = vrot.lane.b32.xlu0 %v1398, 6
  %v1564 = vpop.permute.xlu0 %1563
  %1580 = vst.msk [vmem:[#allocation4 + $0xf0] sm:$0xff] %vm1459, %v1536
  %1581 = vst.msk [vmem:[#allocation4 + $0xf8] sm:$0xff] %vm1459, %v1538
  %1582 = vst.msk [vmem:[#allocation4 + $0x100] sm:$0xff] %vm1459, %v1540
  %1583 = vst.msk [vmem:[#allocation4 + $0x108] sm:$0xff] %vm1459, %v1542
  %1584 = vst.msk [vmem:[#allocation4 + $0x110] sm:$0xff] %vm1459, %v1544
  %1585 = vst.msk [vmem:[#allocation4 + $0x118] sm:$0xff] %vm1459, %v1546
  %1586 = vst.msk [vmem:[#allocation4 + $0x120] sm:$0xff] %vm1459, %v1548
  %1587 = vst.msk [vmem:[#allocation4 + $0x128] sm:$0xff] %vm1459, %v1550
  %1588 = vst.msk [vmem:[#allocation4 + $0x130] sm:$0xff] %vm1459, %v1552
  %1589 = vst.msk [vmem:[#allocation4 + $0x138] sm:$0xff] %vm1459, %v1554
  %1590 = vst.msk [vmem:[#allocation4 + $0x140] sm:$0xff] %vm1459, %v1556
  %1591 = vst.msk [vmem:[#allocation4 + $0x148] sm:$0xff] %vm1459, %v1558
  %1592 = vst.msk [vmem:[#allocation4 + $0x150] sm:$0xff] %vm1459, %v1560
  %1593 = vst.msk [vmem:[#allocation4 + $0x158] sm:$0xff] %vm1459, %v1562
  %1594 = vst.msk [vmem:[#allocation4 + $0x160] sm:$0xff] %vm1459, %v1564
  %1595 = vrot.lane.b32.xlu0 %v1384, 5
  %v1596 = vpop.permute.xlu0 %1595
  %1597 = vrot.lane.b32.xlu0 %v1385, 5
  %v1598 = vpop.permute.xlu0 %1597
  %1599 = vrot.lane.b32.xlu0 %v1386, 5
  %v1600 = vpop.permute.xlu0 %1599
  %1601 = vrot.lane.b32.xlu0 %v1387, 5
  %v1602 = vpop.permute.xlu0 %1601
  %1603 = vrot.lane.b32.xlu0 %v1388, 5
  %v1604 = vpop.permute.xlu0 %1603
  %1605 = vrot.lane.b32.xlu0 %v1389, 5
  %v1606 = vpop.permute.xlu0 %1605
  %1607 = vrot.lane.b32.xlu0 %v1390, 5
  %v1608 = vpop.permute.xlu0 %1607
  %1609 = vrot.lane.b32.xlu0 %v1391, 5
  %v1610 = vpop.permute.xlu0 %1609
  %1611 = vrot.lane.b32.xlu0 %v1392, 5
  %v1612 = vpop.permute.xlu0 %1611
  %1613 = vrot.lane.b32.xlu0 %v1393, 5
  %v1614 = vpop.permute.xlu0 %1613
  %1615 = vrot.lane.b32.xlu0 %v1394, 5
  %v1616 = vpop.permute.xlu0 %1615
  %1617 = vrot.lane.b32.xlu0 %v1395, 5
  %v1618 = vpop.permute.xlu0 %1617
  %1619 = vrot.lane.b32.xlu0 %v1396, 5
  %v1620 = vpop.permute.xlu0 %1619
  %1621 = vrot.lane.b32.xlu0 %v1397, 5
  %v1622 = vpop.permute.xlu0 %1621
  %1623 = vrot.lane.b32.xlu0 %v1398, 5
  %v1624 = vpop.permute.xlu0 %1623
  %1640 = vst.msk [vmem:[#allocation4 + $0x168] sm:$0xff] %vm1459, %v1596
  %1641 = vst.msk [vmem:[#allocation4 + $0x170] sm:$0xff] %vm1459, %v1598
  %1642 = vst.msk [vmem:[#allocation4 + $0x178] sm:$0xff] %vm1459, %v1600
  %1643 = vst.msk [vmem:[#allocation4 + $0x180] sm:$0xff] %vm1459, %v1602
  %1644 = vst.msk [vmem:[#allocation4 + $0x188] sm:$0xff] %vm1459, %v1604
  %1645 = vst.msk [vmem:[#allocation4 + $0x190] sm:$0xff] %vm1459, %v1606
  %1646 = vst.msk [vmem:[#allocation4 + $0x198] sm:$0xff] %vm1459, %v1608
  %1647 = vst.msk [vmem:[#allocation4 + $0x1a0] sm:$0xff] %vm1459, %v1610
  %1648 = vst.msk [vmem:[#allocation4 + $0x1a8] sm:$0xff] %vm1459, %v1612
  %1649 = vst.msk [vmem:[#allocation4 + $0x1b0] sm:$0xff] %vm1459, %v1614
  %1650 = vst.msk [vmem:[#allocation4 + $0x1b8] sm:$0xff] %vm1459, %v1616
  %1651 = vst.msk [vmem:[#allocation4 + $0x1c0] sm:$0xff] %vm1459, %v1618
  %1652 = vst.msk [vmem:[#allocation4 + $0x1c8] sm:$0xff] %vm1459, %v1620
  %1653 = vst.msk [vmem:[#allocation4 + $0x1d0] sm:$0xff] %vm1459, %v1622
  %1654 = vst.msk [vmem:[#allocation4 + $0x1d8] sm:$0xff] %vm1459, %v1624
  %1655 = vrot.lane.b32.xlu0 %v1384, 4
  %v1656 = vpop.permute.xlu0 %1655
  %1657 = vrot.lane.b32.xlu0 %v1385, 4
  %v1658 = vpop.permute.xlu0 %1657
  %1659 = vrot.lane.b32.xlu0 %v1386, 4
  %v1660 = vpop.permute.xlu0 %1659
  %1661 = vrot.lane.b32.xlu0 %v1387, 4
  %v1662 = vpop.permute.xlu0 %1661
  %1663 = vrot.lane.b32.xlu0 %v1388, 4
  %v1664 = vpop.permute.xlu0 %1663
  %1665 = vrot.lane.b32.xlu0 %v1389, 4
  %v1666 = vpop.permute.xlu0 %1665
  %1667 = vrot.lane.b32.xlu0 %v1390, 4
  %v1668 = vpop.permute.xlu0 %1667
  %1669 = vrot.lane.b32.xlu0 %v1391, 4
  %v1670 = vpop.permute.xlu0 %1669
  %1671 = vrot.lane.b32.xlu0 %v1392, 4
  %v1672 = vpop.permute.xlu0 %1671
  %1673 = vrot.lane.b32.xlu0 %v1393, 4
  %v1674 = vpop.permute.xlu0 %1673
  %1675 = vrot.lane.b32.xlu0 %v1394, 4
  %v1676 = vpop.permute.xlu0 %1675
  %1677 = vrot.lane.b32.xlu0 %v1395, 4
  %v1678 = vpop.permute.xlu0 %1677
  %1679 = vrot.lane.b32.xlu0 %v1396, 4
  %v1680 = vpop.permute.xlu0 %1679
  %1681 = vrot.lane.b32.xlu0 %v1397, 4
  %v1682 = vpop.permute.xlu0 %1681
  %1683 = vrot.lane.b32.xlu0 %v1398, 4
  %v1684 = vpop.permute.xlu0 %1683
  %1700 = vst.msk [vmem:[#allocation4 + $0x1e0] sm:$0xff] %vm1459, %v1656
  %1701 = vst.msk [vmem:[#allocation4 + $0x1e8] sm:$0xff] %vm1459, %v1658
  %1702 = vst.msk [vmem:[#allocation4 + $0x1f0] sm:$0xff] %vm1459, %v1660
  %1703 = vst.msk [vmem:[#allocation4 + $0x1f8] sm:$0xff] %vm1459, %v1662
  %1704 = vst.msk [vmem:[#allocation4 + $0x200] sm:$0xff] %vm1459, %v1664
  %1705 = vst.msk [vmem:[#allocation4 + $0x208] sm:$0xff] %vm1459, %v1666
  %1706 = vst.msk [vmem:[#allocation4 + $0x210] sm:$0xff] %vm1459, %v1668
  %1707 = vst.msk [vmem:[#allocation4 + $0x218] sm:$0xff] %vm1459, %v1670
  %1708 = vst.msk [vmem:[#allocation4 + $0x220] sm:$0xff] %vm1459, %v1672
  %1709 = vst.msk [vmem:[#allocation4 + $0x228] sm:$0xff] %vm1459, %v1674
  %1710 = vst.msk [vmem:[#allocation4 + $0x230] sm:$0xff] %vm1459, %v1676
  %1711 = vst.msk [vmem:[#allocation4 + $0x238] sm:$0xff] %vm1459, %v1678
  %1712 = vst.msk [vmem:[#allocation4 + $0x240] sm:$0xff] %vm1459, %v1680
  %1713 = vst.msk [vmem:[#allocation4 + $0x248] sm:$0xff] %vm1459, %v1682
  %1714 = vst.msk [vmem:[#allocation4 + $0x250] sm:$0xff] %vm1459, %v1684
  %v1715 = vld [vmem:[%s3] sm:$0xff]
  %v1716 = vld [vmem:[%s3 + $0x8] sm:$0xff]
  %v1717 = vld [vmem:[%s3 + $0x10] sm:$0xff]
  %v1718 = vld [vmem:[%s3 + $0x18] sm:$0xff]
  %v1719 = vld [vmem:[%s3 + $0x20] sm:$0xff]
  %v1720 = vld [vmem:[%s3 + $0x28] sm:$0xff]
  %v1721 = vld [vmem:[%s3 + $0x30] sm:$0xff]
  %v1722 = vld [vmem:[%s3 + $0x38] sm:$0xff]
  %v1723 = vld [vmem:[%s3 + $0x40] sm:$0xff]
  %v1724 = vld [vmem:[%s3 + $0x48] sm:$0xff]
  %v1725 = vld [vmem:[%s3 + $0x50] sm:$0xff]
  %v1726 = vld [vmem:[%s3 + $0x58] sm:$0xff]
  %v1727 = vld [vmem:[%s3 + $0x60] sm:$0xff]
  %v1728 = vld [vmem:[%s3 + $0x68] sm:$0xff]
  %v1729 = vld [vmem:[%s3 + $0x70] sm:$0xff]
  %v1730 = vld [vmem:[%s3 + $0x78] sm:$0xff]
  %v1731 = vld [vmem:[%s3 + $0x80] sm:$0xff]
  %v1732 = vld [vmem:[%s3 + $0x88] sm:$0xff]
  %v1733 = vld [vmem:[%s3 + $0x90] sm:$0xff]
  %v1734 = vld [vmem:[%s3 + $0x98] sm:$0xff]
  %v1735 = vld [vmem:[%s3 + $0xa0] sm:$0xff]
  %v1736 = vld [vmem:[%s3 + $0xa8] sm:$0xff]
  %v1737 = vld [vmem:[%s3 + $0xb0] sm:$0xff]
  %v1738 = vld [vmem:[%s3 + $0xb8] sm:$0xff]
  %v1739 = vld [vmem:[%s3 + $0xc0] sm:$0xff]
  %v1740 = vld [vmem:[%s3 + $0xc8] sm:$0xff]
  %v1741 = vld [vmem:[%s3 + $0xd0] sm:$0xff]
  %v1742 = vld [vmem:[%s3 + $0xd8] sm:$0xff]
  %v1743 = vld [vmem:[%s3 + $0xe0] sm:$0xff]
  %v1744 = vld [vmem:[%s3 + $0xe8] sm:$0xff]
  %v1745 = vld [vmem:[%s3 + $0xf0] sm:$0xff]
  %v1746 = vld [vmem:[%s3 + $0xf8] sm:$0xff]
  %v1747 = vld [vmem:[%s3 + $0x100] sm:$0xff]
  %v1748 = vld [vmem:[%s3 + $0x108] sm:$0xff]
  %v1749 = vld [vmem:[%s3 + $0x110] sm:$0xff]
  %v1750 = vld [vmem:[%s3 + $0x118] sm:$0xff]
  %v1751 = vld [vmem:[%s3 + $0x120] sm:$0xff]
  %v1752 = vld [vmem:[%s3 + $0x128] sm:$0xff]
  %v1753 = vld [vmem:[%s3 + $0x130] sm:$0xff]
  %v1754 = vld [vmem:[%s3 + $0x138] sm:$0xff]
  %v1755 = vld [vmem:[%s3 + $0x140] sm:$0xff]
  %v1756 = vld [vmem:[%s3 + $0x148] sm:$0xff]
  %v1757 = vld [vmem:[%s3 + $0x150] sm:$0xff]
  %v1758 = vld [vmem:[%s3 + $0x158] sm:$0xff]
  %v1759 = vld [vmem:[%s3 + $0x160] sm:$0xff]
  %v1760 = vld [vmem:[%s3 + $0x168] sm:$0xff]
  %v1761 = vld [vmem:[%s3 + $0x170] sm:$0xff]
  %v1762 = vld [vmem:[%s3 + $0x178] sm:$0xff]
  %v1763 = vld [vmem:[%s3 + $0x180] sm:$0xff]
  %v1764 = vld [vmem:[%s3 + $0x188] sm:$0xff]
  %v1765 = vld [vmem:[%s3 + $0x190] sm:$0xff]
  %v1766 = vld [vmem:[%s3 + $0x198] sm:$0xff]
  %v1767 = vld [vmem:[%s3 + $0x1a0] sm:$0xff]
  %v1768 = vld [vmem:[%s3 + $0x1a8] sm:$0xff]
  %v1769 = vld [vmem:[%s3 + $0x1b0] sm:$0xff]
  %v1770 = vld [vmem:[%s3 + $0x1b8] sm:$0xff]
  %v1771 = vld [vmem:[%s3 + $0x1c0] sm:$0xff]
  %v1772 = vld [vmem:[%s3 + $0x1c8] sm:$0xff]
  %v1773 = vld [vmem:[%s3 + $0x1d0] sm:$0xff]
  %v1774 = vld [vmem:[%s3 + $0x1d8] sm:$0xff]
  %v1775 = vld [vmem:[%s3 + $0x1e0] sm:$0xff]
  %v1776 = vld [vmem:[%s3 + $0x1e8] sm:$0xff]
  %v1777 = vld [vmem:[%s3 + $0x1f0] sm:$0xff]
  %v1778 = vld [vmem:[%s3 + $0x1f8] sm:$0xff]
  %v1779 = vld [vmem:[%s3 + $0x200] sm:$0xff]
  %v1780 = vld [vmem:[%s3 + $0x208] sm:$0xff]
  %v1781 = vld [vmem:[%s3 + $0x210] sm:$0xff]
  %v1782 = vld [vmem:[%s3 + $0x218] sm:$0xff]
  %v1783 = vld [vmem:[%s3 + $0x220] sm:$0xff]
  %v1784 = vld [vmem:[%s3 + $0x228] sm:$0xff]
  %v1785 = vld [vmem:[%s3 + $0x230] sm:$0xff]
  %v1786 = vld [vmem:[%s3 + $0x238] sm:$0xff]
  %v1787 = vld [vmem:[%s3 + $0x240] sm:$0xff]
  %v1788 = vld [vmem:[%s3 + $0x248] sm:$0xff]
  %v1789 = vld [vmem:[%s3 + $0x250] sm:$0xff]
  %v1790 = vld [vmem:[%s3 + $0x258] sm:$0xff]
  %v1791 = vld [vmem:[%s3 + $0x260] sm:$0xff]
  %v1792 = vld [vmem:[%s3 + $0x268] sm:$0xff]
  %v1793 = vld [vmem:[%s3 + $0x270] sm:$0xff]
  %v1794 = vld [vmem:[%s3 + $0x278] sm:$0xff]
  %v1795 = vld [vmem:[%s3 + $0x280] sm:$0xff]
  %v1796 = vld [vmem:[%s3 + $0x288] sm:$0xff]
  %v1797 = vld [vmem:[%s3 + $0x290] sm:$0xff]
  %v1798 = vld [vmem:[%s3 + $0x298] sm:$0xff]
  %v1799 = vld [vmem:[%s3 + $0x2a0] sm:$0xff]
  %v1800 = vld [vmem:[%s3 + $0x2a8] sm:$0xff]
  %v1801 = vld [vmem:[%s3 + $0x2b0] sm:$0xff]
  %v1802 = vld [vmem:[%s3 + $0x2b8] sm:$0xff]
  %v1803 = vld [vmem:[%s3 + $0x2c0] sm:$0xff]
  %v1804 = vld [vmem:[%s3 + $0x2c8] sm:$0xff]
  %v1805 = vld [vmem:[%s3 + $0x2d0] sm:$0xff]
  %v1806 = vld [vmem:[%s3 + $0x2d8] sm:$0xff]
  %v1807 = vld [vmem:[%s3 + $0x2e0] sm:$0xff]
  %v1808 = vld [vmem:[%s3 + $0x2e8] sm:$0xff]
  %v1809 = vld [vmem:[%s3 + $0x2f0] sm:$0xff]
  %v1810 = vld [vmem:[%s3 + $0x2f8] sm:$0xff]
  %v1811 = vld [vmem:[%s3 + $0x300] sm:$0xff]
  %v1812 = vld [vmem:[%s3 + $0x308] sm:$0xff]
  %v1813 = vld [vmem:[%s3 + $0x310] sm:$0xff]
  %v1814 = vld [vmem:[%s3 + $0x318] sm:$0xff]
  %v1815 = vld [vmem:[#allocation4] sm:$0xff]
  %v1816 = vld [vmem:[#allocation4 + $0x8] sm:$0xff]
  %v1817 = vld [vmem:[#allocation4 + $0x10] sm:$0xff]
  %v1818 = vld [vmem:[#allocation4 + $0x18] sm:$0xff]
  %v1819 = vld [vmem:[#allocation4 + $0x20] sm:$0xff]
  %v1820 = vld [vmem:[#allocation4 + $0x28] sm:$0xff]
  %v1821 = vld [vmem:[#allocation4 + $0x30] sm:$0xff]
  %v1822 = vld [vmem:[#allocation4 + $0x38] sm:$0xff]
  %v1823 = vld [vmem:[#allocation4 + $0x40] sm:$0xff]
  %v1824 = vld [vmem:[#allocation4 + $0x48] sm:$0xff]
  %v1825 = vld [vmem:[#allocation4 + $0x50] sm:$0xff]
  %v1826 = vld [vmem:[#allocation4 + $0x58] sm:$0xff]
  %v1827 = vld [vmem:[#allocation4 + $0x60] sm:$0xff]
  %v1828 = vld [vmem:[#allocation4 + $0x68] sm:$0xff]
  %v1829 = vld [vmem:[#allocation4 + $0x70] sm:$0xff]
  %v1830 = vld [vmem:[#allocation4 + $0x78] sm:$0xff]
  %v1831 = vld [vmem:[#allocation4 + $0x80] sm:$0xff]
  %v1832 = vld [vmem:[#allocation4 + $0x88] sm:$0xff]
  %v1833 = vld [vmem:[#allocation4 + $0x90] sm:$0xff]
  %v1834 = vld [vmem:[#allocation4 + $0x98] sm:$0xff]
  %v1835 = vld [vmem:[#allocation4 + $0xa0] sm:$0xff]
  %v1836 = vld [vmem:[#allocation4 + $0xa8] sm:$0xff]
  %v1837 = vld [vmem:[#allocation4 + $0xb0] sm:$0xff]
  %v1838 = vld [vmem:[#allocation4 + $0xb8] sm:$0xff]
  %v1839 = vld [vmem:[#allocation4 + $0xc0] sm:$0xff]
  %v1840 = vld [vmem:[#allocation4 + $0xc8] sm:$0xff]
  %v1841 = vld [vmem:[#allocation4 + $0xd0] sm:$0xff]
  %v1842 = vld [vmem:[#allocation4 + $0xd8] sm:$0xff]
  %v1843 = vld [vmem:[#allocation4 + $0xe0] sm:$0xff]
  %v1844 = vld [vmem:[#allocation4 + $0xe8] sm:$0xff]
  %v1845 = vld [vmem:[#allocation4 + $0xf0] sm:$0xff]
  %v1846 = vld [vmem:[#allocation4 + $0xf8] sm:$0xff]
  %v1847 = vld [vmem:[#allocation4 + $0x100] sm:$0xff]
  %v1848 = vld [vmem:[#allocation4 + $0x108] sm:$0xff]
  %v1849 = vld [vmem:[#allocation4 + $0x110] sm:$0xff]
  %v1850 = vld [vmem:[#allocation4 + $0x118] sm:$0xff]
  %v1851 = vld [vmem:[#allocation4 + $0x120] sm:$0xff]
  %v1852 = vld [vmem:[#allocation4 + $0x128] sm:$0xff]
  %v1853 = vld [vmem:[#allocation4 + $0x130] sm:$0xff]
  %v1854 = vld [vmem:[#allocation4 + $0x138] sm:$0xff]
  %v1855 = vld [vmem:[#allocation4 + $0x140] sm:$0xff]
  %v1856 = vld [vmem:[#allocation4 + $0x148] sm:$0xff]
  %v1857 = vld [vmem:[#allocation4 + $0x150] sm:$0xff]
  %v1858 = vld [vmem:[#allocation4 + $0x158] sm:$0xff]
  %v1859 = vld [vmem:[#allocation4 + $0x160] sm:$0xff]
  %v1860 = vld [vmem:[#allocation4 + $0x168] sm:$0xff]
  %v1861 = vld [vmem:[#allocation4 + $0x170] sm:$0xff]
  %v1862 = vld [vmem:[#allocation4 + $0x178] sm:$0xff]
  %v1863 = vld [vmem:[#allocation4 + $0x180] sm:$0xff]
  %v1864 = vld [vmem:[#allocation4 + $0x188] sm:$0xff]
  %v1865 = vld [vmem:[#allocation4 + $0x190] sm:$0xff]
  %v1866 = vld [vmem:[#allocation4 + $0x198] sm:$0xff]
  %v1867 = vld [vmem:[#allocation4 + $0x1a0] sm:$0xff]
  %v1868 = vld [vmem:[#allocation4 + $0x1a8] sm:$0xff]
  %v1869 = vld [vmem:[#allocation4 + $0x1b0] sm:$0xff]
  %v1870 = vld [vmem:[#allocation4 + $0x1b8] sm:$0xff]
  %v1871 = vld [vmem:[#allocation4 + $0x1c0] sm:$0xff]
  %v1872 = vld [vmem:[#allocation4 + $0x1c8] sm:$0xff]
  %v1873 = vld [vmem:[#allocation4 + $0x1d0] sm:$0xff]
  %v1874 = vld [vmem:[#allocation4 + $0x1d8] sm:$0xff]
  %v1875 = vld [vmem:[#allocation4 + $0x1e0] sm:$0xff]
  %v1876 = vld [vmem:[#allocation4 + $0x1e8] sm:$0xff]
  %v1877 = vld [vmem:[#allocation4 + $0x1f0] sm:$0xff]
  %v1878 = vld [vmem:[#allocation4 + $0x1f8] sm:$0xff]
  %v1879 = vld [vmem:[#allocation4 + $0x200] sm:$0xff]
  %v1880 = vld [vmem:[#allocation4 + $0x208] sm:$0xff]
  %v1881 = vld [vmem:[#allocation4 + $0x210] sm:$0xff]
  %v1882 = vld [vmem:[#allocation4 + $0x218] sm:$0xff]
  %v1883 = vld [vmem:[#allocation4 + $0x220] sm:$0xff]
  %v1884 = vld [vmem:[#allocation4 + $0x228] sm:$0xff]
  %v1885 = vld [vmem:[#allocation4 + $0x230] sm:$0xff]
  %v1886 = vld [vmem:[#allocation4 + $0x238] sm:$0xff]
  %v1887 = vld [vmem:[#allocation4 + $0x240] sm:$0xff]
  %v1888 = vld [vmem:[#allocation4 + $0x248] sm:$0xff]
  %v1889 = vld [vmem:[#allocation4 + $0x250] sm:$0xff]
  %vm1890 = vcmask 719872
  %v1892 = vsel %vm1890, %v1719, 0
  %v1895 = vsel %vm1890, %v1724, 0
  %v1898 = vsel %vm1890, %v1729, 0
  %v1901 = vsel %vm1890, %v1734, 0
  %v1904 = vsel %vm1890, %v1739, 0
  %v1907 = vsel %vm1890, %v1744, 0
  %v1910 = vsel %vm1890, %v1749, 0
  %v1913 = vsel %vm1890, %v1754, 0
  %v1916 = vsel %vm1890, %v1759, 0
  %v1919 = vsel %vm1890, %v1764, 0
  %v1922 = vsel %vm1890, %v1769, 0
  %v1925 = vsel %vm1890, %v1774, 0
  %v1928 = vsel %vm1890, %v1779, 0
  %v1931 = vsel %vm1890, %v1784, 0
  %v1934 = vsel %vm1890, %v1789, 0
  %v1937 = vsel %vm1890, %v1794, 0
  %v1940 = vsel %vm1890, %v1799, 0
  %v1943 = vsel %vm1890, %v1804, 0
  %v1946 = vsel %vm1890, %v1809, 0
  %v1949 = vsel %vm1890, %v1814, 0
  %1951 = vmatprep.subr.mxu0 0.0
  %1952 = vmatpush1.msra.mxu0 %v1815
  %1953 = vmatprep.subr.mxu0 0.0
  %1954 = vmatpush1.msra.mxu0 %v1816
  %1955 = vmatprep.subr.mxu0 0.0
  %1956 = vmatpush1.msra.mxu0 %v1817
  %1957 = vmatprep.subr.mxu0 0.0
  %1958 = vmatpush1.msra.mxu0 %v1818
  %1959 = vmatprep.subr.mxu0 0.0
  %1960 = vmatpush1.msra.mxu0 %v1819
  %1961 = vmatprep.subr.mxu0 0.0
  %1962 = vmatpush1.msra.mxu0 %v1820
  %1963 = vmatprep.subr.mxu0 0.0
  %1964 = vmatpush1.msra.mxu0 %v1821
  %1965 = vmatprep.subr.mxu0 0.0
  %1966 = vmatpush1.msra.mxu0 %v1822
  %1967 = vmatprep.subr.mxu0 0.0
  %1968 = vmatpush1.msra.mxu0 %v1823
  %1969 = vmatprep.subr.mxu0 0.0
  %1970 = vmatpush1.msra.mxu0 %v1824
  %1971 = vmatprep.subr.mxu0 0.0
  %1972 = vmatpush1.msra.mxu0 %v1825
  %1973 = vmatprep.subr.mxu0 0.0
  %1974 = vmatpush1.msra.mxu0 %v1826
  %1975 = vmatprep.subr.mxu0 0.0
  %1976 = vmatpush1.msra.mxu0 %v1827
  %1977 = vmatprep.subr.mxu0 0.0
  %1978 = vmatpush1.msra.mxu0 %v1828
  %1979 = vmatprep.subr.mxu0 0.0
  %1980 = vmatpush1.msra.mxu0 %v1829
  %1981 = vmatprep.subr.mxu0 0.0
  %1982 = vmatpush1.msra.mxu0 %v1830
  %1983 = vmatprep.subr.mxu0 0.0
  %1984 = vmatpush1.msra.mxu0 %v1831
  %1985 = vmatprep.subr.mxu0 0.0
  %1986 = vmatpush1.msra.mxu0 %v1832
  %1987 = vmatprep.subr.mxu0 0.0
  %1988 = vmatpush1.msra.mxu0 %v1833
  %1989 = vmatprep.subr.mxu0 0.0
  %1990 = vmatpush1.msra.mxu0 %v1834
  %1991 = vmatprep.subr.mxu0 0.0
  %1992 = vmatpush1.msra.mxu0 %v1835
  %1993 = vmatprep.subr.mxu0 0.0
  %1994 = vmatpush1.msra.mxu0 %v1836
  %1995 = vmatprep.subr.mxu0 0.0
  %1996 = vmatpush1.msra.mxu0 %v1837
  %1997 = vmatprep.subr.mxu0 0.0
  %1998 = vmatpush1.msra.mxu0 %v1838
  %1999 = vmatprep.subr.mxu0 0.0
  %2000 = vmatpush1.msra.mxu0 %v1839
  %2001 = vmatprep.subr.mxu0 0.0
  %2002 = vmatpush1.msra.mxu0 %v1840
  %2003 = vmatprep.subr.mxu0 0.0
  %2004 = vmatpush1.msra.mxu0 %v1841
  %2005 = vmatprep.subr.mxu0 0.0
  %2006 = vmatpush1.msra.mxu0 %v1842
  %2007 = vmatprep.subr.mxu0 0.0
  %2008 = vmatpush1.msra.mxu0 %v1843
  %2009 = vmatprep.subr.mxu0 0.0
  %2010 = vmatpush1.msra.mxu0 %v1844
  %2011 = vmatprep.subr.mxu0 0.0
  %2012 = vmatpush1.msra.mxu0 %v1845
  %2013 = vmatprep.subr.mxu0 0.0
  %2014 = vmatpush1.msra.mxu0 %v1846
  %2015 = vmatprep.mubr.f32.mxu0 %v1716
  %2016 = vmatmul.mubr.f32.gmra.mrb[0].mxu0 %v1715
  %v2017 = vpop.f32.mrb[0].mxu0
  %v2018 = vadd.f32 0.0, %v2017
  %v2019 = vpop.f32.mrb[0].mxu0
  %2020 = vmatprep.mubr.f32.mxu0 %v1721
  %2021 = vmatmul.mubr.f32.gmra.mrb[0].mxu0 %v1720
  %v2022 = vpop.f32.mrb[0].mxu0
  %v2023 = vadd.f32 0.0, %v2022
  %v2024 = vpop.f32.mrb[0].mxu0
  %2025 = vmatprep.mubr.f32.mxu0 %v1726
  %2026 = vmatmul.mubr.f32.gmra.mrb[0].mxu0 %v1725
  %v2027 = vpop.f32.mrb[0].mxu0
  %v2028 = vadd.f32 0.0, %v2027
  %v2029 = vpop.f32.mrb[0].mxu0
  %2030 = vmatprep.mubr.f32.mxu0 %v1731
  %2031 = vmatmul.mubr.f32.gmra.mrb[0].mxu0 %v1730
  %v2032 = vpop.f32.mrb[0].mxu0
  %v2033 = vadd.f32 0.0, %v2032
  %v2034 = vpop.f32.mrb[0].mxu0
  %2035 = vmatprep.mubr.f32.mxu0 %v1736
  %2036 = vmatmul.mubr.f32.gmra.mrb[0].mxu0 %v1735
  %v2037 = vpop.f32.mrb[0].mxu0
  %v2038 = vadd.f32 0.0, %v2037
  %v2039 = vpop.f32.mrb[0].mxu0
  %2040 = vmatprep.mubr.f32.mxu0 %v1741
  %2041 = vmatmul.mubr.f32.gmra.mrb[0].mxu0 %v1740
  %v2042 = vpop.f32.mrb[0].mxu0
  %v2043 = vadd.f32 0.0, %v2042
  %v2044 = vpop.f32.mrb[0].mxu0
  %2045 = vmatprep.mubr.f32.mxu0 %v1746
  %2046 = vmatmul.mubr.f32.gmra.mrb[0].mxu0 %v1745
  %v2047 = vpop.f32.mrb[0].mxu0
  %v2048 = vadd.f32 0.0, %v2047
  %v2049 = vpop.f32.mrb[0].mxu0
  %2050 = vmatprep.mubr.f32.mxu0 %v1751
  %2051 = vmatmul.mubr.f32.gmra.mrb[0].mxu0 %v1750
  %v2052 = vpop.f32.mrb[0].mxu0
  %v2053 = vadd.f32 0.0, %v2052
  %v2054 = vpop.f32.mrb[0].mxu0
  %2055 = vmatprep.mubr.f32.mxu0 %v1756
  %2056 = vmatmul.mubr.f32.gmra.mrb[0].mxu0 %v1755
  %v2057 = vpop.f32.mrb[0].mxu0
  %v2058 = vadd.f32 0.0, %v2057
  %v2059 = vpop.f32.mrb[0].mxu0
  %2060 = vmatprep.mubr.f32.mxu0 %v1761
  %2061 = vmatmul.mubr.f32.gmra.mrb[0].mxu0 %v1760
  %v2062 = vpop.f32.mrb[0].mxu0
  %v2063 = vadd.f32 0.0, %v2062
  %v2064 = vpop.f32.mrb[0].mxu0
  %2065 = vmatprep.mubr.f32.mxu0 %v1766
  %2066 = vmatmul.mubr.f32.gmra.mrb[0].mxu0 %v1765
  %v2067 = vpop.f32.mrb[0].mxu0
  %v2068 = vadd.f32 0.0, %v2067
  %v2069 = vpop.f32.mrb[0].mxu0
  %2070 = vmatprep.mubr.f32.mxu0 %v1771
  %2071 = vmatmul.mubr.f32.gmra.mrb[0].mxu0 %v1770
  %v2072 = vpop.f32.mrb[0].mxu0
  %v2073 = vadd.f32 0.0, %v2072
  %v2074 = vpop.f32.mrb[0].mxu0
  %2075 = vmatprep.mubr.f32.mxu0 %v1776
  %2076 = vmatmul.mubr.f32.gmra.mrb[0].mxu0 %v1775
  %v2077 = vpop.f32.mrb[0].mxu0
  %v2078 = vadd.f32 0.0, %v2077
  %v2079 = vpop.f32.mrb[0].mxu0
  %2080 = vmatprep.mubr.f32.mxu0 %v1781
  %2081 = vmatmul.mubr.f32.gmra.mrb[0].mxu0 %v1780
  %v2082 = vpop.f32.mrb[0].mxu0
  %v2083 = vadd.f32 0.0, %v2082
  %v2084 = vpop.f32.mrb[0].mxu0
  %2085 = vmatprep.mubr.f32.mxu0 %v1786
  %2086 = vmatmul.mubr.f32.gmra.mrb[0].mxu0 %v1785
  %v2087 = vpop.f32.mrb[0].mxu0
  %v2088 = vadd.f32 0.0, %v2087
  %v2089 = vpop.f32.mrb[0].mxu0
  %2090 = vmatprep.mubr.f32.mxu0 %v1791
  %2091 = vmatmul.mubr.f32.gmra.mrb[0].mxu0 %v1790
  %v2092 = vpop.f32.mrb[0].mxu0
  %v2093 = vadd.f32 0.0, %v2092
  %v2094 = vpop.f32.mrb[0].mxu0
  %2095 = vmatprep.mubr.f32.mxu0 %v1796
  %2096 = vmatmul.mubr.f32.gmra.mrb[0].mxu0 %v1795
  %v2097 = vpop.f32.mrb[0].mxu0
  %v2098 = vadd.f32 0.0, %v2097
  %v2099 = vpop.f32.mrb[0].mxu0
  %2100 = vmatprep.mubr.f32.mxu0 %v1801
  %2101 = vmatmul.mubr.f32.gmra.mrb[0].mxu0 %v1800
  %v2102 = vpop.f32.mrb[0].mxu0
  %v2103 = vadd.f32 0.0, %v2102
  %v2104 = vpop.f32.mrb[0].mxu0
  %2105 = vmatprep.mubr.f32.mxu0 %v1806
  %2106 = vmatmul.mubr.f32.gmra.mrb[0].mxu0 %v1805
  %v2107 = vpop.f32.mrb[0].mxu0
  %v2108 = vadd.f32 0.0, %v2107
  %v2109 = vpop.f32.mrb[0].mxu0
  %2110 = vmatprep.mubr.f32.mxu0 %v1811
  %2111 = vmatmul.mubr.f32.gmra.mrb[0].mxu0 %v1810
  %v2112 = vpop.f32.mrb[0].mxu0
  %v2113 = vadd.f32 0.0, %v2112
  %v2114 = vpop.f32.mrb[0].mxu0
  %2115 = vdwg.mxu0
  %2116 = vmatprep.subr.mxu0 0.0
  %2117 = vmatpush1.msra.mxu0 %v1847
  %2118 = vmatprep.subr.mxu0 0.0
  %2119 = vmatpush1.msra.mxu0 %v1848
  %2120 = vmatprep.subr.mxu0 0.0
  %2121 = vmatpush1.msra.mxu0 %v1849
  %2122 = vmatprep.subr.mxu0 0.0
  %2123 = vmatpush1.msra.mxu0 %v1850
  %2124 = vmatprep.subr.mxu0 0.0
  %2125 = vmatpush1.msra.mxu0 %v1851
  %2126 = vmatprep.subr.mxu0 0.0
  %2127 = vmatpush1.msra.mxu0 %v1852
  %2128 = vmatprep.subr.mxu0 0.0
  %2129 = vmatpush1.msra.mxu0 %v1853
  %2130 = vmatprep.subr.mxu0 0.0
  %2131 = vmatpush1.msra.mxu0 %v1854
  %2132 = vmatprep.subr.mxu0 0.0
  %2133 = vmatpush1.msra.mxu0 %v1855
  %2134 = vmatprep.subr.mxu0 0.0
  %2135 = vmatpush1.msra.mxu0 %v1856
  %2136 = vmatprep.subr.mxu0 0.0
  %2137 = vmatpush1.msra.mxu0 %v1857
  %2138 = vmatprep.subr.mxu0 0.0
  %2139 = vmatpush1.msra.mxu0 %v1858
  %2140 = vmatprep.subr.mxu0 0.0
  %2141 = vmatpush1.msra.mxu0 %v1859
  %2142 = vmatprep.subr.mxu0 0.0
  %2143 = vmatpush1.msra.mxu0 %v1860
  %2144 = vmatprep.subr.mxu0 0.0
  %2145 = vmatpush1.msra.mxu0 %v1861
  %2146 = vmatprep.subr.mxu0 0.0
  %2147 = vmatpush1.msra.mxu0 %v1862
  %2148 = vmatprep.subr.mxu0 0.0
  %2149 = vmatpush1.msra.mxu0 %v1863
  %2150 = vmatprep.subr.mxu0 0.0
  %2151 = vmatpush1.msra.mxu0 %v1864
  %2152 = vmatprep.subr.mxu0 0.0
  %2153 = vmatpush1.msra.mxu0 %v1865
  %2154 = vmatprep.subr.mxu0 0.0
  %2155 = vmatpush1.msra.mxu0 %v1866
  %2156 = vmatprep.subr.mxu0 0.0
  %2157 = vmatpush1.msra.mxu0 %v1867
  %2158 = vmatprep.subr.mxu0 0.0
  %2159 = vmatpush1.msra.mxu0 %v1868
  %2160 = vmatprep.subr.mxu0 0.0
  %2161 = vmatpush1.msra.mxu0 %v1869
  %2162 = vmatprep.subr.mxu0 0.0
  %2163 = vmatpush1.msra.mxu0 %v1870
  %2164 = vmatprep.subr.mxu0 0.0
  %2165 = vmatpush1.msra.mxu0 %v1871
  %2166 = vmatprep.subr.mxu0 0.0
  %2167 = vmatpush1.msra.mxu0 %v1872
  %2168 = vmatprep.subr.mxu0 0.0
  %2169 = vmatpush1.msra.mxu0 %v1873
  %2170 = vmatprep.subr.mxu0 0.0
  %2171 = vmatpush1.msra.mxu0 %v1874
  %2172 = vmatprep.subr.mxu0 0.0
  %2173 = vmatpush1.msra.mxu0 %v1875
  %2174 = vmatprep.subr.mxu0 0.0
  %2175 = vmatpush1.msra.mxu0 %v1876
  %2176 = vmatprep.subr.mxu0 0.0
  %2177 = vmatpush1.msra.mxu0 %v1877
  %2178 = vmatprep.subr.mxu0 0.0
  %2179 = vmatpush1.msra.mxu0 %v1878
  %2180 = vmatprep.mubr.f32.mxu0 %v1718
  %2181 = vmatmul.mubr.f32.gmra.mrb[0].mxu0 %v1717
  %v2182 = vpop.f32.mrb[0].mxu0
  %v2183 = vadd.f32 %v2018, %v2182
  %v2184 = vpop.f32.mrb[0].mxu0
  %2185 = vmatprep.mubr.f32.mxu0 %v1723
  %2186 = vmatmul.mubr.f32.gmra.mrb[0].mxu0 %v1722
  %v2187 = vpop.f32.mrb[0].mxu0
  %v2188 = vadd.f32 %v2023, %v2187
  %v2189 = vpop.f32.mrb[0].mxu0
  %2190 = vmatprep.mubr.f32.mxu0 %v1728
  %2191 = vmatmul.mubr.f32.gmra.mrb[0].mxu0 %v1727
  %v2192 = vpop.f32.mrb[0].mxu0
  %v2193 = vadd.f32 %v2028, %v2192
  %v2194 = vpop.f32.mrb[0].mxu0
  %2195 = vmatprep.mubr.f32.mxu0 %v1733
  %2196 = vmatmul.mubr.f32.gmra.mrb[0].mxu0 %v1732
  %v2197 = vpop.f32.mrb[0].mxu0
  %v2198 = vadd.f32 %v2033, %v2197
  %v2199 = vpop.f32.mrb[0].mxu0
  %2200 = vmatprep.mubr.f32.mxu0 %v1738
  %2201 = vmatmul.mubr.f32.gmra.mrb[0].mxu0 %v1737
  %v2202 = vpop.f32.mrb[0].mxu0
  %v2203 = vadd.f32 %v2038, %v2202
  %v2204 = vpop.f32.mrb[0].mxu0
  %2205 = vmatprep.mubr.f32.mxu0 %v1743
  %2206 = vmatmul.mubr.f32.gmra.mrb[0].mxu0 %v1742
  %v2207 = vpop.f32.mrb[0].mxu0
  %v2208 = vadd.f32 %v2043, %v2207
  %v2209 = vpop.f32.mrb[0].mxu0
  %2210 = vmatprep.mubr.f32.mxu0 %v1748
  %2211 = vmatmul.mubr.f32.gmra.mrb[0].mxu0 %v1747
  %v2212 = vpop.f32.mrb[0].mxu0
  %v2213 = vadd.f32 %v2048, %v2212
  %v2214 = vpop.f32.mrb[0].mxu0
  %2215 = vmatprep.mubr.f32.mxu0 %v1753
  %2216 = vmatmul.mubr.f32.gmra.mrb[0].mxu0 %v1752
  %v2217 = vpop.f32.mrb[0].mxu0
  %v2218 = vadd.f32 %v2053, %v2217
  %v2219 = vpop.f32.mrb[0].mxu0
  %2220 = vmatprep.mubr.f32.mxu0 %v1758
  %2221 = vmatmul.mubr.f32.gmra.mrb[0].mxu0 %v1757
  %v2222 = vpop.f32.mrb[0].mxu0
  %v2223 = vadd.f32 %v2058, %v2222
  %v2224 = vpop.f32.mrb[0].mxu0
  %2225 = vmatprep.mubr.f32.mxu0 %v1763
  %2226 = vmatmul.mubr.f32.gmra.mrb[0].mxu0 %v1762
  %v2227 = vpop.f32.mrb[0].mxu0
  %v2228 = vadd.f32 %v2063, %v2227
  %v2229 = vpop.f32.mrb[0].mxu0
  %2230 = vmatprep.mubr.f32.mxu0 %v1768
  %2231 = vmatmul.mubr.f32.gmra.mrb[0].mxu0 %v1767
  %v2232 = vpop.f32.mrb[0].mxu0
  %v2233 = vadd.f32 %v2068, %v2232
  %v2234 = vpop.f32.mrb[0].mxu0
  %2235 = vmatprep.mubr.f32.mxu0 %v1773
  %2236 = vmatmul.mubr.f32.gmra.mrb[0].mxu0 %v1772
  %v2237 = vpop.f32.mrb[0].mxu0
  %v2238 = vadd.f32 %v2073, %v2237
  %v2239 = vpop.f32.mrb[0].mxu0
  %2240 = vmatprep.mubr.f32.mxu0 %v1778
  %2241 = vmatmul.mubr.f32.gmra.mrb[0].mxu0 %v1777
  %v2242 = vpop.f32.mrb[0].mxu0
  %v2243 = vadd.f32 %v2078, %v2242
  %v2244 = vpop.f32.mrb[0].mxu0
  %2245 = vmatprep.mubr.f32.mxu0 %v1783
  %2246 = vmatmul.mubr.f32.gmra.mrb[0].mxu0 %v1782
  %v2247 = vpop.f32.mrb[0].mxu0
  %v2248 = vadd.f32 %v2083, %v2247
  %v2249 = vpop.f32.mrb[0].mxu0
  %2250 = vmatprep.mubr.f32.mxu0 %v1788
  %2251 = vmatmul.mubr.f32.gmra.mrb[0].mxu0 %v1787
  %v2252 = vpop.f32.mrb[0].mxu0
  %v2253 = vadd.f32 %v2088, %v2252
  %v2254 = vpop.f32.mrb[0].mxu0
  %2255 = vmatprep.mubr.f32.mxu0 %v1793
  %2256 = vmatmul.mubr.f32.gmra.mrb[0].mxu0 %v1792
  %v2257 = vpop.f32.mrb[0].mxu0
  %v2258 = vadd.f32 %v2093, %v2257
  %v2259 = vpop.f32.mrb[0].mxu0
  %2260 = vmatprep.mubr.f32.mxu0 %v1798
  %2261 = vmatmul.mubr.f32.gmra.mrb[0].mxu0 %v1797
  %v2262 = vpop.f32.mrb[0].mxu0
  %v2263 = vadd.f32 %v2098, %v2262
  %v2264 = vpop.f32.mrb[0].mxu0
  %2265 = vmatprep.mubr.f32.mxu0 %v1803
  %2266 = vmatmul.mubr.f32.gmra.mrb[0].mxu0 %v1802
  %v2267 = vpop.f32.mrb[0].mxu0
  %v2268 = vadd.f32 %v2103, %v2267
  %v2269 = vpop.f32.mrb[0].mxu0
  %2270 = vmatprep.mubr.f32.mxu0 %v1808
  %2271 = vmatmul.mubr.f32.gmra.mrb[0].mxu0 %v1807
  %v2272 = vpop.f32.mrb[0].mxu0
  %v2273 = vadd.f32 %v2108, %v2272
  %v2274 = vpop.f32.mrb[0].mxu0
  %2275 = vmatprep.mubr.f32.mxu0 %v1813
  %2276 = vmatmul.mubr.f32.gmra.mrb[0].mxu0 %v1812
  %v2277 = vpop.f32.mrb[0].mxu0
  %v2278 = vadd.f32 %v2113, %v2277
  %v2279 = vpop.f32.mrb[0].mxu0
  %2280 = vdwg.mxu0
  %2281 = vmatprep.subr.mxu0 0.0
  %2282 = vmatpush1.msra.mxu0 %v1879
  %2283 = vmatprep.subr.mxu0 0.0
  %2284 = vmatpush1.msra.mxu0 %v1880
  %2285 = vmatprep.subr.mxu0 0.0
  %2286 = vmatpush1.msra.mxu0 %v1881
  %2287 = vmatprep.subr.mxu0 0.0
  %2288 = vmatpush1.msra.mxu0 %v1882
  %2289 = vmatprep.subr.mxu0 0.0
  %2290 = vmatpush1.msra.mxu0 %v1883
  %2291 = vmatprep.subr.mxu0 0.0
  %2292 = vmatpush1.msra.mxu0 %v1884
  %2293 = vmatprep.subr.mxu0 0.0
  %2294 = vmatpush1.msra.mxu0 %v1885
  %2295 = vmatprep.subr.mxu0 0.0
  %2296 = vmatpush1.msra.mxu0 %v1886
  %2297 = vmatprep.subr.mxu0 0.0
  %2298 = vmatpush1.msra.mxu0 %v1887
  %2299 = vmatprep.subr.mxu0 0.0
  %2300 = vmatpush1.msra.mxu0 %v1888
  %2301 = vmatprep.subr.mxu0 0.0
  %2302 = vmatpush1.msra.mxu0 %v1889
  %2303 = vmatprep.subr.mxu0 0.0
  %2304 = vmatpush1.msra.mxu0 0.0
  %2305 = vmatprep.subr.mxu0 0.0
  %2306 = vmatpush1.msra.mxu0 0.0
  %2307 = vmatprep.subr.mxu0 0.0
  %2308 = vmatpush1.msra.mxu0 0.0
  %2309 = vmatprep.subr.mxu0 0.0
  %2310 = vmatpush1.msra.mxu0 0.0
  %2311 = vmatprep.subr.mxu0 0.0
  %2312 = vmatpush1.msra.mxu0 0.0
  %2313 = vmatprep.subr.mxu0 0.0
  %2314 = vmatpush1.msra.mxu0 0.0
  %2315 = vmatprep.subr.mxu0 0.0
  %2316 = vmatpush1.msra.mxu0 0.0
  %2317 = vmatprep.subr.mxu0 0.0
  %2318 = vmatpush1.msra.mxu0 0.0
  %2319 = vmatprep.subr.mxu0 0.0
  %2320 = vmatpush1.msra.mxu0 0.0
  %2321 = vmatprep.subr.mxu0 0.0
  %2322 = vmatpush1.msra.mxu0 0.0
  %2323 = vmatprep.subr.mxu0 0.0
  %2324 = vmatpush1.msra.mxu0 0.0
  %2325 = vmatprep.subr.mxu0 0.0
  %2326 = vmatpush1.msra.mxu0 0.0
  %2327 = vmatprep.subr.mxu0 0.0
  %2328 = vmatpush1.msra.mxu0 0.0
  %2329 = vmatprep.subr.mxu0 0.0
  %2330 = vmatpush1.msra.mxu0 0.0
  %2331 = vmatprep.subr.mxu0 0.0
  %2332 = vmatpush1.msra.mxu0 0.0
  %2333 = vmatprep.subr.mxu0 0.0
  %2334 = vmatpush1.msra.mxu0 0.0
  %2335 = vmatprep.subr.mxu0 0.0
  %2336 = vmatpush1.msra.mxu0 0.0
  %2337 = vmatprep.subr.mxu0 0.0
  %2338 = vmatpush1.msra.mxu0 0.0
  %2339 = vmatprep.subr.mxu0 0.0
  %2340 = vmatpush1.msra.mxu0 0.0
  %2341 = vmatprep.subr.mxu0 0.0
  %2342 = vmatpush1.msra.mxu0 0.0
  %2343 = vmatprep.subr.mxu0 0.0
  %2344 = vmatpush1.msra.mxu0 0.0
  %2345 = vmatprep.mubr.f32.mxu0 0.0
  %2346 = vmatmul.mubr.f32.gmra.mrb[0].mxu0 %v1892
  %v2347 = vpop.f32.mrb[0].mxu0
  %v2348 = vadd.f32 %v2183, %v2347
  %v2349 = vpop.f32.mrb[0].mxu0
  %2350 = vmatprep.mubr.f32.mxu0 0.0
  %2351 = vmatmul.mubr.f32.gmra.mrb[0].mxu0 %v1895
  %v2352 = vpop.f32.mrb[0].mxu0
  %v2353 = vadd.f32 %v2188, %v2352
  %v2354 = vpop.f32.mrb[0].mxu0
  %2355 = vmatprep.mubr.f32.mxu0 0.0
  %2356 = vmatmul.mubr.f32.gmra.mrb[0].mxu0 %v1898
  %v2357 = vpop.f32.mrb[0].mxu0
  %v2358 = vadd.f32 %v2193, %v2357
  %v2359 = vpop.f32.mrb[0].mxu0
  %2360 = vmatprep.mubr.f32.mxu0 0.0
  %2361 = vmatmul.mubr.f32.gmra.mrb[0].mxu0 %v1901
  %v2362 = vpop.f32.mrb[0].mxu0
  %v2363 = vadd.f32 %v2198, %v2362
  %v2364 = vpop.f32.mrb[0].mxu0
  %2365 = vmatprep.mubr.f32.mxu0 0.0
  %2366 = vmatmul.mubr.f32.gmra.mrb[0].mxu0 %v1904
  %v2367 = vpop.f32.mrb[0].mxu0
  %v2368 = vadd.f32 %v2203, %v2367
  %v2369 = vpop.f32.mrb[0].mxu0
  %2370 = vmatprep.mubr.f32.mxu0 0.0
  %2371 = vmatmul.mubr.f32.gmra.mrb[0].mxu0 %v1907
  %v2372 = vpop.f32.mrb[0].mxu0
  %v2373 = vadd.f32 %v2208, %v2372
  %v2374 = vpop.f32.mrb[0].mxu0
  %2375 = vmatprep.mubr.f32.mxu0 0.0
  %2376 = vmatmul.mubr.f32.gmra.mrb[0].mxu0 %v1910
  %v2377 = vpop.f32.mrb[0].mxu0
  %v2378 = vadd.f32 %v2213, %v2377
  %v2379 = vpop.f32.mrb[0].mxu0
  %2380 = vmatprep.mubr.f32.mxu0 0.0
  %2381 = vmatmul.mubr.f32.gmra.mrb[0].mxu0 %v1913
  %v2382 = vpop.f32.mrb[0].mxu0
  %v2383 = vadd.f32 %v2218, %v2382
  %v2384 = vpop.f32.mrb[0].mxu0
  %2385 = vmatprep.mubr.f32.mxu0 0.0
  %2386 = vmatmul.mubr.f32.gmra.mrb[0].mxu0 %v1916
  %v2387 = vpop.f32.mrb[0].mxu0
  %v2388 = vadd.f32 %v2223, %v2387
  %v2389 = vpop.f32.mrb[0].mxu0
  %2390 = vmatprep.mubr.f32.mxu0 0.0
  %2391 = vmatmul.mubr.f32.gmra.mrb[0].mxu0 %v1919
  %v2392 = vpop.f32.mrb[0].mxu0
  %v2393 = vadd.f32 %v2228, %v2392
  %v2394 = vpop.f32.mrb[0].mxu0
  %2395 = vmatprep.mubr.f32.mxu0 0.0
  %2396 = vmatmul.mubr.f32.gmra.mrb[0].mxu0 %v1922
  %v2397 = vpop.f32.mrb[0].mxu0
  %v2398 = vadd.f32 %v2233, %v2397
  %v2399 = vpop.f32.mrb[0].mxu0
  %2400 = vmatprep.mubr.f32.mxu0 0.0
  %2401 = vmatmul.mubr.f32.gmra.mrb[0].mxu0 %v1925
  %v2402 = vpop.f32.mrb[0].mxu0
  %v2403 = vadd.f32 %v2238, %v2402
  %v2404 = vpop.f32.mrb[0].mxu0
  %2405 = vmatprep.mubr.f32.mxu0 0.0
  %2406 = vmatmul.mubr.f32.gmra.mrb[0].mxu0 %v1928
  %v2407 = vpop.f32.mrb[0].mxu0
  %v2408 = vadd.f32 %v2243, %v2407
  %v2409 = vpop.f32.mrb[0].mxu0
  %2410 = vmatprep.mubr.f32.mxu0 0.0
  %2411 = vmatmul.mubr.f32.gmra.mrb[0].mxu0 %v1931
  %v2412 = vpop.f32.mrb[0].mxu0
  %v2413 = vadd.f32 %v2248, %v2412
  %v2414 = vpop.f32.mrb[0].mxu0
  %2415 = vmatprep.mubr.f32.mxu0 0.0
  %2416 = vmatmul.mubr.f32.gmra.mrb[0].mxu0 %v1934
  %v2417 = vpop.f32.mrb[0].mxu0
  %v2418 = vadd.f32 %v2253, %v2417
  %v2419 = vpop.f32.mrb[0].mxu0
  %2420 = vmatprep.mubr.f32.mxu0 0.0
  %2421 = vmatmul.mubr.f32.gmra.mrb[0].mxu0 %v1937
  %v2422 = vpop.f32.mrb[0].mxu0
  %v2423 = vadd.f32 %v2258, %v2422
  %v2424 = vpop.f32.mrb[0].mxu0
  %2425 = vmatprep.mubr.f32.mxu0 0.0
  %2426 = vmatmul.mubr.f32.gmra.mrb[0].mxu0 %v1940
  %v2427 = vpop.f32.mrb[0].mxu0
  %v2428 = vadd.f32 %v2263, %v2427
  %v2429 = vpop.f32.mrb[0].mxu0
  %2430 = vmatprep.mubr.f32.mxu0 0.0
  %2431 = vmatmul.mubr.f32.gmra.mrb[0].mxu0 %v1943
  %v2432 = vpop.f32.mrb[0].mxu0
  %v2433 = vadd.f32 %v2268, %v2432
  %v2434 = vpop.f32.mrb[0].mxu0
  %2435 = vmatprep.mubr.f32.mxu0 0.0
  %2436 = vmatmul.mubr.f32.gmra.mrb[0].mxu0 %v1946
  %v2437 = vpop.f32.mrb[0].mxu0
  %v2438 = vadd.f32 %v2273, %v2437
  %v2439 = vpop.f32.mrb[0].mxu0
  %2440 = vmatprep.mubr.f32.mxu0 0.0
  %2441 = vmatmul.mubr.f32.gmra.mrb[0].mxu0 %v1949
  %v2442 = vpop.f32.mrb[0].mxu0
  %v2443 = vadd.f32 %v2278, %v2442
  %v2444 = vpop.f32.mrb[0].mxu0
  %2445 = vdwg.mxu0
  %v2446 = vsub.f32 0.0, %v2348
  %v2447 = vsub.f32 0.0, %v2353
  %v2448 = vsub.f32 0.0, %v2358
  %v2449 = vsub.f32 0.0, %v2363
  %v2450 = vsub.f32 0.0, %v2368
  %v2451 = vsub.f32 0.0, %v2373
  %v2452 = vsub.f32 0.0, %v2378
  %v2453 = vsub.f32 0.0, %v2383
  %v2454 = vsub.f32 0.0, %v2388
  %v2455 = vsub.f32 0.0, %v2393
  %v2456 = vsub.f32 0.0, %v2398
  %v2457 = vsub.f32 0.0, %v2403
  %v2458 = vsub.f32 0.0, %v2408
  %v2459 = vsub.f32 0.0, %v2413
  %v2460 = vsub.f32 0.0, %v2418
  %v2461 = vsub.f32 0.0, %v2423
  %v2462 = vsub.f32 0.0, %v2428
  %v2463 = vsub.f32 0.0, %v2433
  %v2464 = vsub.f32 0.0, %v2438
  %v2465 = vsub.f32 0.0, %v2443
  %v2466 = vmul.f32 %v2446, 1.442695
  %v2467 = vpow.pop %v2466
  %v2468 = vmul.f32 %v2447, 1.442695
  %v2469 = vpow.pop %v2468
  %v2470 = vmul.f32 %v2448, 1.442695
  %v2471 = vpow.pop %v2470
  %v2472 = vmul.f32 %v2449, 1.442695
  %v2473 = vpow.pop %v2472
  %v2474 = vmul.f32 %v2450, 1.442695
  %v2475 = vpow.pop %v2474
  %v2476 = vmul.f32 %v2451, 1.442695
  %v2477 = vpow.pop %v2476
  %v2478 = vmul.f32 %v2452, 1.442695
  %v2479 = vpow.pop %v2478
  %v2480 = vmul.f32 %v2453, 1.442695
  %v2481 = vpow.pop %v2480
  %v2482 = vmul.f32 %v2454, 1.442695
  %v2483 = vpow.pop %v2482
  %v2484 = vmul.f32 %v2455, 1.442695
  %v2485 = vpow.pop %v2484
  %v2486 = vmul.f32 %v2456, 1.442695
  %v2487 = vpow.pop %v2486
  %v2488 = vmul.f32 %v2457, 1.442695
  %v2489 = vpow.pop %v2488
  %v2490 = vmul.f32 %v2458, 1.442695
  %v2491 = vpow.pop %v2490
  %v2492 = vmul.f32 %v2459, 1.442695
  %v2493 = vpow.pop %v2492
  %v2494 = vmul.f32 %v2460, 1.442695
  %v2495 = vpow.pop %v2494
  %v2496 = vmul.f32 %v2461, 1.442695
  %v2497 = vpow.pop %v2496
  %v2498 = vmul.f32 %v2462, 1.442695
  %v2499 = vpow.pop %v2498
  %v2500 = vmul.f32 %v2463, 1.442695
  %v2501 = vpow.pop %v2500
  %v2502 = vmul.f32 %v2464, 1.442695
  %v2503 = vpow.pop %v2502
  %v2504 = vmul.f32 %v2465, 1.442695
  %v2505 = vpow.pop %v2504
  %v2506 = vadd.f32 %v2467, 1.0
  %v2507 = vadd.f32 %v2469, 1.0
  %v2508 = vadd.f32 %v2471, 1.0
  %v2509 = vadd.f32 %v2473, 1.0
  %v2510 = vadd.f32 %v2475, 1.0
  %v2511 = vadd.f32 %v2477, 1.0
  %v2512 = vadd.f32 %v2479, 1.0
  %v2513 = vadd.f32 %v2481, 1.0
  %v2514 = vadd.f32 %v2483, 1.0
  %v2515 = vadd.f32 %v2485, 1.0
  %v2516 = vadd.f32 %v2487, 1.0
  %v2517 = vadd.f32 %v2489, 1.0
  %v2518 = vadd.f32 %v2491, 1.0
  %v2519 = vadd.f32 %v2493, 1.0
  %v2520 = vadd.f32 %v2495, 1.0
  %v2521 = vadd.f32 %v2497, 1.0
  %v2522 = vadd.f32 %v2499, 1.0
  %v2523 = vadd.f32 %v2501, 1.0
  %v2524 = vadd.f32 %v2503, 1.0
  %v2525 = vadd.f32 %v2505, 1.0
  %v2526 = vrcp.pop %v2506
  %v2527 = vrcp.pop %v2507
  %v2528 = vrcp.pop %v2508
  %v2529 = vrcp.pop %v2509
  %v2530 = vrcp.pop %v2510
  %v2531 = vrcp.pop %v2511
  %v2532 = vrcp.pop %v2512
  %v2533 = vrcp.pop %v2513
  %v2534 = vrcp.pop %v2514
  %v2535 = vrcp.pop %v2515
  %v2536 = vrcp.pop %v2516
  %v2537 = vrcp.pop %v2517
  %v2538 = vrcp.pop %v2518
  %v2539 = vrcp.pop %v2519
  %v2540 = vrcp.pop %v2520
  %v2541 = vrcp.pop %v2521
  %v2542 = vrcp.pop %v2522
  %v2543 = vrcp.pop %v2523
  %v2544 = vrcp.pop %v2524
  %v2545 = vrcp.pop %v2525
  %v2546 = vmul.f32 %v2506, %v2526
  %v2547 = vmul.f32 %v2507, %v2527
  %v2548 = vmul.f32 %v2508, %v2528
  %v2549 = vmul.f32 %v2509, %v2529
  %v2550 = vmul.f32 %v2510, %v2530
  %v2551 = vmul.f32 %v2511, %v2531
  %v2552 = vmul.f32 %v2512, %v2532
  %v2553 = vmul.f32 %v2513, %v2533
  %v2554 = vmul.f32 %v2514, %v2534
  %v2555 = vmul.f32 %v2515, %v2535
  %v2556 = vmul.f32 %v2516, %v2536
  %v2557 = vmul.f32 %v2517, %v2537
  %v2558 = vmul.f32 %v2518, %v2538
  %v2559 = vmul.f32 %v2519, %v2539
  %v2560 = vmul.f32 %v2520, %v2540
  %v2561 = vmul.f32 %v2521, %v2541
  %v2562 = vmul.f32 %v2522, %v2542
  %v2563 = vmul.f32 %v2523, %v2543
  %v2564 = vmul.f32 %v2524, %v2544
  %v2565 = vmul.f32 %v2525, %v2545
  %v2566 = vsub.f32 2.0, %v2546
  %v2567 = vsub.f32 2.0, %v2547
  %v2568 = vsub.f32 2.0, %v2548
  %v2569 = vsub.f32 2.0, %v2549
  %v2570 = vsub.f32 2.0, %v2550
  %v2571 = vsub.f32 2.0, %v2551
  %v2572 = vsub.f32 2.0, %v2552
  %v2573 = vsub.f32 2.0, %v2553
  %v2574 = vsub.f32 2.0, %v2554
  %v2575 = vsub.f32 2.0, %v2555
  %v2576 = vsub.f32 2.0, %v2556
  %v2577 = vsub.f32 2.0, %v2557
  %v2578 = vsub.f32 2.0, %v2558
  %v2579 = vsub.f32 2.0, %v2559
  %v2580 = vsub.f32 2.0, %v2560
  %v2581 = vsub.f32 2.0, %v2561
  %v2582 = vsub.f32 2.0, %v2562
  %v2583 = vsub.f32 2.0, %v2563
  %v2584 = vsub.f32 2.0, %v2564
  %v2585 = vsub.f32 2.0, %v2565
  %v2586 = vmul.f32 %v2526, %v2566
  %v2587 = vmul.f32 %v2527, %v2567
  %v2588 = vmul.f32 %v2528, %v2568
  %v2589 = vmul.f32 %v2529, %v2569
  %v2590 = vmul.f32 %v2530, %v2570
  %v2591 = vmul.f32 %v2531, %v2571
  %v2592 = vmul.f32 %v2532, %v2572
  %v2593 = vmul.f32 %v2533, %v2573
  %v2594 = vmul.f32 %v2534, %v2574
  %v2595 = vmul.f32 %v2535, %v2575
  %v2596 = vmul.f32 %v2536, %v2576
  %v2597 = vmul.f32 %v2537, %v2577
  %v2598 = vmul.f32 %v2538, %v2578
  %v2599 = vmul.f32 %v2539, %v2579
  %v2600 = vmul.f32 %v2540, %v2580
  %v2601 = vmul.f32 %v2541, %v2581
  %v2602 = vmul.f32 %v2542, %v2582
  %v2603 = vmul.f32 %v2543, %v2583
  %v2604 = vmul.f32 %v2544, %v2584
  %v2605 = vmul.f32 %v2545, %v2585
  %vm2606 = vcmask 130048
  %2607 = vst.msk [vmem:[%s9] sm:$0xff] %vm2606, %v2586
  %2608 = vst.msk [vmem:[%s9 + $0x8] sm:$0xff] %vm2606, %v2587
  %2609 = vst.msk [vmem:[%s9 + $0x10] sm:$0xff] %vm2606, %v2588
  %2610 = vst.msk [vmem:[%s9 + $0x18] sm:$0xff] %vm2606, %v2589
  %2611 = vst.msk [vmem:[%s9 + $0x20] sm:$0xff] %vm2606, %v2590
  %2612 = vst.msk [vmem:[%s9 + $0x28] sm:$0xff] %vm2606, %v2591
  %2613 = vst.msk [vmem:[%s9 + $0x30] sm:$0xff] %vm2606, %v2592
  %2614 = vst.msk [vmem:[%s9 + $0x38] sm:$0xff] %vm2606, %v2593
  %2615 = vst.msk [vmem:[%s9 + $0x40] sm:$0xff] %vm2606, %v2594
  %2616 = vst.msk [vmem:[%s9 + $0x48] sm:$0xff] %vm2606, %v2595
  %2617 = vst.msk [vmem:[%s9 + $0x50] sm:$0xff] %vm2606, %v2596
  %2618 = vst.msk [vmem:[%s9 + $0x58] sm:$0xff] %vm2606, %v2597
  %2619 = vst.msk [vmem:[%s9 + $0x60] sm:$0xff] %vm2606, %v2598
  %2620 = vst.msk [vmem:[%s9 + $0x68] sm:$0xff] %vm2606, %v2599
  %2621 = vst.msk [vmem:[%s9 + $0x70] sm:$0xff] %vm2606, %v2600
  %2622 = vst.msk [vmem:[%s9 + $0x78] sm:$0xff] %vm2606, %v2601
  %2623 = vst.msk [vmem:[%s9 + $0x80] sm:$0xff] %vm2606, %v2602
  %2624 = vst.msk [vmem:[%s9 + $0x88] sm:$0xff] %vm2606, %v2603
  %2625 = vst.msk [vmem:[%s9 + $0x90] sm:$0xff] %vm2606, %v2604
  %2626 = vst.msk [vmem:[%s9 + $0x98] sm:$0xff] %vm2606, %v2605
  %v2627 = vld [vmem:[%s4] sm:$0xff]
  %v2628 = vld [vmem:[%s4 + $0x8] sm:$0xff]
  %v2629 = vld [vmem:[%s4 + $0x10] sm:$0xff]
  %v2630 = vld [vmem:[%s4 + $0x18] sm:$0xff]
  %v2631 = vld [vmem:[%s4 + $0x20] sm:$0xff]
  %v2632 = vld [vmem:[%s4 + $0x28] sm:$0xff]
  %v2633 = vld [vmem:[%s4 + $0x30] sm:$0xff]
  %v2634 = vld [vmem:[%s4 + $0x38] sm:$0xff]
  %v2635 = vld [vmem:[%s4 + $0x40] sm:$0xff]
  %v2636 = vld [vmem:[%s4 + $0x48] sm:$0xff]
  %v2637 = vld [vmem:[%s4 + $0x50] sm:$0xff]
  %v2638 = vld [vmem:[%s4 + $0x58] sm:$0xff]
  %v2639 = vld [vmem:[%s4 + $0x60] sm:$0xff]
  %v2640 = vld [vmem:[%s4 + $0x68] sm:$0xff]
  %v2641 = vld [vmem:[%s4 + $0x70] sm:$0xff]
  %v2642 = vld [vmem:[%s4 + $0x78] sm:$0xff]
  %v2643 = vld [vmem:[%s4 + $0x80] sm:$0xff]
  %v2644 = vld [vmem:[%s4 + $0x88] sm:$0xff]
  %v2645 = vld [vmem:[%s4 + $0x90] sm:$0xff]
  %v2646 = vld [vmem:[%s4 + $0x98] sm:$0xff]
  %vm2647 = vcmask 261120
  %v2649 = vsel %vm2647, %v2628, 0
  %v2652 = vsel %vm2647, %v2630, 0
  %v2655 = vsel %vm2647, %v2632, 0
  %v2658 = vsel %vm2647, %v2634, 0
  %v2661 = vsel %vm2647, %v2636, 0
  %v2664 = vsel %vm2647, %v2638, 0
  %v2667 = vsel %vm2647, %v2640, 0
  %v2670 = vsel %vm2647, %v2642, 0
  %v2673 = vsel %vm2647, %v2644, 0
  %v2676 = vsel %vm2647, %v2646, 0
  %2678 = vmatprep.subr.mxu0 0.0
  %2679 = vmatpush1.msra.mxu0 %v2586
  %2680 = vmatprep.subr.mxu0 0.0
  %2681 = vmatpush1.msra.mxu0 %v2587
  %2682 = vmatprep.subr.mxu0 0.0
  %2683 = vmatpush1.msra.mxu0 %v2588
  %2684 = vmatprep.subr.mxu0 0.0
  %2685 = vmatpush1.msra.mxu0 %v2589
  %2686 = vmatprep.subr.mxu0 0.0
  %2687 = vmatpush1.msra.mxu0 %v2590
  %2688 = vmatprep.subr.mxu0 0.0
  %2689 = vmatpush1.msra.mxu0 %v2591
  %2690 = vmatprep.subr.mxu0 0.0
  %2691 = vmatpush1.msra.mxu0 %v2592
  %2692 = vmatprep.subr.mxu0 0.0
  %2693 = vmatpush1.msra.mxu0 %v2593
  %2694 = vmatprep.subr.mxu0 0.0
  %2695 = vmatpush1.msra.mxu0 %v2594
  %2696 = vmatprep.subr.mxu0 0.0
  %2697 = vmatpush1.msra.mxu0 %v2595
  %2698 = vmatprep.subr.mxu0 0.0
  %2699 = vmatpush1.msra.mxu0 %v2596
  %2700 = vmatprep.subr.mxu0 0.0
  %2701 = vmatpush1.msra.mxu0 %v2597
  %2702 = vmatprep.subr.mxu0 0.0
  %2703 = vmatpush1.msra.mxu0 %v2598
  %2704 = vmatprep.subr.mxu0 0.0
  %2705 = vmatpush1.msra.mxu0 %v2599
  %2706 = vmatprep.subr.mxu0 0.0
  %2707 = vmatpush1.msra.mxu0 %v2600
  %2708 = vmatprep.subr.mxu0 0.0
  %2709 = vmatpush1.msra.mxu0 %v2601
  %2710 = vmatprep.subr.mxu0 0.0
  %2711 = vmatpush1.msra.mxu0 %v2602
  %2712 = vmatprep.subr.mxu0 0.0
  %2713 = vmatpush1.msra.mxu0 %v2603
  %2714 = vmatprep.subr.mxu0 0.0
  %2715 = vmatpush1.msra.mxu0 %v2604
  %2716 = vmatprep.subr.mxu0 0.0
  %2717 = vmatpush1.msra.mxu0 %v2605
  %2718 = vmatprep.subr.mxu0 0.0
  %2719 = vmatpush1.msra.mxu0 0.0
  %2720 = vmatprep.subr.mxu0 0.0
  %2721 = vmatpush1.msra.mxu0 0.0
  %2722 = vmatprep.subr.mxu0 0.0
  %2723 = vmatpush1.msra.mxu0 0.0
  %2724 = vmatprep.subr.mxu0 0.0
  %2725 = vmatpush1.msra.mxu0 0.0
  %2726 = vmatprep.subr.mxu0 0.0
  %2727 = vmatpush1.msra.mxu0 0.0
  %2728 = vmatprep.subr.mxu0 0.0
  %2729 = vmatpush1.msra.mxu0 0.0
  %2730 = vmatprep.subr.mxu0 0.0
  %2731 = vmatpush1.msra.mxu0 0.0
  %2732 = vmatprep.subr.mxu0 0.0
  %2733 = vmatpush1.msra.mxu0 0.0
  %2734 = vmatprep.subr.mxu0 0.0
  %2735 = vmatpush1.msra.mxu0 0.0
  %2736 = vmatprep.subr.mxu0 0.0
  %2737 = vmatpush1.msra.mxu0 0.0
  %2738 = vmatprep.subr.mxu0 0.0
  %2739 = vmatpush1.msra.mxu0 0.0
  %2740 = vmatprep.subr.mxu0 0.0
  %2741 = vmatpush1.msra.mxu0 0.0
  %2742 = vmatprep.mubr.f32.mxu0 %v2649
  %2743 = vmatmul.mubr.f32.gmra.mrb[0].mxu0 %v2627
  %v2744 = vpop.f32.mrb[0].mxu0
  %v2745 = vadd.f32 0.0, %v2744
  %v2746 = vpop.f32.mrb[0].mxu0
  %2747 = vmatprep.mubr.f32.mxu0 %v2652
  %2748 = vmatmul.mubr.f32.gmra.mrb[0].mxu0 %v2629
  %v2749 = vpop.f32.mrb[0].mxu0
  %v2750 = vadd.f32 0.0, %v2749
  %v2751 = vpop.f32.mrb[0].mxu0
  %2752 = vmatprep.mubr.f32.mxu0 %v2655
  %2753 = vmatmul.mubr.f32.gmra.mrb[0].mxu0 %v2631
  %v2754 = vpop.f32.mrb[0].mxu0
  %v2755 = vadd.f32 0.0, %v2754
  %v2756 = vpop.f32.mrb[0].mxu0
  %2757 = vmatprep.mubr.f32.mxu0 %v2658
  %2758 = vmatmul.mubr.f32.gmra.mrb[0].mxu0 %v2633
  %v2759 = vpop.f32.mrb[0].mxu0
  %v2760 = vadd.f32 0.0, %v2759
  %v2761 = vpop.f32.mrb[0].mxu0
  %2762 = vmatprep.mubr.f32.mxu0 %v2661
  %2763 = vmatmul.mubr.f32.gmra.mrb[0].mxu0 %v2635
  %v2764 = vpop.f32.mrb[0].mxu0
  %v2765 = vadd.f32 0.0, %v2764
  %v2766 = vpop.f32.mrb[0].mxu0
  %2767 = vmatprep.mubr.f32.mxu0 %v2664
  %2768 = vmatmul.mubr.f32.gmra.mrb[0].mxu0 %v2637
  %v2769 = vpop.f32.mrb[0].mxu0
  %v2770 = vadd.f32 0.0, %v2769
  %v2771 = vpop.f32.mrb[0].mxu0
  %2772 = vmatprep.mubr.f32.mxu0 %v2667
  %2773 = vmatmul.mubr.f32.gmra.mrb[0].mxu0 %v2639
  %v2774 = vpop.f32.mrb[0].mxu0
  %v2775 = vadd.f32 0.0, %v2774
  %v2776 = vpop.f32.mrb[0].mxu0
  %2777 = vmatprep.mubr.f32.mxu0 %v2670
  %2778 = vmatmul.mubr.f32.gmra.mrb[0].mxu0 %v2641
  %v2779 = vpop.f32.mrb[0].mxu0
  %v2780 = vadd.f32 0.0, %v2779
  %v2781 = vpop.f32.mrb[0].mxu0
  %2782 = vmatprep.mubr.f32.mxu0 %v2673
  %2783 = vmatmul.mubr.f32.gmra.mrb[0].mxu0 %v2643
  %v2784 = vpop.f32.mrb[0].mxu0
  %v2785 = vadd.f32 0.0, %v2784
  %v2786 = vpop.f32.mrb[0].mxu0
  %2787 = vmatprep.mubr.f32.mxu0 %v2676
  %2788 = vmatmul.mubr.f32.gmra.mrb[0].mxu0 %v2645
  %v2789 = vpop.f32.mrb[0].mxu0
  %v2790 = vadd.f32 0.0, %v2789
  %v2791 = vpop.f32.mrb[0].mxu0
  %2792 = vdwg.mxu0
  %v2793 = vld [vmem:[%s5] sm:$0xff]
  %v2794 = vld [vmem:[%s5 + $0x8] sm:$0x3]
  %v2795 = vld [vmem:[%s6] sm:$0xff]
  %v2796 = vld [vmem:[%s6 + $0x8] sm:$0xff]
  %v2797 = vld [vmem:[%s6 + $0x10] sm:$0xff]
  %v2798 = vld [vmem:[%s6 + $0x18] sm:$0xff]
  %v2799 = vld [vmem:[%s6 + $0x20] sm:$0xff]
  %v2800 = vld [vmem:[%s6 + $0x28] sm:$0xff]
  %v2801 = vld [vmem:[%s6 + $0x30] sm:$0xff]
  %v2802 = vld [vmem:[%s6 + $0x38] sm:$0xff]
  %v2803 = vld [vmem:[%s6 + $0x40] sm:$0xff]
  %v2804 = vld [vmem:[%s6 + $0x48] sm:$0xff]
  %v2805 = vmul.f32 %v2745, %v2795
  %v2806 = vmul.f32 %v2750, %v2796
  %v2807 = vmul.f32 %v2755, %v2797
  %v2808 = vmul.f32 %v2760, %v2798
  %v2809 = vmul.f32 %v2765, %v2799
  %v2810 = vmul.f32 %v2770, %v2800
  %v2811 = vmul.f32 %v2775, %v2801
  %v2812 = vmul.f32 %v2780, %v2802
  %v2813 = vmul.f32 %v2785, %v2803
  %v2814 = vmul.f32 %v2790, %v2804
  %vm2815 = vcmask 654336
  %v2817 = vsel %vm2815, %v2793, 0
  %v2820 = vsel %vm2815, %v2794, 0
  %2822 = vmatprep.subr.mxu0 0.0
  %2823 = vmatpush1.msra.mxu0 %v2805
  %2824 = vmatprep.subr.mxu0 0.0
  %2825 = vmatpush1.msra.mxu0 %v2806
  %2826 = vmatprep.subr.mxu0 0.0
  %2827 = vmatpush1.msra.mxu0 %v2807
  %2828 = vmatprep.subr.mxu0 0.0
  %2829 = vmatpush1.msra.mxu0 %v2808
  %2830 = vmatprep.subr.mxu0 0.0
  %2831 = vmatpush1.msra.mxu0 %v2809
  %2832 = vmatprep.subr.mxu0 0.0
  %2833 = vmatpush1.msra.mxu0 %v2810
  %2834 = vmatprep.subr.mxu0 0.0
  %2835 = vmatpush1.msra.mxu0 %v2811
  %2836 = vmatprep.subr.mxu0 0.0
  %2837 = vmatpush1.msra.mxu0 %v2812
  %2838 = vmatprep.subr.mxu0 0.0
  %2839 = vmatpush1.msra.mxu0 %v2813
  %2840 = vmatprep.subr.mxu0 0.0
  %2841 = vmatpush1.msra.mxu0 %v2814
  %2842 = vmatprep.subr.mxu0 0.0
  %2843 = vmatpush1.msra.mxu0 0.0
  %2844 = vmatprep.subr.mxu0 0.0
  %2845 = vmatpush1.msra.mxu0 0.0
  %2846 = vmatprep.subr.mxu0 0.0
  %2847 = vmatpush1.msra.mxu0 0.0
  %2848 = vmatprep.subr.mxu0 0.0
  %2849 = vmatpush1.msra.mxu0 0.0
  %2850 = vmatprep.subr.mxu0 0.0
  %2851 = vmatpush1.msra.mxu0 0.0
  %2852 = vmatprep.subr.mxu0 0.0
  %2853 = vmatpush1.msra.mxu0 0.0
  %2854 = vmatprep.subr.mxu0 0.0
  %2855 = vmatpush1.msra.mxu0 0.0
  %2856 = vmatprep.subr.mxu0 0.0
  %2857 = vmatpush1.msra.mxu0 0.0
  %2858 = vmatprep.subr.mxu0 0.0
  %2859 = vmatpush1.msra.mxu0 0.0
  %2860 = vmatprep.subr.mxu0 0.0
  %2861 = vmatpush1.msra.mxu0 0.0
  %2862 = vmatprep.subr.mxu0 0.0
  %2863 = vmatpush1.msra.mxu0 0.0
  %2864 = vmatprep.subr.mxu0 0.0
  %2865 = vmatpush1.msra.mxu0 0.0
  %2866 = vmatprep.subr.mxu0 0.0
  %2867 = vmatpush1.msra.mxu0 0.0
  %2868 = vmatprep.subr.mxu0 0.0
  %2869 = vmatpush1.msra.mxu0 0.0
  %2870 = vmatprep.subr.mxu0 0.0
  %2871 = vmatpush1.msra.mxu0 0.0
  %2872 = vmatprep.subr.mxu0 0.0
  %2873 = vmatpush1.msra.mxu0 0.0
  %2874 = vmatprep.subr.mxu0 0.0
  %2875 = vmatpush1.msra.mxu0 0.0
  %2876 = vmatprep.subr.mxu0 0.0
  %2877 = vmatpush1.msra.mxu0 0.0
  %2878 = vmatprep.subr.mxu0 0.0
  %2879 = vmatpush1.msra.mxu0 0.0
  %2880 = vmatprep.subr.mxu0 0.0
  %2881 = vmatpush1.msra.mxu0 0.0
  %2882 = vmatprep.subr.mxu0 0.0
  %2883 = vmatpush1.msra.mxu0 0.0
  %2884 = vmatprep.subr.mxu0 0.0
  %2885 = vmatpush1.msra.mxu0 0.0
  %2886 = vmatprep.mubr.f32.mxu0 0.0
  %2887 = vmatmul.mubr.f32.gmra.mrb[0].mxu0 %v2817
  %v2888 = vpop.f32.mrb[0].mxu0
  %v2889 = vadd.f32 0.0, %v2888
  %v2890 = vpop.f32.mrb[0].mxu0
  %2891 = vmatprep.mubr.f32.mxu0 0.0
  %2892 = vmatmul.mubr.f32.gmra.mrb[0].mxu0 %v2820
  %v2893 = vpop.f32.mrb[0].mxu0
  %v2894 = vadd.f32 0.0, %v2893
  %v2895 = vpop.f32.mrb[0].mxu0
  %2896 = vdwg.mxu0
  %v2897 = vld [vmem:[%s7] sm:$0xff]
  %v2898 = vld [vmem:[%s7 + $0x8] sm:$0xff]
  %v2900 = vsel %vm2606, %v2889, 0
  %v2903 = vsel %vm2606, %v2894, 0
  %2905 = vmatprep.subr.mxu0 0.0
  %2906 = vmatpush1.msra.mxu0 %v2897
  %2907 = vmatprep.subr.mxu0 0.0
  %2908 = vmatpush1.msra.mxu0 %v2898
  %2909 = vmatprep.subr.mxu0 0.0
  %2910 = vmatpush1.msra.mxu0 0.0
  %2911 = vmatprep.subr.mxu0 0.0
  %2912 = vmatpush1.msra.mxu0 0.0
  %2913 = vmatprep.subr.mxu0 0.0
  %2914 = vmatpush1.msra.mxu0 0.0
  %2915 = vmatprep.subr.mxu0 0.0
  %2916 = vmatpush1.msra.mxu0 0.0
  %2917 = vmatprep.subr.mxu0 0.0
  %2918 = vmatpush1.msra.mxu0 0.0
  %2919 = vmatprep.subr.mxu0 0.0
  %2920 = vmatpush1.msra.mxu0 0.0
  %2921 = vmatprep.subr.mxu0 0.0
  %2922 = vmatpush1.msra.mxu0 0.0
  %2923 = vmatprep.subr.mxu0 0.0
  %2924 = vmatpush1.msra.mxu0 0.0
  %2925 = vmatprep.subr.mxu0 0.0
  %2926 = vmatpush1.msra.mxu0 0.0
  %2927 = vmatprep.subr.mxu0 0.0
  %2928 = vmatpush1.msra.mxu0 0.0
  %2929 = vmatprep.subr.mxu0 0.0
  %2930 = vmatpush1.msra.mxu0 0.0
  %2931 = vmatprep.subr.mxu0 0.0
  %2932 = vmatpush1.msra.mxu0 0.0
  %2933 = vmatprep.subr.mxu0 0.0
  %2934 = vmatpush1.msra.mxu0 0.0
  %2935 = vmatprep.subr.mxu0 0.0
  %2936 = vmatpush1.msra.mxu0 0.0
  %2937 = vmatprep.subr.mxu0 0.0
  %2938 = vmatpush1.msra.mxu0 0.0
  %2939 = vmatprep.subr.mxu0 0.0
  %2940 = vmatpush1.msra.mxu0 0.0
  %2941 = vmatprep.subr.mxu0 0.0
  %2942 = vmatpush1.msra.mxu0 0.0
  %2943 = vmatprep.subr.mxu0 0.0
  %2944 = vmatpush1.msra.mxu0 0.0
  %2945 = vmatprep.subr.mxu0 0.0
  %2946 = vmatpush1.msra.mxu0 0.0
  %2947 = vmatprep.subr.mxu0 0.0
  %2948 = vmatpush1.msra.mxu0 0.0
  %2949 = vmatprep.subr.mxu0 0.0
  %2950 = vmatpush1.msra.mxu0 0.0
  %2951 = vmatprep.subr.mxu0 0.0
  %2952 = vmatpush1.msra.mxu0 0.0
  %2953 = vmatprep.subr.mxu0 0.0
  %2954 = vmatpush1.msra.mxu0 0.0
  %2955 = vmatprep.subr.mxu0 0.0
  %2956 = vmatpush1.msra.mxu0 0.0
  %2957 = vmatprep.subr.mxu0 0.0
  %2958 = vmatpush1.msra.mxu0 0.0
  %2959 = vmatprep.subr.mxu0 0.0
  %2960 = vmatpush1.msra.mxu0 0.0
  %2961 = vmatprep.subr.mxu0 0.0
  %2962 = vmatpush1.msra.mxu0 0.0
  %2963 = vmatprep.subr.mxu0 0.0
  %2964 = vmatpush1.msra.mxu0 0.0
  %2965 = vmatprep.subr.mxu0 0.0
  %2966 = vmatpush1.msra.mxu0 0.0
  %2967 = vmatprep.subr.mxu0 0.0
  %2968 = vmatpush1.msra.mxu0 0.0
  %2969 = vmatprep.mubr.f32.mxu0 0.0
  %2970 = vmatmul.mubr.f32.gmra.mrb[0].mxu0 %v2900
  %v2971 = vpop.f32.mrb[0].mxu0
  %v2972 = vadd.f32 0.0, %v2971
  %v2973 = vpop.f32.mrb[0].mxu0
  %2974 = vmatprep.mubr.f32.mxu0 0.0
  %2975 = vmatmul.mubr.f32.gmra.mrb[0].mxu0 %v2903
  %v2976 = vpop.f32.mrb[0].mxu0
  %v2977 = vadd.f32 0.0, %v2976
  %v2978 = vpop.f32.mrb[0].mxu0
  %2979 = vdwg.mxu0
  %vm2980 = vcmask 15360
  %2981 = vst.msk [vmem:[%s10] sm:$0xff] %vm2980, %v2972
  %vm2982 = vcmask 9216
  %2983 = vst.msk [vmem:[%s10 + $0x8] sm:$0x3] %vm2982, %v2977
  // Predicated region
  $region41: #{convnet_forward.1} parent=0 // pred_check
    _
  $region42: #{convnet_forward.1} parent=0 // pred_check_branch
    %2985 = sbr.rel (0) target = $region44
  $region43: #{convnet_forward.1} parent=0 // pred_region
    _
  $region44: #{convnet_forward.1} parent=0 // pred_fallthru
    _
  // Predicated region
  $region45: #{convnet_forward.1} parent=0 // pred_check
    _
  $region46: #{convnet_forward.1} parent=0 // pred_check_branch
    %2987 = sbr.rel (0) target = $region48
  $region47: #{convnet_forward.1} parent=0 // pred_region
    _
  $region48: #{convnet_forward.1} parent=0 // pred_fallthru
    _
  // Predicated region
  $region49: #{convnet_forward.1} parent=0 // pred_check
    _
  $region50: #{convnet_forward.1} parent=0 // pred_check_branch
    %2989 = sbr.rel (0) target = $region52
  $region51: #{convnet_forward.1} parent=0 // pred_region
    _
  $region52: #{convnet_forward.1} parent=0 // pred_fallthru
    _
  // Predicated region
  $region53: #{convnet_forward.1} parent=0 // pred_check
    _
  $region54: #{convnet_forward.1} parent=0 // pred_check_branch
    %2991 = sbr.rel (0) target = $region56
  $region55: #{convnet_forward.1} parent=0 // pred_region
    _
  $region56: #{convnet_forward.1} parent=0 // pred_fallthru
    _
  // Predicated region
  $region57: #{convnet_forward.1} parent=0 // pred_check
    _
  $region58: #{convnet_forward.1} parent=0 // pred_check_branch
    %2993 = sbr.rel (0) target = $region60
  $region59: #{convnet_forward.1} parent=0 // pred_region
    _
  $region60: #{convnet_forward.1} parent=0 // pred_fallthru
    _
  // Predicated region
  $region61: #{convnet_forward.1} parent=0 // pred_check
    _
  $region62: #{convnet_forward.1} parent=0 // pred_check_branch
    %2995 = sbr.rel (0) target = $region64
  $region63: #{convnet_forward.1} parent=0 // pred_region
    _
  $region64: #{convnet_forward.1} parent=0 // pred_fallthru
    _

</llo_original>
